<compile_context>
chip_gen: v7x
topology: tpu7x:2x2x1
jax: 0.10.0
libtpu: 0.0.40
codegen_flags: <defaults>
</compile_context>

<pallas_src>
import functools

import jax
import jax.numpy as jnp
from jax.experimental import pallas as pl
from jax.experimental.pallas import tpu as pltpu

MATMUL_DTYPE = jnp.bfloat16   # MXU operand / activation-storage dtype
_LANE = 128                   # lane width  -> pad hidden / feature dims
_SUBLANE = 8                  # sublane height -> pad batch dim


def _round_up(n, m):
    return ((n + m - 1) // m) * m


def _nbytes(shape, dtype):
    n = 1
    for d in shape:
        n *= int(d)
    return n * jnp.dtype(dtype).itemsize


# --------------------------------------------------------------------------
# Fused multi-layer GRU kernel: whole sequence + all layers in one call.
# --------------------------------------------------------------------------
def _fused_gru_kernel(*refs, n_layers, seq_len, num_masks, matmul_dtype):
    """refs = [x,
               (wih, whh, b_gi, bhh_n) * n_layers,
               drop_mask * num_masks,            # inter-layer inverted-dropout scales
               out, hN,                          # outputs
               act, gi_scr]                      # VMEM scratch

    Shapes (all padded): x (T, Bp, Dp) bf16; wih_l (Din_l, 3Hp) bf16;
    whh_l (Hp, 3Hp) bf16; b_gi (1, 3Hp) f32 (= b_ih with b_hh[r,z] folded in);
    bhh_n (1, Hp) f32; masks (T, Bp, Hp) bf16; out (T, Bp, Hp) f32;
    hN (L, Bp, Hp) f32; act (T, Bp, Hp) bf16; gi_scr (T, Bp, 3Hp) f32.
    """
    x_ref = refs[0]
    pos = 1
    layer_refs = []
    for _ in range(n_layers):
        layer_refs.append(refs[pos:pos + 4])
        pos += 4
    mask_refs = refs[pos:pos + num_masks]
    pos += num_masks
    out_ref, hN_ref = refs[pos], refs[pos + 1]
    act_ref, gi_ref = refs[pos + 2], refs[pos + 3]

    T = seq_len
    Bp, Hp = act_ref.shape[1], act_ref.shape[2]
    H3 = 3 * Hp

    for l in range(n_layers):
        wih_ref, whh_ref, b_gi_ref, bhh_n_ref = layer_refs[l]

        # ---- layer input (whole sequence, bf16) + hoisted inter-layer dropout ----
        if l == 0:
            xs = x_ref[...]                          # (T, Bp, Dp) bf16
        else:
            xs = act_ref[...]                        # (T, Bp, Hp) bf16
            if num_masks:
                xs = xs * mask_refs[l - 1][...]      # precomputed keep/(1-p) scale
        din = xs.shape[-1]

        # ---- hoisted input-to-hidden matmul: one (T*Bp, Din) x (Din, 3Hp) ----
        # b_gi already contains b_ih (all gates) + b_hh (r,z gates), so the r/z
        # gate math below needs no extra bias add on the serial path.
        gi_all = jnp.dot(xs.reshape(T * Bp, din), wih_ref[...],
                         preferred_element_type=jnp.float32) + b_gi_ref[...]
        # Park gi in explicit VMEM scratch; per step we re-load one aligned
        # (Bp, 3Hp) slice instead of keeping T*Bp*3Hp live in vregs.
        gi_ref[...] = gi_all.reshape(T, Bp, H3)

        whh = whh_ref[...]                                         # (Hp, 3Hp) bf16
        # n-gate b_hh broadcast hoisted out of the time loop (done once/layer).
        bhh_n_b = jnp.broadcast_to(bhh_n_ref[...], (Bp, Hp))       # (Bp, Hp) f32

        # last layer writes the kernel output (f32), inner layers the bf16 scratch
        dst = out_ref if l == n_layers - 1 else act_ref

        def step(t, h):
            gi = gi_ref[t]                                         # (Bp, 3Hp) f32
            gh = jnp.dot(h.astype(matmul_dtype), whh,
                         preferred_element_type=jnp.float32)       # (Bp, 3Hp)
            # PyTorch GRU gate order: r, z, n  (b_hh of n stays inside r*(...))
            r = jax.nn.sigmoid(gi[:, 0:Hp] + gh[:, 0:Hp])
            z = jax.nn.sigmoid(gi[:, Hp:2 * Hp] + gh[:, Hp:2 * Hp])
            n = jnp.tanh(gi[:, 2 * Hp:3 * Hp] + r * (gh[:, 2 * Hp:3 * Hp] + bhh_n_b))
            h = (1.0 - z) * n + z * h
            dst[t] = h.astype(dst.dtype)                           # lane-dense store
            return h

        h = jnp.zeros((Bp, Hp), jnp.float32)
        if T <= 16:
            # Small static max_len: fully unroll so the scheduler can overlap
            # step t+1's recurrent matmul with step t's gate math.
            for t in range(T):
                h = step(t, h)
        else:
            # Longer sequences: bounded unrolling keeps program size and vreg
            # live ranges in check while preserving LLO scheduling visibility.
            h = jax.lax.fori_loop(0, T, step, h, unroll=8)
        hN_ref[l] = h


# --------------------------------------------------------------------------
# Parameter init (PyTorch nn.GRU convention) and one-time preparation.
# --------------------------------------------------------------------------
def init_gru_params(key, input_size, hidden_size, n_layers):
    """U(-1/sqrt(H), 1/sqrt(H)), PyTorch layout: w_ih (3H, Din), w_hh (3H, H)."""
    k = 1.0 / (hidden_size ** 0.5)
    params = []
    for layer in range(n_layers):
        din = input_size if layer == 0 else hidden_size
        key, k1, k2, k3, k4 = jax.random.split(key, 5)
        w_ih = jax.random.uniform(k1, (3 * hidden_size, din), jnp.float32, -k, k)
        w_hh = jax.random.uniform(k2, (3 * hidden_size, hidden_size), jnp.float32, -k, k)
        b_ih = jax.random.uniform(k3, (3 * hidden_size,), jnp.float32, -k, k)
        b_hh = jax.random.uniform(k4, (3 * hidden_size,), jnp.float32, -k, k)
        params.append((w_ih, w_hh, b_ih, b_hh))
    return params


def _pad_gates(w_t, rows_pad, h, h_pad, dtype):
    """(rows, 3h) gate-blocked matrix -> (rows_pad, 3*h_pad), gates at k*h_pad."""
    rows = w_t.shape[0]
    out = jnp.zeros((rows_pad, 3 * h_pad), jnp.float32)
    for g in range(3):
        out = out.at[:rows, g * h_pad:g * h_pad + h].set(
            w_t[:, g * h:(g + 1) * h].astype(jnp.float32))
    return out.astype(dtype)


def _pad_cols(v, h, h_pad):
    """(h,) -> (1, h_pad) zero-padded f32."""
    return jnp.zeros((1, h_pad), jnp.float32).at[:, :h].set(
        v.reshape(1, h).astype(jnp.float32))


def prepare_gru_params(raw_params, input_size, hidden_size,
                       matmul_dtype=MATMUL_DTYPE):
    """Transpose / pad / cast the PyTorch-layout weights ONCE (not per forward).

    Also folds the r- and z-gate slices of b_hh into b_ih (the GRU applies them
    additively before the nonlinearity), leaving only the n-gate b_hh to be
    added inside r*(...) in the kernel.
    """
    H = hidden_size
    Hp = _round_up(H, _LANE)
    Dp = _round_up(input_size, _LANE)
    layers = []
    for l, (w_ih, w_hh, b_ih, b_hh) in enumerate(raw_params):
        rows_pad = Dp if l == 0 else Hp
        b_gi = b_ih + jnp.concatenate(
            [b_hh[:2 * H], jnp.zeros((H,), jnp.float32)])           # fold r,z of b_hh
        layers.append((
            _pad_gates(w_ih.T, rows_pad, H, Hp, matmul_dtype),       # (Din_l, 3Hp)
            _pad_gates(w_hh.T, Hp, H, Hp, matmul_dtype),             # (Hp, 3Hp)
            _pad_gates(b_gi.reshape(1, -1), 1, H, Hp, jnp.float32),  # (1, 3Hp)
            _pad_cols(b_hh[2 * H:3 * H], H, Hp),                     # (1, Hp)
        ))
    return dict(layers=layers, n_layers=len(raw_params), H=H, Hp=Hp,
                Din=input_size, Dp=Dp, matmul_dtype=matmul_dtype)


# --------------------------------------------------------------------------
# Forward wrapper: dropout + padding + single fused pallas_call.
# --------------------------------------------------------------------------
def base_rnn_forward(x, prepared, input_dropout_p, dropout_p, *,
                     training=True, rng=None):
    """Returns (out (T,B,H), h_n (n_layers,B,H)); dropout only when training."""
    T, B, Din = x.shape
    H, Hp, Dp = prepared["H"], prepared["Hp"], prepared["Dp"]
    L = prepared["n_layers"]
    mdt = prepared["matmul_dtype"]
    assert Din == prepared["Din"]
    Bp = _round_up(max(B, 1), _SUBLANE)
    if rng is None:
        rng = jax.random.PRNGKey(0)

    x = x.astype(jnp.float32)
    # Input dropout (nn.Dropout): hoisted out of the kernel / time loop.
    if training and input_dropout_p > 0.0:
        rng, k = jax.random.split(rng)
        keep = jax.random.bernoulli(k, 1.0 - input_dropout_p, x.shape)
        x = jnp.where(keep, x / (1.0 - input_dropout_p), 0.0)

    # Pad to lane/sublane-aligned shapes, stored bf16 (matmul operand dtype);
    # the padded region is exactly zero-preserving through the recurrence.
    xp = jnp.zeros((T, Bp, Dp), mdt).at[:, :B, :Din].set(x.astype(mdt))

    flat_params = []
    for lp in prepared["layers"]:
        flat_params.extend(lp)

    # Inter-layer (nn.GRU dropout=) inverted-dropout scale masks, precomputed
    # and stored bf16 (halves mask DMA/VMEM).
    masks = []
    if training and dropout_p > 0.0 and L > 1:
        for _ in range(L - 1):
            rng, k = jax.random.split(rng)
            keep = jax.random.bernoulli(k, 1.0 - dropout_p, (T, Bp, Hp))
            masks.append((keep.astype(jnp.float32) / (1.0 - dropout_p)).astype(mdt))
    num_masks = len(masks)

    kernel = functools.partial(
        _fused_gru_kernel, n_layers=L, seq_len=T, num_masks=num_masks,
        matmul_dtype=mdt)

    vmem = pl.BlockSpec(memory_space=pltpu.MemorySpace.VMEM)
    n_inputs = 1 + 4 * L + num_masks

    out_shapes = (jax.ShapeDtypeStruct((T, Bp, Hp), jnp.float32),
                  jax.ShapeDtypeStruct((L, Bp, Hp), jnp.float32))
    scratch_shapes = [pltpu.VMEM((T, Bp, Hp), mdt),          # inter-layer act
                      pltpu.VMEM((T, Bp, 3 * Hp), jnp.float32)]  # hoisted gi

    # Right-size the VMEM limit from the actual footprint (+2x margin for
    # buffering and compiler temporaries) instead of a blanket 48 MiB.
    io_bytes = _nbytes(xp.shape, xp.dtype)
    for a in flat_params + masks:
        io_bytes += _nbytes(a.shape, a.dtype)
    for s in out_shapes:
        io_bytes += _nbytes(s.shape, s.dtype)
    scr_bytes = _nbytes((T, Bp, Hp), mdt) + _nbytes((T, Bp, 3 * Hp), jnp.float32)
    vmem_limit = min(128 << 20, max(8 << 20, 2 * (io_bytes + scr_bytes) + (2 << 20)))

    out_p, hN_p = pl.pallas_call(
        kernel,
        out_shape=out_shapes,
        in_specs=[vmem] * n_inputs,
        out_specs=(vmem, vmem),
        scratch_shapes=scratch_shapes,
        compiler_params=pltpu.CompilerParams(vmem_limit_bytes=int(vmem_limit)),
    )(xp, *flat_params, *masks)

    return out_p[:, :B, :H], hN_p[:, :B, :H]


# --------------------------------------------------------------------------
# Pure-JAX reference (PyTorch nn.GRU math) for a correctness cross-check.
# --------------------------------------------------------------------------
def gru_reference(x, raw_params):
    T, B, _ = x.shape
    inp = x.astype(jnp.float32)
    h_last = []
    for (w_ih, w_hh, b_ih, b_hh) in raw_params:
        H = w_hh.shape[1]
        h = jnp.zeros((B, H), jnp.float32)
        outs = []
        for t in range(T):
            gi = inp[t] @ w_ih.T + b_ih
            gh = h @ w_hh.T + b_hh
            r = jax.nn.sigmoid(gi[:, :H] + gh[:, :H])
            z = jax.nn.sigmoid(gi[:, H:2 * H] + gh[:, H:2 * H])
            n = jnp.tanh(gi[:, 2 * H:] + r * gh[:, 2 * H:])
            h = (1.0 - z) * n + z * h
            outs.append(h)
        inp = jnp.stack(outs, 0)
        h_last.append(h)
    return inp, jnp.stack(h_last, 0)


if __name__ == "__main__":
    # BaseRNN.__init__ configuration.
    vocab_size = 50          # stored but unused by the recurrence itself
    max_len = 8
    hidden_size = 32
    input_dropout_p = 0.1
    dropout_p = 0.1
    n_layers = 2
    rnn_cell = "gru"

    seq_len, batch = max_len, 2
    input_size = hidden_size   # subclasses feed embedded tokens of width hidden_size

    key = jax.random.PRNGKey(0)
    key, xk, pk, dk = jax.random.split(key, 4)
    x = jax.random.normal(xk, (seq_len, batch, input_size), jnp.float32)

    raw_params = init_gru_params(pk, input_size, hidden_size, n_layers)
    prepared = prepare_gru_params(raw_params, input_size, hidden_size)

    # Training-mode forward (exercises input + inter-layer dropout path).
    out, h_n = base_rnn_forward(x, prepared, input_dropout_p, dropout_p,
                                training=True, rng=dk)
    out = jax.block_until_ready(out)
    h_n = jax.block_until_ready(h_n)
    assert out.shape == (seq_len, batch, hidden_size)
    assert h_n.shape == (n_layers, batch, hidden_size)
    assert bool(jnp.all(jnp.isfinite(out))) and bool(jnp.all(jnp.isfinite(h_n)))

    # Eval-mode forward (dropout = identity) vs. pure-JAX reference.
    out_e, h_e = base_rnn_forward(x, prepared, input_dropout_p, dropout_p,
                                  training=False)
    out_r, h_r = gru_reference(x, raw_params)
    out_e = jax.block_until_ready(out_e)
    err = max(float(jnp.max(jnp.abs(out_e - out_r))),
              float(jnp.max(jnp.abs(h_e - h_r))))
    assert err < 5e-2, f"mismatch vs reference: {err}"

    print("KERNEL_OK")
</pallas_src>

<mosaic_0001>
module attributes {stable_mosaic.version = 11 : i64} {
  func.func @_fused_gru_kernel(%arg0: memref<8x8x128xbf16, #tpu.memory_space<vmem>>, %arg1: memref<128x384xbf16, #tpu.memory_space<vmem>>, %arg2: memref<128x384xbf16, #tpu.memory_space<vmem>>, %arg3: memref<1x384xf32, #tpu.memory_space<vmem>>, %arg4: memref<1x128xf32, #tpu.memory_space<vmem>>, %arg5: memref<128x384xbf16, #tpu.memory_space<vmem>>, %arg6: memref<128x384xbf16, #tpu.memory_space<vmem>>, %arg7: memref<1x384xf32, #tpu.memory_space<vmem>>, %arg8: memref<1x128xf32, #tpu.memory_space<vmem>>, %arg9: memref<8x8x128xbf16, #tpu.memory_space<vmem>>, %arg10: memref<8x8x128xf32, #tpu.memory_space<vmem>>, %arg11: memref<2x8x128xf32, #tpu.memory_space<vmem>>, %arg12: memref<8x8x128xbf16, #tpu.memory_space<vmem>>, %arg13: memref<8x8x384xf32, #tpu.memory_space<vmem>>) attributes {dimension_semantics = [], scalar_prefetch = 0 : i64, scratch_operands = 2 : i64, tpu.core_type = #tpu.core_type<tc>} {
    %c0 = arith.constant 0 : index
    %c0_0 = arith.constant 0 : index
    %c0_1 = arith.constant 0 : index
    %0 = vector.load %arg0[%c0, %c0_0, %c0_1] : memref<8x8x128xbf16, #tpu.memory_space<vmem>>, vector<8x8x128xbf16>
    %1 = vector.shape_cast %0 : vector<8x8x128xbf16> to vector<64x128xbf16>
    %c0_2 = arith.constant 0 : index
    %c0_3 = arith.constant 0 : index
    %2 = vector.load %arg1[%c0_2, %c0_3] : memref<128x384xbf16, #tpu.memory_space<vmem>>, vector<128x384xbf16>
    %cst = arith.constant dense<0.000000e+00> : vector<64x384xf32>
    %3 = tpu.matmul %1, %2, %cst {dimension_numbers = #tpu.dot_dimension_numbers<[1], [0], [0], [1], [0, 0, 1, 1], [], []>} : vector<64x128xbf16>, vector<128x384xbf16>, vector<64x384xf32> -> vector<64x384xf32>
    %c0_4 = arith.constant 0 : index
    %c0_5 = arith.constant 0 : index
    %4 = vector.load %arg3[%c0_4, %c0_5] : memref<1x384xf32, #tpu.memory_space<vmem>>, vector<1x384xf32>
    %5 = vector.broadcast %4 : vector<1x384xf32> to vector<64x384xf32>
    %6 = arith.addf %3, %5 : vector<64x384xf32>
    %7 = vector.shape_cast %6 : vector<64x384xf32> to vector<8x8x384xf32>
    %c0_6 = arith.constant 0 : index
    %c0_7 = arith.constant 0 : index
    %c0_8 = arith.constant 0 : index
    %8 = vector.load %arg13[%c0_6, %c0_7, %c0_8] : memref<8x8x384xf32, #tpu.memory_space<vmem>>, vector<8x8x384xf32>
    tpu.vector_store %arg13[%c0_6, %c0_7, %c0_8], %7 {strides = array<i32>} : memref<8x8x384xf32, #tpu.memory_space<vmem>>, vector<8x8x384xf32>,
    %c0_9 = arith.constant 0 : index
    %c0_10 = arith.constant 0 : index
    %9 = vector.load %arg2[%c0_9, %c0_10] : memref<128x384xbf16, #tpu.memory_space<vmem>>, vector<128x384xbf16>
    %c0_11 = arith.constant 0 : index
    %c0_12 = arith.constant 0 : index
    %10 = vector.load %arg4[%c0_11, %c0_12] : memref<1x128xf32, #tpu.memory_space<vmem>>, vector<1x128xf32>
    %11 = vector.shape_cast %10 : vector<1x128xf32> to vector<1x128xf32>
    %12 = vector.broadcast %11 : vector<1x128xf32> to vector<8x128xf32>
    %cst_13 = arith.constant 0.000000e+00 : f32
    %13 = vector.broadcast %cst_13 : f32 to vector<8x128xf32>
    %c0_14 = arith.constant 0 : index
    %c0_15 = arith.constant 0 : index
    %c0_16 = arith.constant 0 : index
    %14 = vector.load %arg13[%c0_14, %c0_15, %c0_16] : memref<8x8x384xf32, #tpu.memory_space<vmem>>, vector<1x8x384xf32>
    %15 = vector.shape_cast %14 : vector<1x8x384xf32> to vector<8x384xf32>
    %16 = arith.truncf %13 : vector<8x128xf32> to vector<8x128xbf16>
    %cst_17 = arith.constant dense<0.000000e+00> : vector<8x384xf32>
    %17 = tpu.matmul %16, %9, %cst_17 {dimension_numbers = #tpu.dot_dimension_numbers<[1], [0], [0], [1], [0, 0, 1, 1], [], []>} : vector<8x128xbf16>, vector<128x384xbf16>, vector<8x384xf32> -> vector<8x384xf32>
    %18 = vector.extract_strided_slice %15 {offsets = [0, 0], sizes = [8, 128], strides = [1, 1]} : vector<8x384xf32> to vector<8x128xf32>
    %19 = vector.extract_strided_slice %17 {offsets = [0, 0], sizes = [8, 128], strides = [1, 1]} : vector<8x384xf32> to vector<8x128xf32>
    %20 = arith.addf %18, %19 : vector<8x128xf32>
    %21 = arith.negf %20 : vector<8x128xf32>
    %22 = math.exp %21 : vector<8x128xf32>
    %cst_18 = arith.constant 1.000000e+00 : f32
    %23 = vector.broadcast %cst_18 : f32 to vector<8x128xf32>
    %24 = arith.addf %23, %22 : vector<8x128xf32>
    %25 = arith.divf %23, %24 : vector<8x128xf32>
    %26 = vector.extract_strided_slice %15 {offsets = [0, 128], sizes = [8, 128], strides = [1, 1]} : vector<8x384xf32> to vector<8x128xf32>
    %27 = vector.extract_strided_slice %17 {offsets = [0, 128], sizes = [8, 128], strides = [1, 1]} : vector<8x384xf32> to vector<8x128xf32>
    %28 = arith.addf %26, %27 : vector<8x128xf32>
    %29 = arith.negf %28 : vector<8x128xf32>
    %30 = math.exp %29 : vector<8x128xf32>
    %cst_19 = arith.constant 1.000000e+00 : f32
    %31 = vector.broadcast %cst_19 : f32 to vector<8x128xf32>
    %32 = arith.addf %31, %30 : vector<8x128xf32>
    %33 = arith.divf %31, %32 : vector<8x128xf32>
    %34 = vector.extract_strided_slice %15 {offsets = [0, 256], sizes = [8, 128], strides = [1, 1]} : vector<8x384xf32> to vector<8x128xf32>
    %35 = vector.extract_strided_slice %17 {offsets = [0, 256], sizes = [8, 128], strides = [1, 1]} : vector<8x384xf32> to vector<8x128xf32>
    %36 = arith.addf %35, %12 : vector<8x128xf32>
    %37 = arith.mulf %25, %36 : vector<8x128xf32>
    %38 = arith.addf %34, %37 : vector<8x128xf32>
    %39 = math.tanh %38 : vector<8x128xf32>
    %cst_20 = arith.constant 1.000000e+00 : f32
    %40 = vector.broadcast %cst_20 : f32 to vector<8x128xf32>
    %41 = arith.subf %40, %33 : vector<8x128xf32>
    %42 = arith.mulf %41, %39 : vector<8x128xf32>
    %43 = arith.mulf %33, %13 : vector<8x128xf32>
    %44 = arith.addf %42, %43 : vector<8x128xf32>
    %45 = arith.truncf %44 : vector<8x128xf32> to vector<8x128xbf16>
    %c0_21 = arith.constant 0 : index
    %c0_22 = arith.constant 0 : index
    %c0_23 = arith.constant 0 : index
    %46 = vector.load %arg12[%c0_21, %c0_22, %c0_23] : memref<8x8x128xbf16, #tpu.memory_space<vmem>>, vector<1x8x128xbf16>
    %47 = vector.shape_cast %46 : vector<1x8x128xbf16> to vector<8x128xbf16>
    %48 = vector.shape_cast %45 : vector<8x128xbf16> to vector<1x8x128xbf16>
    tpu.vector_store %arg12[%c0_21, %c0_22, %c0_23], %48 {strides = array<i32>} : memref<8x8x128xbf16, #tpu.memory_space<vmem>>, vector<1x8x128xbf16>,
    %c1 = arith.constant 1 : index
    %c0_24 = arith.constant 0 : index
    %c0_25 = arith.constant 0 : index
    %49 = vector.load %arg13[%c1, %c0_24, %c0_25] : memref<8x8x384xf32, #tpu.memory_space<vmem>>, vector<1x8x384xf32>
    %50 = vector.shape_cast %49 : vector<1x8x384xf32> to vector<8x384xf32>
    %51 = arith.truncf %44 : vector<8x128xf32> to vector<8x128xbf16>
    %cst_26 = arith.constant dense<0.000000e+00> : vector<8x384xf32>
    %52 = tpu.matmul %51, %9, %cst_26 {dimension_numbers = #tpu.dot_dimension_numbers<[1], [0], [0], [1], [0, 0, 1, 1], [], []>} : vector<8x128xbf16>, vector<128x384xbf16>, vector<8x384xf32> -> vector<8x384xf32>
    %53 = vector.extract_strided_slice %50 {offsets = [0, 0], sizes = [8, 128], strides = [1, 1]} : vector<8x384xf32> to vector<8x128xf32>
    %54 = vector.extract_strided_slice %52 {offsets = [0, 0], sizes = [8, 128], strides = [1, 1]} : vector<8x384xf32> to vector<8x128xf32>
    %55 = arith.addf %53, %54 : vector<8x128xf32>
    %56 = arith.negf %55 : vector<8x128xf32>
    %57 = math.exp %56 : vector<8x128xf32>
    %cst_27 = arith.constant 1.000000e+00 : f32
    %58 = vector.broadcast %cst_27 : f32 to vector<8x128xf32>
    %59 = arith.addf %58, %57 : vector<8x128xf32>
    %60 = arith.divf %58, %59 : vector<8x128xf32>
    %61 = vector.extract_strided_slice %50 {offsets = [0, 128], sizes = [8, 128], strides = [1, 1]} : vector<8x384xf32> to vector<8x128xf32>
    %62 = vector.extract_strided_slice %52 {offsets = [0, 128], sizes = [8, 128], strides = [1, 1]} : vector<8x384xf32> to vector<8x128xf32>
    %63 = arith.addf %61, %62 : vector<8x128xf32>
    %64 = arith.negf %63 : vector<8x128xf32>
    %65 = math.exp %64 : vector<8x128xf32>
    %cst_28 = arith.constant 1.000000e+00 : f32
    %66 = vector.broadcast %cst_28 : f32 to vector<8x128xf32>
    %67 = arith.addf %66, %65 : vector<8x128xf32>
    %68 = arith.divf %66, %67 : vector<8x128xf32>
    %69 = vector.extract_strided_slice %50 {offsets = [0, 256], sizes = [8, 128], strides = [1, 1]} : vector<8x384xf32> to vector<8x128xf32>
    %70 = vector.extract_strided_slice %52 {offsets = [0, 256], sizes = [8, 128], strides = [1, 1]} : vector<8x384xf32> to vector<8x128xf32>
    %71 = arith.addf %70, %12 : vector<8x128xf32>
    %72 = arith.mulf %60, %71 : vector<8x128xf32>
    %73 = arith.addf %69, %72 : vector<8x128xf32>
    %74 = math.tanh %73 : vector<8x128xf32>
    %cst_29 = arith.constant 1.000000e+00 : f32
    %75 = vector.broadcast %cst_29 : f32 to vector<8x128xf32>
    %76 = arith.subf %75, %68 : vector<8x128xf32>
    %77 = arith.mulf %76, %74 : vector<8x128xf32>
    %78 = arith.mulf %68, %44 : vector<8x128xf32>
    %79 = arith.addf %77, %78 : vector<8x128xf32>
    %80 = arith.truncf %79 : vector<8x128xf32> to vector<8x128xbf16>
    %c1_30 = arith.constant 1 : index
    %c0_31 = arith.constant 0 : index
    %c0_32 = arith.constant 0 : index
    %81 = vector.load %arg12[%c1_30, %c0_31, %c0_32] : memref<8x8x128xbf16, #tpu.memory_space<vmem>>, vector<1x8x128xbf16>
    %82 = vector.shape_cast %81 : vector<1x8x128xbf16> to vector<8x128xbf16>
    %83 = vector.shape_cast %80 : vector<8x128xbf16> to vector<1x8x128xbf16>
    tpu.vector_store %arg12[%c1_30, %c0_31, %c0_32], %83 {strides = array<i32>} : memref<8x8x128xbf16, #tpu.memory_space<vmem>>, vector<1x8x128xbf16>,
    %c2 = arith.constant 2 : index
    %c0_33 = arith.constant 0 : index
    %c0_34 = arith.constant 0 : index
    %84 = vector.load %arg13[%c2, %c0_33, %c0_34] : memref<8x8x384xf32, #tpu.memory_space<vmem>>, vector<1x8x384xf32>
    %85 = vector.shape_cast %84 : vector<1x8x384xf32> to vector<8x384xf32>
    %86 = arith.truncf %79 : vector<8x128xf32> to vector<8x128xbf16>
    %cst_35 = arith.constant dense<0.000000e+00> : vector<8x384xf32>
    %87 = tpu.matmul %86, %9, %cst_35 {dimension_numbers = #tpu.dot_dimension_numbers<[1], [0], [0], [1], [0, 0, 1, 1], [], []>} : vector<8x128xbf16>, vector<128x384xbf16>, vector<8x384xf32> -> vector<8x384xf32>
    %88 = vector.extract_strided_slice %85 {offsets = [0, 0], sizes = [8, 128], strides = [1, 1]} : vector<8x384xf32> to vector<8x128xf32>
    %89 = vector.extract_strided_slice %87 {offsets = [0, 0], sizes = [8, 128], strides = [1, 1]} : vector<8x384xf32> to vector<8x128xf32>
    %90 = arith.addf %88, %89 : vector<8x128xf32>
    %91 = arith.negf %90 : vector<8x128xf32>
    %92 = math.exp %91 : vector<8x128xf32>
    %cst_36 = arith.constant 1.000000e+00 : f32
    %93 = vector.broadcast %cst_36 : f32 to vector<8x128xf32>
    %94 = arith.addf %93, %92 : vector<8x128xf32>
    %95 = arith.divf %93, %94 : vector<8x128xf32>
    %96 = vector.extract_strided_slice %85 {offsets = [0, 128], sizes = [8, 128], strides = [1, 1]} : vector<8x384xf32> to vector<8x128xf32>
    %97 = vector.extract_strided_slice %87 {offsets = [0, 128], sizes = [8, 128], strides = [1, 1]} : vector<8x384xf32> to vector<8x128xf32>
    %98 = arith.addf %96, %97 : vector<8x128xf32>
    %99 = arith.negf %98 : vector<8x128xf32>
    %100 = math.exp %99 : vector<8x128xf32>
    %cst_37 = arith.constant 1.000000e+00 : f32
    %101 = vector.broadcast %cst_37 : f32 to vector<8x128xf32>
    %102 = arith.addf %101, %100 : vector<8x128xf32>
    %103 = arith.divf %101, %102 : vector<8x128xf32>
    %104 = vector.extract_strided_slice %85 {offsets = [0, 256], sizes = [8, 128], strides = [1, 1]} : vector<8x384xf32> to vector<8x128xf32>
    %105 = vector.extract_strided_slice %87 {offsets = [0, 256], sizes = [8, 128], strides = [1, 1]} : vector<8x384xf32> to vector<8x128xf32>
    %106 = arith.addf %105, %12 : vector<8x128xf32>
    %107 = arith.mulf %95, %106 : vector<8x128xf32>
    %108 = arith.addf %104, %107 : vector<8x128xf32>
    %109 = math.tanh %108 : vector<8x128xf32>
    %cst_38 = arith.constant 1.000000e+00 : f32
    %110 = vector.broadcast %cst_38 : f32 to vector<8x128xf32>
    %111 = arith.subf %110, %103 : vector<8x128xf32>
    %112 = arith.mulf %111, %109 : vector<8x128xf32>
    %113 = arith.mulf %103, %79 : vector<8x128xf32>
    %114 = arith.addf %112, %113 : vector<8x128xf32>
    %115 = arith.truncf %114 : vector<8x128xf32> to vector<8x128xbf16>
    %c2_39 = arith.constant 2 : index
    %c0_40 = arith.constant 0 : index
    %c0_41 = arith.constant 0 : index
    %116 = vector.load %arg12[%c2_39, %c0_40, %c0_41] : memref<8x8x128xbf16, #tpu.memory_space<vmem>>, vector<1x8x128xbf16>
    %117 = vector.shape_cast %116 : vector<1x8x128xbf16> to vector<8x128xbf16>
    %118 = vector.shape_cast %115 : vector<8x128xbf16> to vector<1x8x128xbf16>
    tpu.vector_store %arg12[%c2_39, %c0_40, %c0_41], %118 {strides = array<i32>} : memref<8x8x128xbf16, #tpu.memory_space<vmem>>, vector<1x8x128xbf16>,
    %c3 = arith.constant 3 : index
    %c0_42 = arith.constant 0 : index
    %c0_43 = arith.constant 0 : index
    %119 = vector.load %arg13[%c3, %c0_42, %c0_43] : memref<8x8x384xf32, #tpu.memory_space<vmem>>, vector<1x8x384xf32>
    %120 = vector.shape_cast %119 : vector<1x8x384xf32> to vector<8x384xf32>
    %121 = arith.truncf %114 : vector<8x128xf32> to vector<8x128xbf16>
    %cst_44 = arith.constant dense<0.000000e+00> : vector<8x384xf32>
    %122 = tpu.matmul %121, %9, %cst_44 {dimension_numbers = #tpu.dot_dimension_numbers<[1], [0], [0], [1], [0, 0, 1, 1], [], []>} : vector<8x128xbf16>, vector<128x384xbf16>, vector<8x384xf32> -> vector<8x384xf32>
    %123 = vector.extract_strided_slice %120 {offsets = [0, 0], sizes = [8, 128], strides = [1, 1]} : vector<8x384xf32> to vector<8x128xf32>
    %124 = vector.extract_strided_slice %122 {offsets = [0, 0], sizes = [8, 128], strides = [1, 1]} : vector<8x384xf32> to vector<8x128xf32>
    %125 = arith.addf %123, %124 : vector<8x128xf32>
    %126 = arith.negf %125 : vector<8x128xf32>
    %127 = math.exp %126 : vector<8x128xf32>
    %cst_45 = arith.constant 1.000000e+00 : f32
    %128 = vector.broadcast %cst_45 : f32 to vector<8x128xf32>
    %129 = arith.addf %128, %127 : vector<8x128xf32>
    %130 = arith.divf %128, %129 : vector<8x128xf32>
    %131 = vector.extract_strided_slice %120 {offsets = [0, 128], sizes = [8, 128], strides = [1, 1]} : vector<8x384xf32> to vector<8x128xf32>
    %132 = vector.extract_strided_slice %122 {offsets = [0, 128], sizes = [8, 128], strides = [1, 1]} : vector<8x384xf32> to vector<8x128xf32>
    %133 = arith.addf %131, %132 : vector<8x128xf32>
    %134 = arith.negf %133 : vector<8x128xf32>
    %135 = math.exp %134 : vector<8x128xf32>
    %cst_46 = arith.constant 1.000000e+00 : f32
    %136 = vector.broadcast %cst_46 : f32 to vector<8x128xf32>
    %137 = arith.addf %136, %135 : vector<8x128xf32>
    %138 = arith.divf %136, %137 : vector<8x128xf32>
    %139 = vector.extract_strided_slice %120 {offsets = [0, 256], sizes = [8, 128], strides = [1, 1]} : vector<8x384xf32> to vector<8x128xf32>
    %140 = vector.extract_strided_slice %122 {offsets = [0, 256], sizes = [8, 128], strides = [1, 1]} : vector<8x384xf32> to vector<8x128xf32>
    %141 = arith.addf %140, %12 : vector<8x128xf32>
    %142 = arith.mulf %130, %141 : vector<8x128xf32>
    %143 = arith.addf %139, %142 : vector<8x128xf32>
    %144 = math.tanh %143 : vector<8x128xf32>
    %cst_47 = arith.constant 1.000000e+00 : f32
    %145 = vector.broadcast %cst_47 : f32 to vector<8x128xf32>
    %146 = arith.subf %145, %138 : vector<8x128xf32>
    %147 = arith.mulf %146, %144 : vector<8x128xf32>
    %148 = arith.mulf %138, %114 : vector<8x128xf32>
    %149 = arith.addf %147, %148 : vector<8x128xf32>
    %150 = arith.truncf %149 : vector<8x128xf32> to vector<8x128xbf16>
    %c3_48 = arith.constant 3 : index
    %c0_49 = arith.constant 0 : index
    %c0_50 = arith.constant 0 : index
    %151 = vector.load %arg12[%c3_48, %c0_49, %c0_50] : memref<8x8x128xbf16, #tpu.memory_space<vmem>>, vector<1x8x128xbf16>
    %152 = vector.shape_cast %151 : vector<1x8x128xbf16> to vector<8x128xbf16>
    %153 = vector.shape_cast %150 : vector<8x128xbf16> to vector<1x8x128xbf16>
    tpu.vector_store %arg12[%c3_48, %c0_49, %c0_50], %153 {strides = array<i32>} : memref<8x8x128xbf16, #tpu.memory_space<vmem>>, vector<1x8x128xbf16>,
    %c4 = arith.constant 4 : index
    %c0_51 = arith.constant 0 : index
    %c0_52 = arith.constant 0 : index
    %154 = vector.load %arg13[%c4, %c0_51, %c0_52] : memref<8x8x384xf32, #tpu.memory_space<vmem>>, vector<1x8x384xf32>
    %155 = vector.shape_cast %154 : vector<1x8x384xf32> to vector<8x384xf32>
    %156 = arith.truncf %149 : vector<8x128xf32> to vector<8x128xbf16>
    %cst_53 = arith.constant dense<0.000000e+00> : vector<8x384xf32>
    %157 = tpu.matmul %156, %9, %cst_53 {dimension_numbers = #tpu.dot_dimension_numbers<[1], [0], [0], [1], [0, 0, 1, 1], [], []>} : vector<8x128xbf16>, vector<128x384xbf16>, vector<8x384xf32> -> vector<8x384xf32>
    %158 = vector.extract_strided_slice %155 {offsets = [0, 0], sizes = [8, 128], strides = [1, 1]} : vector<8x384xf32> to vector<8x128xf32>
    %159 = vector.extract_strided_slice %157 {offsets = [0, 0], sizes = [8, 128], strides = [1, 1]} : vector<8x384xf32> to vector<8x128xf32>
    %160 = arith.addf %158, %159 : vector<8x128xf32>
    %161 = arith.negf %160 : vector<8x128xf32>
    %162 = math.exp %161 : vector<8x128xf32>
    %cst_54 = arith.constant 1.000000e+00 : f32
    %163 = vector.broadcast %cst_54 : f32 to vector<8x128xf32>
    %164 = arith.addf %163, %162 : vector<8x128xf32>
    %165 = arith.divf %163, %164 : vector<8x128xf32>
    %166 = vector.extract_strided_slice %155 {offsets = [0, 128], sizes = [8, 128], strides = [1, 1]} : vector<8x384xf32> to vector<8x128xf32>
    %167 = vector.extract_strided_slice %157 {offsets = [0, 128], sizes = [8, 128], strides = [1, 1]} : vector<8x384xf32> to vector<8x128xf32>
    %168 = arith.addf %166, %167 : vector<8x128xf32>
    %169 = arith.negf %168 : vector<8x128xf32>
    %170 = math.exp %169 : vector<8x128xf32>
    %cst_55 = arith.constant 1.000000e+00 : f32
    %171 = vector.broadcast %cst_55 : f32 to vector<8x128xf32>
    %172 = arith.addf %171, %170 : vector<8x128xf32>
    %173 = arith.divf %171, %172 : vector<8x128xf32>
    %174 = vector.extract_strided_slice %155 {offsets = [0, 256], sizes = [8, 128], strides = [1, 1]} : vector<8x384xf32> to vector<8x128xf32>
    %175 = vector.extract_strided_slice %157 {offsets = [0, 256], sizes = [8, 128], strides = [1, 1]} : vector<8x384xf32> to vector<8x128xf32>
    %176 = arith.addf %175, %12 : vector<8x128xf32>
    %177 = arith.mulf %165, %176 : vector<8x128xf32>
    %178 = arith.addf %174, %177 : vector<8x128xf32>
    %179 = math.tanh %178 : vector<8x128xf32>
    %cst_56 = arith.constant 1.000000e+00 : f32
    %180 = vector.broadcast %cst_56 : f32 to vector<8x128xf32>
    %181 = arith.subf %180, %173 : vector<8x128xf32>
    %182 = arith.mulf %181, %179 : vector<8x128xf32>
    %183 = arith.mulf %173, %149 : vector<8x128xf32>
    %184 = arith.addf %182, %183 : vector<8x128xf32>
    %185 = arith.truncf %184 : vector<8x128xf32> to vector<8x128xbf16>
    %c4_57 = arith.constant 4 : index
    %c0_58 = arith.constant 0 : index
    %c0_59 = arith.constant 0 : index
    %186 = vector.load %arg12[%c4_57, %c0_58, %c0_59] : memref<8x8x128xbf16, #tpu.memory_space<vmem>>, vector<1x8x128xbf16>
    %187 = vector.shape_cast %186 : vector<1x8x128xbf16> to vector<8x128xbf16>
    %188 = vector.shape_cast %185 : vector<8x128xbf16> to vector<1x8x128xbf16>
    tpu.vector_store %arg12[%c4_57, %c0_58, %c0_59], %188 {strides = array<i32>} : memref<8x8x128xbf16, #tpu.memory_space<vmem>>, vector<1x8x128xbf16>,
    %c5 = arith.constant 5 : index
    %c0_60 = arith.constant 0 : index
    %c0_61 = arith.constant 0 : index
    %189 = vector.load %arg13[%c5, %c0_60, %c0_61] : memref<8x8x384xf32, #tpu.memory_space<vmem>>, vector<1x8x384xf32>
    %190 = vector.shape_cast %189 : vector<1x8x384xf32> to vector<8x384xf32>
    %191 = arith.truncf %184 : vector<8x128xf32> to vector<8x128xbf16>
    %cst_62 = arith.constant dense<0.000000e+00> : vector<8x384xf32>
    %192 = tpu.matmul %191, %9, %cst_62 {dimension_numbers = #tpu.dot_dimension_numbers<[1], [0], [0], [1], [0, 0, 1, 1], [], []>} : vector<8x128xbf16>, vector<128x384xbf16>, vector<8x384xf32> -> vector<8x384xf32>
    %193 = vector.extract_strided_slice %190 {offsets = [0, 0], sizes = [8, 128], strides = [1, 1]} : vector<8x384xf32> to vector<8x128xf32>
    %194 = vector.extract_strided_slice %192 {offsets = [0, 0], sizes = [8, 128], strides = [1, 1]} : vector<8x384xf32> to vector<8x128xf32>
    %195 = arith.addf %193, %194 : vector<8x128xf32>
    %196 = arith.negf %195 : vector<8x128xf32>
    %197 = math.exp %196 : vector<8x128xf32>
    %cst_63 = arith.constant 1.000000e+00 : f32
    %198 = vector.broadcast %cst_63 : f32 to vector<8x128xf32>
    %199 = arith.addf %198, %197 : vector<8x128xf32>
    %200 = arith.divf %198, %199 : vector<8x128xf32>
    %201 = vector.extract_strided_slice %190 {offsets = [0, 128], sizes = [8, 128], strides = [1, 1]} : vector<8x384xf32> to vector<8x128xf32>
    %202 = vector.extract_strided_slice %192 {offsets = [0, 128], sizes = [8, 128], strides = [1, 1]} : vector<8x384xf32> to vector<8x128xf32>
    %203 = arith.addf %201, %202 : vector<8x128xf32>
    %204 = arith.negf %203 : vector<8x128xf32>
    %205 = math.exp %204 : vector<8x128xf32>
    %cst_64 = arith.constant 1.000000e+00 : f32
    %206 = vector.broadcast %cst_64 : f32 to vector<8x128xf32>
    %207 = arith.addf %206, %205 : vector<8x128xf32>
    %208 = arith.divf %206, %207 : vector<8x128xf32>
    %209 = vector.extract_strided_slice %190 {offsets = [0, 256], sizes = [8, 128], strides = [1, 1]} : vector<8x384xf32> to vector<8x128xf32>
    %210 = vector.extract_strided_slice %192 {offsets = [0, 256], sizes = [8, 128], strides = [1, 1]} : vector<8x384xf32> to vector<8x128xf32>
    %211 = arith.addf %210, %12 : vector<8x128xf32>
    %212 = arith.mulf %200, %211 : vector<8x128xf32>
    %213 = arith.addf %209, %212 : vector<8x128xf32>
    %214 = math.tanh %213 : vector<8x128xf32>
    %cst_65 = arith.constant 1.000000e+00 : f32
    %215 = vector.broadcast %cst_65 : f32 to vector<8x128xf32>
    %216 = arith.subf %215, %208 : vector<8x128xf32>
    %217 = arith.mulf %216, %214 : vector<8x128xf32>
    %218 = arith.mulf %208, %184 : vector<8x128xf32>
    %219 = arith.addf %217, %218 : vector<8x128xf32>
    %220 = arith.truncf %219 : vector<8x128xf32> to vector<8x128xbf16>
    %c5_66 = arith.constant 5 : index
    %c0_67 = arith.constant 0 : index
    %c0_68 = arith.constant 0 : index
    %221 = vector.load %arg12[%c5_66, %c0_67, %c0_68] : memref<8x8x128xbf16, #tpu.memory_space<vmem>>, vector<1x8x128xbf16>
    %222 = vector.shape_cast %221 : vector<1x8x128xbf16> to vector<8x128xbf16>
    %223 = vector.shape_cast %220 : vector<8x128xbf16> to vector<1x8x128xbf16>
    tpu.vector_store %arg12[%c5_66, %c0_67, %c0_68], %223 {strides = array<i32>} : memref<8x8x128xbf16, #tpu.memory_space<vmem>>, vector<1x8x128xbf16>,
    %c6 = arith.constant 6 : index
    %c0_69 = arith.constant 0 : index
    %c0_70 = arith.constant 0 : index
    %224 = vector.load %arg13[%c6, %c0_69, %c0_70] : memref<8x8x384xf32, #tpu.memory_space<vmem>>, vector<1x8x384xf32>
    %225 = vector.shape_cast %224 : vector<1x8x384xf32> to vector<8x384xf32>
    %226 = arith.truncf %219 : vector<8x128xf32> to vector<8x128xbf16>
    %cst_71 = arith.constant dense<0.000000e+00> : vector<8x384xf32>
    %227 = tpu.matmul %226, %9, %cst_71 {dimension_numbers = #tpu.dot_dimension_numbers<[1], [0], [0], [1], [0, 0, 1, 1], [], []>} : vector<8x128xbf16>, vector<128x384xbf16>, vector<8x384xf32> -> vector<8x384xf32>
    %228 = vector.extract_strided_slice %225 {offsets = [0, 0], sizes = [8, 128], strides = [1, 1]} : vector<8x384xf32> to vector<8x128xf32>
    %229 = vector.extract_strided_slice %227 {offsets = [0, 0], sizes = [8, 128], strides = [1, 1]} : vector<8x384xf32> to vector<8x128xf32>
    %230 = arith.addf %228, %229 : vector<8x128xf32>
    %231 = arith.negf %230 : vector<8x128xf32>
    %232 = math.exp %231 : vector<8x128xf32>
    %cst_72 = arith.constant 1.000000e+00 : f32
    %233 = vector.broadcast %cst_72 : f32 to vector<8x128xf32>
    %234 = arith.addf %233, %232 : vector<8x128xf32>
    %235 = arith.divf %233, %234 : vector<8x128xf32>
    %236 = vector.extract_strided_slice %225 {offsets = [0, 128], sizes = [8, 128], strides = [1, 1]} : vector<8x384xf32> to vector<8x128xf32>
    %237 = vector.extract_strided_slice %227 {offsets = [0, 128], sizes = [8, 128], strides = [1, 1]} : vector<8x384xf32> to vector<8x128xf32>
    %238 = arith.addf %236, %237 : vector<8x128xf32>
    %239 = arith.negf %238 : vector<8x128xf32>
    %240 = math.exp %239 : vector<8x128xf32>
    %cst_73 = arith.constant 1.000000e+00 : f32
    %241 = vector.broadcast %cst_73 : f32 to vector<8x128xf32>
    %242 = arith.addf %241, %240 : vector<8x128xf32>
    %243 = arith.divf %241, %242 : vector<8x128xf32>
    %244 = vector.extract_strided_slice %225 {offsets = [0, 256], sizes = [8, 128], strides = [1, 1]} : vector<8x384xf32> to vector<8x128xf32>
    %245 = vector.extract_strided_slice %227 {offsets = [0, 256], sizes = [8, 128], strides = [1, 1]} : vector<8x384xf32> to vector<8x128xf32>
    %246 = arith.addf %245, %12 : vector<8x128xf32>
    %247 = arith.mulf %235, %246 : vector<8x128xf32>
    %248 = arith.addf %244, %247 : vector<8x128xf32>
    %249 = math.tanh %248 : vector<8x128xf32>
    %cst_74 = arith.constant 1.000000e+00 : f32
    %250 = vector.broadcast %cst_74 : f32 to vector<8x128xf32>
    %251 = arith.subf %250, %243 : vector<8x128xf32>
    %252 = arith.mulf %251, %249 : vector<8x128xf32>
    %253 = arith.mulf %243, %219 : vector<8x128xf32>
    %254 = arith.addf %252, %253 : vector<8x128xf32>
    %255 = arith.truncf %254 : vector<8x128xf32> to vector<8x128xbf16>
    %c6_75 = arith.constant 6 : index
    %c0_76 = arith.constant 0 : index
    %c0_77 = arith.constant 0 : index
    %256 = vector.load %arg12[%c6_75, %c0_76, %c0_77] : memref<8x8x128xbf16, #tpu.memory_space<vmem>>, vector<1x8x128xbf16>
    %257 = vector.shape_cast %256 : vector<1x8x128xbf16> to vector<8x128xbf16>
    %258 = vector.shape_cast %255 : vector<8x128xbf16> to vector<1x8x128xbf16>
    tpu.vector_store %arg12[%c6_75, %c0_76, %c0_77], %258 {strides = array<i32>} : memref<8x8x128xbf16, #tpu.memory_space<vmem>>, vector<1x8x128xbf16>,
    %c7 = arith.constant 7 : index
    %c0_78 = arith.constant 0 : index
    %c0_79 = arith.constant 0 : index
    %259 = vector.load %arg13[%c7, %c0_78, %c0_79] : memref<8x8x384xf32, #tpu.memory_space<vmem>>, vector<1x8x384xf32>
    %260 = vector.shape_cast %259 : vector<1x8x384xf32> to vector<8x384xf32>
    %261 = arith.truncf %254 : vector<8x128xf32> to vector<8x128xbf16>
    %cst_80 = arith.constant dense<0.000000e+00> : vector<8x384xf32>
    %262 = tpu.matmul %261, %9, %cst_80 {dimension_numbers = #tpu.dot_dimension_numbers<[1], [0], [0], [1], [0, 0, 1, 1], [], []>} : vector<8x128xbf16>, vector<128x384xbf16>, vector<8x384xf32> -> vector<8x384xf32>
    %263 = vector.extract_strided_slice %260 {offsets = [0, 0], sizes = [8, 128], strides = [1, 1]} : vector<8x384xf32> to vector<8x128xf32>
    %264 = vector.extract_strided_slice %262 {offsets = [0, 0], sizes = [8, 128], strides = [1, 1]} : vector<8x384xf32> to vector<8x128xf32>
    %265 = arith.addf %263, %264 : vector<8x128xf32>
    %266 = arith.negf %265 : vector<8x128xf32>
    %267 = math.exp %266 : vector<8x128xf32>
    %cst_81 = arith.constant 1.000000e+00 : f32
    %268 = vector.broadcast %cst_81 : f32 to vector<8x128xf32>
    %269 = arith.addf %268, %267 : vector<8x128xf32>
    %270 = arith.divf %268, %269 : vector<8x128xf32>
    %271 = vector.extract_strided_slice %260 {offsets = [0, 128], sizes = [8, 128], strides = [1, 1]} : vector<8x384xf32> to vector<8x128xf32>
    %272 = vector.extract_strided_slice %262 {offsets = [0, 128], sizes = [8, 128], strides = [1, 1]} : vector<8x384xf32> to vector<8x128xf32>
    %273 = arith.addf %271, %272 : vector<8x128xf32>
    %274 = arith.negf %273 : vector<8x128xf32>
    %275 = math.exp %274 : vector<8x128xf32>
    %cst_82 = arith.constant 1.000000e+00 : f32
    %276 = vector.broadcast %cst_82 : f32 to vector<8x128xf32>
    %277 = arith.addf %276, %275 : vector<8x128xf32>
    %278 = arith.divf %276, %277 : vector<8x128xf32>
    %279 = vector.extract_strided_slice %260 {offsets = [0, 256], sizes = [8, 128], strides = [1, 1]} : vector<8x384xf32> to vector<8x128xf32>
    %280 = vector.extract_strided_slice %262 {offsets = [0, 256], sizes = [8, 128], strides = [1, 1]} : vector<8x384xf32> to vector<8x128xf32>
    %281 = arith.addf %280, %12 : vector<8x128xf32>
    %282 = arith.mulf %270, %281 : vector<8x128xf32>
    %283 = arith.addf %279, %282 : vector<8x128xf32>
    %284 = math.tanh %283 : vector<8x128xf32>
    %cst_83 = arith.constant 1.000000e+00 : f32
    %285 = vector.broadcast %cst_83 : f32 to vector<8x128xf32>
    %286 = arith.subf %285, %278 : vector<8x128xf32>
    %287 = arith.mulf %286, %284 : vector<8x128xf32>
    %288 = arith.mulf %278, %254 : vector<8x128xf32>
    %289 = arith.addf %287, %288 : vector<8x128xf32>
    %290 = arith.truncf %289 : vector<8x128xf32> to vector<8x128xbf16>
    %c7_84 = arith.constant 7 : index
    %c0_85 = arith.constant 0 : index
    %c0_86 = arith.constant 0 : index
    %291 = vector.load %arg12[%c7_84, %c0_85, %c0_86] : memref<8x8x128xbf16, #tpu.memory_space<vmem>>, vector<1x8x128xbf16>
    %292 = vector.shape_cast %291 : vector<1x8x128xbf16> to vector<8x128xbf16>
    %293 = vector.shape_cast %290 : vector<8x128xbf16> to vector<1x8x128xbf16>
    tpu.vector_store %arg12[%c7_84, %c0_85, %c0_86], %293 {strides = array<i32>} : memref<8x8x128xbf16, #tpu.memory_space<vmem>>, vector<1x8x128xbf16>,
    %c0_87 = arith.constant 0 : index
    %c0_88 = arith.constant 0 : index
    %c0_89 = arith.constant 0 : index
    %294 = vector.load %arg11[%c0_87, %c0_88, %c0_89] : memref<2x8x128xf32, #tpu.memory_space<vmem>>, vector<1x8x128xf32>
    %295 = vector.shape_cast %294 : vector<1x8x128xf32> to vector<8x128xf32>
    %296 = vector.shape_cast %289 : vector<8x128xf32> to vector<1x8x128xf32>
    tpu.vector_store %arg11[%c0_87, %c0_88, %c0_89], %296 {strides = array<i32>} : memref<2x8x128xf32, #tpu.memory_space<vmem>>, vector<1x8x128xf32>,
    %c0_90 = arith.constant 0 : index
    %c0_91 = arith.constant 0 : index
    %c0_92 = arith.constant 0 : index
    %297 = vector.load %arg12[%c0_90, %c0_91, %c0_92] : memref<8x8x128xbf16, #tpu.memory_space<vmem>>, vector<8x8x128xbf16>
    %c0_93 = arith.constant 0 : index
    %c0_94 = arith.constant 0 : index
    %c0_95 = arith.constant 0 : index
    %298 = vector.load %arg9[%c0_93, %c0_94, %c0_95] : memref<8x8x128xbf16, #tpu.memory_space<vmem>>, vector<8x8x128xbf16>
    %299 = arith.mulf %297, %298 : vector<8x8x128xbf16>
    %300 = vector.shape_cast %299 : vector<8x8x128xbf16> to vector<64x128xbf16>
    %c0_96 = arith.constant 0 : index
    %c0_97 = arith.constant 0 : index
    %301 = vector.load %arg5[%c0_96, %c0_97] : memref<128x384xbf16, #tpu.memory_space<vmem>>, vector<128x384xbf16>
    %cst_98 = arith.constant dense<0.000000e+00> : vector<64x384xf32>
    %302 = tpu.matmul %300, %301, %cst_98 {dimension_numbers = #tpu.dot_dimension_numbers<[1], [0], [0], [1], [0, 0, 1, 1], [], []>} : vector<64x128xbf16>, vector<128x384xbf16>, vector<64x384xf32> -> vector<64x384xf32>
    %c0_99 = arith.constant 0 : index
    %c0_100 = arith.constant 0 : index
    %303 = vector.load %arg7[%c0_99, %c0_100] : memref<1x384xf32, #tpu.memory_space<vmem>>, vector<1x384xf32>
    %304 = vector.broadcast %303 : vector<1x384xf32> to vector<64x384xf32>
    %305 = arith.addf %302, %304 : vector<64x384xf32>
    %306 = vector.shape_cast %305 : vector<64x384xf32> to vector<8x8x384xf32>
    %c0_101 = arith.constant 0 : index
    %c0_102 = arith.constant 0 : index
    %c0_103 = arith.constant 0 : index
    %307 = vector.load %arg13[%c0_101, %c0_102, %c0_103] : memref<8x8x384xf32, #tpu.memory_space<vmem>>, vector<8x8x384xf32>
    tpu.vector_store %arg13[%c0_101, %c0_102, %c0_103], %306 {strides = array<i32>} : memref<8x8x384xf32, #tpu.memory_space<vmem>>, vector<8x8x384xf32>,
    %c0_104 = arith.constant 0 : index
    %c0_105 = arith.constant 0 : index
    %308 = vector.load %arg6[%c0_104, %c0_105] : memref<128x384xbf16, #tpu.memory_space<vmem>>, vector<128x384xbf16>
    %c0_106 = arith.constant 0 : index
    %c0_107 = arith.constant 0 : index
    %309 = vector.load %arg8[%c0_106, %c0_107] : memref<1x128xf32, #tpu.memory_space<vmem>>, vector<1x128xf32>
    %310 = vector.shape_cast %309 : vector<1x128xf32> to vector<1x128xf32>
    %311 = vector.broadcast %310 : vector<1x128xf32> to vector<8x128xf32>
    %cst_108 = arith.constant 0.000000e+00 : f32
    %312 = vector.broadcast %cst_108 : f32 to vector<8x128xf32>
    %c0_109 = arith.constant 0 : index
    %c0_110 = arith.constant 0 : index
    %c0_111 = arith.constant 0 : index
    %313 = vector.load %arg13[%c0_109, %c0_110, %c0_111] : memref<8x8x384xf32, #tpu.memory_space<vmem>>, vector<1x8x384xf32>
    %314 = vector.shape_cast %313 : vector<1x8x384xf32> to vector<8x384xf32>
    %315 = arith.truncf %312 : vector<8x128xf32> to vector<8x128xbf16>
    %cst_112 = arith.constant dense<0.000000e+00> : vector<8x384xf32>
    %316 = tpu.matmul %315, %308, %cst_112 {dimension_numbers = #tpu.dot_dimension_numbers<[1], [0], [0], [1], [0, 0, 1, 1], [], []>} : vector<8x128xbf16>, vector<128x384xbf16>, vector<8x384xf32> -> vector<8x384xf32>
    %317 = vector.extract_strided_slice %314 {offsets = [0, 0], sizes = [8, 128], strides = [1, 1]} : vector<8x384xf32> to vector<8x128xf32>
    %318 = vector.extract_strided_slice %316 {offsets = [0, 0], sizes = [8, 128], strides = [1, 1]} : vector<8x384xf32> to vector<8x128xf32>
    %319 = arith.addf %317, %318 : vector<8x128xf32>
    %320 = arith.negf %319 : vector<8x128xf32>
    %321 = math.exp %320 : vector<8x128xf32>
    %cst_113 = arith.constant 1.000000e+00 : f32
    %322 = vector.broadcast %cst_113 : f32 to vector<8x128xf32>
    %323 = arith.addf %322, %321 : vector<8x128xf32>
    %324 = arith.divf %322, %323 : vector<8x128xf32>
    %325 = vector.extract_strided_slice %314 {offsets = [0, 128], sizes = [8, 128], strides = [1, 1]} : vector<8x384xf32> to vector<8x128xf32>
    %326 = vector.extract_strided_slice %316 {offsets = [0, 128], sizes = [8, 128], strides = [1, 1]} : vector<8x384xf32> to vector<8x128xf32>
    %327 = arith.addf %325, %326 : vector<8x128xf32>
    %328 = arith.negf %327 : vector<8x128xf32>
    %329 = math.exp %328 : vector<8x128xf32>
    %cst_114 = arith.constant 1.000000e+00 : f32
    %330 = vector.broadcast %cst_114 : f32 to vector<8x128xf32>
    %331 = arith.addf %330, %329 : vector<8x128xf32>
    %332 = arith.divf %330, %331 : vector<8x128xf32>
    %333 = vector.extract_strided_slice %314 {offsets = [0, 256], sizes = [8, 128], strides = [1, 1]} : vector<8x384xf32> to vector<8x128xf32>
    %334 = vector.extract_strided_slice %316 {offsets = [0, 256], sizes = [8, 128], strides = [1, 1]} : vector<8x384xf32> to vector<8x128xf32>
    %335 = arith.addf %334, %311 : vector<8x128xf32>
    %336 = arith.mulf %324, %335 : vector<8x128xf32>
    %337 = arith.addf %333, %336 : vector<8x128xf32>
    %338 = math.tanh %337 : vector<8x128xf32>
    %cst_115 = arith.constant 1.000000e+00 : f32
    %339 = vector.broadcast %cst_115 : f32 to vector<8x128xf32>
    %340 = arith.subf %339, %332 : vector<8x128xf32>
    %341 = arith.mulf %340, %338 : vector<8x128xf32>
    %342 = arith.mulf %332, %312 : vector<8x128xf32>
    %343 = arith.addf %341, %342 : vector<8x128xf32>
    %c0_116 = arith.constant 0 : index
    %c0_117 = arith.constant 0 : index
    %c0_118 = arith.constant 0 : index
    %344 = vector.load %arg10[%c0_116, %c0_117, %c0_118] : memref<8x8x128xf32, #tpu.memory_space<vmem>>, vector<1x8x128xf32>
    %345 = vector.shape_cast %344 : vector<1x8x128xf32> to vector<8x128xf32>
    %346 = vector.shape_cast %343 : vector<8x128xf32> to vector<1x8x128xf32>
    tpu.vector_store %arg10[%c0_116, %c0_117, %c0_118], %346 {strides = array<i32>} : memref<8x8x128xf32, #tpu.memory_space<vmem>>, vector<1x8x128xf32>,
    %c1_119 = arith.constant 1 : index
    %c0_120 = arith.constant 0 : index
    %c0_121 = arith.constant 0 : index
    %347 = vector.load %arg13[%c1_119, %c0_120, %c0_121] : memref<8x8x384xf32, #tpu.memory_space<vmem>>, vector<1x8x384xf32>
    %348 = vector.shape_cast %347 : vector<1x8x384xf32> to vector<8x384xf32>
    %349 = arith.truncf %343 : vector<8x128xf32> to vector<8x128xbf16>
    %cst_122 = arith.constant dense<0.000000e+00> : vector<8x384xf32>
    %350 = tpu.matmul %349, %308, %cst_122 {dimension_numbers = #tpu.dot_dimension_numbers<[1], [0], [0], [1], [0, 0, 1, 1], [], []>} : vector<8x128xbf16>, vector<128x384xbf16>, vector<8x384xf32> -> vector<8x384xf32>
    %351 = vector.extract_strided_slice %348 {offsets = [0, 0], sizes = [8, 128], strides = [1, 1]} : vector<8x384xf32> to vector<8x128xf32>
    %352 = vector.extract_strided_slice %350 {offsets = [0, 0], sizes = [8, 128], strides = [1, 1]} : vector<8x384xf32> to vector<8x128xf32>
    %353 = arith.addf %351, %352 : vector<8x128xf32>
    %354 = arith.negf %353 : vector<8x128xf32>
    %355 = math.exp %354 : vector<8x128xf32>
    %cst_123 = arith.constant 1.000000e+00 : f32
    %356 = vector.broadcast %cst_123 : f32 to vector<8x128xf32>
    %357 = arith.addf %356, %355 : vector<8x128xf32>
    %358 = arith.divf %356, %357 : vector<8x128xf32>
    %359 = vector.extract_strided_slice %348 {offsets = [0, 128], sizes = [8, 128], strides = [1, 1]} : vector<8x384xf32> to vector<8x128xf32>
    %360 = vector.extract_strided_slice %350 {offsets = [0, 128], sizes = [8, 128], strides = [1, 1]} : vector<8x384xf32> to vector<8x128xf32>
    %361 = arith.addf %359, %360 : vector<8x128xf32>
    %362 = arith.negf %361 : vector<8x128xf32>
    %363 = math.exp %362 : vector<8x128xf32>
    %cst_124 = arith.constant 1.000000e+00 : f32
    %364 = vector.broadcast %cst_124 : f32 to vector<8x128xf32>
    %365 = arith.addf %364, %363 : vector<8x128xf32>
    %366 = arith.divf %364, %365 : vector<8x128xf32>
    %367 = vector.extract_strided_slice %348 {offsets = [0, 256], sizes = [8, 128], strides = [1, 1]} : vector<8x384xf32> to vector<8x128xf32>
    %368 = vector.extract_strided_slice %350 {offsets = [0, 256], sizes = [8, 128], strides = [1, 1]} : vector<8x384xf32> to vector<8x128xf32>
    %369 = arith.addf %368, %311 : vector<8x128xf32>
    %370 = arith.mulf %358, %369 : vector<8x128xf32>
    %371 = arith.addf %367, %370 : vector<8x128xf32>
    %372 = math.tanh %371 : vector<8x128xf32>
    %cst_125 = arith.constant 1.000000e+00 : f32
    %373 = vector.broadcast %cst_125 : f32 to vector<8x128xf32>
    %374 = arith.subf %373, %366 : vector<8x128xf32>
    %375 = arith.mulf %374, %372 : vector<8x128xf32>
    %376 = arith.mulf %366, %343 : vector<8x128xf32>
    %377 = arith.addf %375, %376 : vector<8x128xf32>
    %c1_126 = arith.constant 1 : index
    %c0_127 = arith.constant 0 : index
    %c0_128 = arith.constant 0 : index
    %378 = vector.load %arg10[%c1_126, %c0_127, %c0_128] : memref<8x8x128xf32, #tpu.memory_space<vmem>>, vector<1x8x128xf32>
    %379 = vector.shape_cast %378 : vector<1x8x128xf32> to vector<8x128xf32>
    %380 = vector.shape_cast %377 : vector<8x128xf32> to vector<1x8x128xf32>
    tpu.vector_store %arg10[%c1_126, %c0_127, %c0_128], %380 {strides = array<i32>} : memref<8x8x128xf32, #tpu.memory_space<vmem>>, vector<1x8x128xf32>,
    %c2_129 = arith.constant 2 : index
    %c0_130 = arith.constant 0 : index
    %c0_131 = arith.constant 0 : index
    %381 = vector.load %arg13[%c2_129, %c0_130, %c0_131] : memref<8x8x384xf32, #tpu.memory_space<vmem>>, vector<1x8x384xf32>
    %382 = vector.shape_cast %381 : vector<1x8x384xf32> to vector<8x384xf32>
    %383 = arith.truncf %377 : vector<8x128xf32> to vector<8x128xbf16>
    %cst_132 = arith.constant dense<0.000000e+00> : vector<8x384xf32>
    %384 = tpu.matmul %383, %308, %cst_132 {dimension_numbers = #tpu.dot_dimension_numbers<[1], [0], [0], [1], [0, 0, 1, 1], [], []>} : vector<8x128xbf16>, vector<128x384xbf16>, vector<8x384xf32> -> vector<8x384xf32>
    %385 = vector.extract_strided_slice %382 {offsets = [0, 0], sizes = [8, 128], strides = [1, 1]} : vector<8x384xf32> to vector<8x128xf32>
    %386 = vector.extract_strided_slice %384 {offsets = [0, 0], sizes = [8, 128], strides = [1, 1]} : vector<8x384xf32> to vector<8x128xf32>
    %387 = arith.addf %385, %386 : vector<8x128xf32>
    %388 = arith.negf %387 : vector<8x128xf32>
    %389 = math.exp %388 : vector<8x128xf32>
    %cst_133 = arith.constant 1.000000e+00 : f32
    %390 = vector.broadcast %cst_133 : f32 to vector<8x128xf32>
    %391 = arith.addf %390, %389 : vector<8x128xf32>
    %392 = arith.divf %390, %391 : vector<8x128xf32>
    %393 = vector.extract_strided_slice %382 {offsets = [0, 128], sizes = [8, 128], strides = [1, 1]} : vector<8x384xf32> to vector<8x128xf32>
    %394 = vector.extract_strided_slice %384 {offsets = [0, 128], sizes = [8, 128], strides = [1, 1]} : vector<8x384xf32> to vector<8x128xf32>
    %395 = arith.addf %393, %394 : vector<8x128xf32>
    %396 = arith.negf %395 : vector<8x128xf32>
    %397 = math.exp %396 : vector<8x128xf32>
    %cst_134 = arith.constant 1.000000e+00 : f32
    %398 = vector.broadcast %cst_134 : f32 to vector<8x128xf32>
    %399 = arith.addf %398, %397 : vector<8x128xf32>
    %400 = arith.divf %398, %399 : vector<8x128xf32>
    %401 = vector.extract_strided_slice %382 {offsets = [0, 256], sizes = [8, 128], strides = [1, 1]} : vector<8x384xf32> to vector<8x128xf32>
    %402 = vector.extract_strided_slice %384 {offsets = [0, 256], sizes = [8, 128], strides = [1, 1]} : vector<8x384xf32> to vector<8x128xf32>
    %403 = arith.addf %402, %311 : vector<8x128xf32>
    %404 = arith.mulf %392, %403 : vector<8x128xf32>
    %405 = arith.addf %401, %404 : vector<8x128xf32>
    %406 = math.tanh %405 : vector<8x128xf32>
    %cst_135 = arith.constant 1.000000e+00 : f32
    %407 = vector.broadcast %cst_135 : f32 to vector<8x128xf32>
    %408 = arith.subf %407, %400 : vector<8x128xf32>
    %409 = arith.mulf %408, %406 : vector<8x128xf32>
    %410 = arith.mulf %400, %377 : vector<8x128xf32>
    %411 = arith.addf %409, %410 : vector<8x128xf32>
    %c2_136 = arith.constant 2 : index
    %c0_137 = arith.constant 0 : index
    %c0_138 = arith.constant 0 : index
    %412 = vector.load %arg10[%c2_136, %c0_137, %c0_138] : memref<8x8x128xf32, #tpu.memory_space<vmem>>, vector<1x8x128xf32>
    %413 = vector.shape_cast %412 : vector<1x8x128xf32> to vector<8x128xf32>
    %414 = vector.shape_cast %411 : vector<8x128xf32> to vector<1x8x128xf32>
    tpu.vector_store %arg10[%c2_136, %c0_137, %c0_138], %414 {strides = array<i32>} : memref<8x8x128xf32, #tpu.memory_space<vmem>>, vector<1x8x128xf32>,
    %c3_139 = arith.constant 3 : index
    %c0_140 = arith.constant 0 : index
    %c0_141 = arith.constant 0 : index
    %415 = vector.load %arg13[%c3_139, %c0_140, %c0_141] : memref<8x8x384xf32, #tpu.memory_space<vmem>>, vector<1x8x384xf32>
    %416 = vector.shape_cast %415 : vector<1x8x384xf32> to vector<8x384xf32>
    %417 = arith.truncf %411 : vector<8x128xf32> to vector<8x128xbf16>
    %cst_142 = arith.constant dense<0.000000e+00> : vector<8x384xf32>
    %418 = tpu.matmul %417, %308, %cst_142 {dimension_numbers = #tpu.dot_dimension_numbers<[1], [0], [0], [1], [0, 0, 1, 1], [], []>} : vector<8x128xbf16>, vector<128x384xbf16>, vector<8x384xf32> -> vector<8x384xf32>
    %419 = vector.extract_strided_slice %416 {offsets = [0, 0], sizes = [8, 128], strides = [1, 1]} : vector<8x384xf32> to vector<8x128xf32>
    %420 = vector.extract_strided_slice %418 {offsets = [0, 0], sizes = [8, 128], strides = [1, 1]} : vector<8x384xf32> to vector<8x128xf32>
    %421 = arith.addf %419, %420 : vector<8x128xf32>
    %422 = arith.negf %421 : vector<8x128xf32>
    %423 = math.exp %422 : vector<8x128xf32>
    %cst_143 = arith.constant 1.000000e+00 : f32
    %424 = vector.broadcast %cst_143 : f32 to vector<8x128xf32>
    %425 = arith.addf %424, %423 : vector<8x128xf32>
    %426 = arith.divf %424, %425 : vector<8x128xf32>
    %427 = vector.extract_strided_slice %416 {offsets = [0, 128], sizes = [8, 128], strides = [1, 1]} : vector<8x384xf32> to vector<8x128xf32>
    %428 = vector.extract_strided_slice %418 {offsets = [0, 128], sizes = [8, 128], strides = [1, 1]} : vector<8x384xf32> to vector<8x128xf32>
    %429 = arith.addf %427, %428 : vector<8x128xf32>
    %430 = arith.negf %429 : vector<8x128xf32>
    %431 = math.exp %430 : vector<8x128xf32>
    %cst_144 = arith.constant 1.000000e+00 : f32
    %432 = vector.broadcast %cst_144 : f32 to vector<8x128xf32>
    %433 = arith.addf %432, %431 : vector<8x128xf32>
    %434 = arith.divf %432, %433 : vector<8x128xf32>
    %435 = vector.extract_strided_slice %416 {offsets = [0, 256], sizes = [8, 128], strides = [1, 1]} : vector<8x384xf32> to vector<8x128xf32>
    %436 = vector.extract_strided_slice %418 {offsets = [0, 256], sizes = [8, 128], strides = [1, 1]} : vector<8x384xf32> to vector<8x128xf32>
    %437 = arith.addf %436, %311 : vector<8x128xf32>
    %438 = arith.mulf %426, %437 : vector<8x128xf32>
    %439 = arith.addf %435, %438 : vector<8x128xf32>
    %440 = math.tanh %439 : vector<8x128xf32>
    %cst_145 = arith.constant 1.000000e+00 : f32
    %441 = vector.broadcast %cst_145 : f32 to vector<8x128xf32>
    %442 = arith.subf %441, %434 : vector<8x128xf32>
    %443 = arith.mulf %442, %440 : vector<8x128xf32>
    %444 = arith.mulf %434, %411 : vector<8x128xf32>
    %445 = arith.addf %443, %444 : vector<8x128xf32>
    %c3_146 = arith.constant 3 : index
    %c0_147 = arith.constant 0 : index
    %c0_148 = arith.constant 0 : index
    %446 = vector.load %arg10[%c3_146, %c0_147, %c0_148] : memref<8x8x128xf32, #tpu.memory_space<vmem>>, vector<1x8x128xf32>
    %447 = vector.shape_cast %446 : vector<1x8x128xf32> to vector<8x128xf32>
    %448 = vector.shape_cast %445 : vector<8x128xf32> to vector<1x8x128xf32>
    tpu.vector_store %arg10[%c3_146, %c0_147, %c0_148], %448 {strides = array<i32>} : memref<8x8x128xf32, #tpu.memory_space<vmem>>, vector<1x8x128xf32>,
    %c4_149 = arith.constant 4 : index
    %c0_150 = arith.constant 0 : index
    %c0_151 = arith.constant 0 : index
    %449 = vector.load %arg13[%c4_149, %c0_150, %c0_151] : memref<8x8x384xf32, #tpu.memory_space<vmem>>, vector<1x8x384xf32>
    %450 = vector.shape_cast %449 : vector<1x8x384xf32> to vector<8x384xf32>
    %451 = arith.truncf %445 : vector<8x128xf32> to vector<8x128xbf16>
    %cst_152 = arith.constant dense<0.000000e+00> : vector<8x384xf32>
    %452 = tpu.matmul %451, %308, %cst_152 {dimension_numbers = #tpu.dot_dimension_numbers<[1], [0], [0], [1], [0, 0, 1, 1], [], []>} : vector<8x128xbf16>, vector<128x384xbf16>, vector<8x384xf32> -> vector<8x384xf32>
    %453 = vector.extract_strided_slice %450 {offsets = [0, 0], sizes = [8, 128], strides = [1, 1]} : vector<8x384xf32> to vector<8x128xf32>
    %454 = vector.extract_strided_slice %452 {offsets = [0, 0], sizes = [8, 128], strides = [1, 1]} : vector<8x384xf32> to vector<8x128xf32>
    %455 = arith.addf %453, %454 : vector<8x128xf32>
    %456 = arith.negf %455 : vector<8x128xf32>
    %457 = math.exp %456 : vector<8x128xf32>
    %cst_153 = arith.constant 1.000000e+00 : f32
    %458 = vector.broadcast %cst_153 : f32 to vector<8x128xf32>
    %459 = arith.addf %458, %457 : vector<8x128xf32>
    %460 = arith.divf %458, %459 : vector<8x128xf32>
    %461 = vector.extract_strided_slice %450 {offsets = [0, 128], sizes = [8, 128], strides = [1, 1]} : vector<8x384xf32> to vector<8x128xf32>
    %462 = vector.extract_strided_slice %452 {offsets = [0, 128], sizes = [8, 128], strides = [1, 1]} : vector<8x384xf32> to vector<8x128xf32>
    %463 = arith.addf %461, %462 : vector<8x128xf32>
    %464 = arith.negf %463 : vector<8x128xf32>
    %465 = math.exp %464 : vector<8x128xf32>
    %cst_154 = arith.constant 1.000000e+00 : f32
    %466 = vector.broadcast %cst_154 : f32 to vector<8x128xf32>
    %467 = arith.addf %466, %465 : vector<8x128xf32>
    %468 = arith.divf %466, %467 : vector<8x128xf32>
    %469 = vector.extract_strided_slice %450 {offsets = [0, 256], sizes = [8, 128], strides = [1, 1]} : vector<8x384xf32> to vector<8x128xf32>
    %470 = vector.extract_strided_slice %452 {offsets = [0, 256], sizes = [8, 128], strides = [1, 1]} : vector<8x384xf32> to vector<8x128xf32>
    %471 = arith.addf %470, %311 : vector<8x128xf32>
    %472 = arith.mulf %460, %471 : vector<8x128xf32>
    %473 = arith.addf %469, %472 : vector<8x128xf32>
    %474 = math.tanh %473 : vector<8x128xf32>
    %cst_155 = arith.constant 1.000000e+00 : f32
    %475 = vector.broadcast %cst_155 : f32 to vector<8x128xf32>
    %476 = arith.subf %475, %468 : vector<8x128xf32>
    %477 = arith.mulf %476, %474 : vector<8x128xf32>
    %478 = arith.mulf %468, %445 : vector<8x128xf32>
    %479 = arith.addf %477, %478 : vector<8x128xf32>
    %c4_156 = arith.constant 4 : index
    %c0_157 = arith.constant 0 : index
    %c0_158 = arith.constant 0 : index
    %480 = vector.load %arg10[%c4_156, %c0_157, %c0_158] : memref<8x8x128xf32, #tpu.memory_space<vmem>>, vector<1x8x128xf32>
    %481 = vector.shape_cast %480 : vector<1x8x128xf32> to vector<8x128xf32>
    %482 = vector.shape_cast %479 : vector<8x128xf32> to vector<1x8x128xf32>
    tpu.vector_store %arg10[%c4_156, %c0_157, %c0_158], %482 {strides = array<i32>} : memref<8x8x128xf32, #tpu.memory_space<vmem>>, vector<1x8x128xf32>,
    %c5_159 = arith.constant 5 : index
    %c0_160 = arith.constant 0 : index
    %c0_161 = arith.constant 0 : index
    %483 = vector.load %arg13[%c5_159, %c0_160, %c0_161] : memref<8x8x384xf32, #tpu.memory_space<vmem>>, vector<1x8x384xf32>
    %484 = vector.shape_cast %483 : vector<1x8x384xf32> to vector<8x384xf32>
    %485 = arith.truncf %479 : vector<8x128xf32> to vector<8x128xbf16>
    %cst_162 = arith.constant dense<0.000000e+00> : vector<8x384xf32>
    %486 = tpu.matmul %485, %308, %cst_162 {dimension_numbers = #tpu.dot_dimension_numbers<[1], [0], [0], [1], [0, 0, 1, 1], [], []>} : vector<8x128xbf16>, vector<128x384xbf16>, vector<8x384xf32> -> vector<8x384xf32>
    %487 = vector.extract_strided_slice %484 {offsets = [0, 0], sizes = [8, 128], strides = [1, 1]} : vector<8x384xf32> to vector<8x128xf32>
    %488 = vector.extract_strided_slice %486 {offsets = [0, 0], sizes = [8, 128], strides = [1, 1]} : vector<8x384xf32> to vector<8x128xf32>
    %489 = arith.addf %487, %488 : vector<8x128xf32>
    %490 = arith.negf %489 : vector<8x128xf32>
    %491 = math.exp %490 : vector<8x128xf32>
    %cst_163 = arith.constant 1.000000e+00 : f32
    %492 = vector.broadcast %cst_163 : f32 to vector<8x128xf32>
    %493 = arith.addf %492, %491 : vector<8x128xf32>
    %494 = arith.divf %492, %493 : vector<8x128xf32>
    %495 = vector.extract_strided_slice %484 {offsets = [0, 128], sizes = [8, 128], strides = [1, 1]} : vector<8x384xf32> to vector<8x128xf32>
    %496 = vector.extract_strided_slice %486 {offsets = [0, 128], sizes = [8, 128], strides = [1, 1]} : vector<8x384xf32> to vector<8x128xf32>
    %497 = arith.addf %495, %496 : vector<8x128xf32>
    %498 = arith.negf %497 : vector<8x128xf32>
    %499 = math.exp %498 : vector<8x128xf32>
    %cst_164 = arith.constant 1.000000e+00 : f32
    %500 = vector.broadcast %cst_164 : f32 to vector<8x128xf32>
    %501 = arith.addf %500, %499 : vector<8x128xf32>
    %502 = arith.divf %500, %501 : vector<8x128xf32>
    %503 = vector.extract_strided_slice %484 {offsets = [0, 256], sizes = [8, 128], strides = [1, 1]} : vector<8x384xf32> to vector<8x128xf32>
    %504 = vector.extract_strided_slice %486 {offsets = [0, 256], sizes = [8, 128], strides = [1, 1]} : vector<8x384xf32> to vector<8x128xf32>
    %505 = arith.addf %504, %311 : vector<8x128xf32>
    %506 = arith.mulf %494, %505 : vector<8x128xf32>
    %507 = arith.addf %503, %506 : vector<8x128xf32>
    %508 = math.tanh %507 : vector<8x128xf32>
    %cst_165 = arith.constant 1.000000e+00 : f32
    %509 = vector.broadcast %cst_165 : f32 to vector<8x128xf32>
    %510 = arith.subf %509, %502 : vector<8x128xf32>
    %511 = arith.mulf %510, %508 : vector<8x128xf32>
    %512 = arith.mulf %502, %479 : vector<8x128xf32>
    %513 = arith.addf %511, %512 : vector<8x128xf32>
    %c5_166 = arith.constant 5 : index
    %c0_167 = arith.constant 0 : index
    %c0_168 = arith.constant 0 : index
    %514 = vector.load %arg10[%c5_166, %c0_167, %c0_168] : memref<8x8x128xf32, #tpu.memory_space<vmem>>, vector<1x8x128xf32>
    %515 = vector.shape_cast %514 : vector<1x8x128xf32> to vector<8x128xf32>
    %516 = vector.shape_cast %513 : vector<8x128xf32> to vector<1x8x128xf32>
    tpu.vector_store %arg10[%c5_166, %c0_167, %c0_168], %516 {strides = array<i32>} : memref<8x8x128xf32, #tpu.memory_space<vmem>>, vector<1x8x128xf32>,
    %c6_169 = arith.constant 6 : index
    %c0_170 = arith.constant 0 : index
    %c0_171 = arith.constant 0 : index
    %517 = vector.load %arg13[%c6_169, %c0_170, %c0_171] : memref<8x8x384xf32, #tpu.memory_space<vmem>>, vector<1x8x384xf32>
    %518 = vector.shape_cast %517 : vector<1x8x384xf32> to vector<8x384xf32>
    %519 = arith.truncf %513 : vector<8x128xf32> to vector<8x128xbf16>
    %cst_172 = arith.constant dense<0.000000e+00> : vector<8x384xf32>
    %520 = tpu.matmul %519, %308, %cst_172 {dimension_numbers = #tpu.dot_dimension_numbers<[1], [0], [0], [1], [0, 0, 1, 1], [], []>} : vector<8x128xbf16>, vector<128x384xbf16>, vector<8x384xf32> -> vector<8x384xf32>
    %521 = vector.extract_strided_slice %518 {offsets = [0, 0], sizes = [8, 128], strides = [1, 1]} : vector<8x384xf32> to vector<8x128xf32>
    %522 = vector.extract_strided_slice %520 {offsets = [0, 0], sizes = [8, 128], strides = [1, 1]} : vector<8x384xf32> to vector<8x128xf32>
    %523 = arith.addf %521, %522 : vector<8x128xf32>
    %524 = arith.negf %523 : vector<8x128xf32>
    %525 = math.exp %524 : vector<8x128xf32>
    %cst_173 = arith.constant 1.000000e+00 : f32
    %526 = vector.broadcast %cst_173 : f32 to vector<8x128xf32>
    %527 = arith.addf %526, %525 : vector<8x128xf32>
    %528 = arith.divf %526, %527 : vector<8x128xf32>
    %529 = vector.extract_strided_slice %518 {offsets = [0, 128], sizes = [8, 128], strides = [1, 1]} : vector<8x384xf32> to vector<8x128xf32>
    %530 = vector.extract_strided_slice %520 {offsets = [0, 128], sizes = [8, 128], strides = [1, 1]} : vector<8x384xf32> to vector<8x128xf32>
    %531 = arith.addf %529, %530 : vector<8x128xf32>
    %532 = arith.negf %531 : vector<8x128xf32>
    %533 = math.exp %532 : vector<8x128xf32>
    %cst_174 = arith.constant 1.000000e+00 : f32
    %534 = vector.broadcast %cst_174 : f32 to vector<8x128xf32>
    %535 = arith.addf %534, %533 : vector<8x128xf32>
    %536 = arith.divf %534, %535 : vector<8x128xf32>
    %537 = vector.extract_strided_slice %518 {offsets = [0, 256], sizes = [8, 128], strides = [1, 1]} : vector<8x384xf32> to vector<8x128xf32>
    %538 = vector.extract_strided_slice %520 {offsets = [0, 256], sizes = [8, 128], strides = [1, 1]} : vector<8x384xf32> to vector<8x128xf32>
    %539 = arith.addf %538, %311 : vector<8x128xf32>
    %540 = arith.mulf %528, %539 : vector<8x128xf32>
    %541 = arith.addf %537, %540 : vector<8x128xf32>
    %542 = math.tanh %541 : vector<8x128xf32>
    %cst_175 = arith.constant 1.000000e+00 : f32
    %543 = vector.broadcast %cst_175 : f32 to vector<8x128xf32>
    %544 = arith.subf %543, %536 : vector<8x128xf32>
    %545 = arith.mulf %544, %542 : vector<8x128xf32>
    %546 = arith.mulf %536, %513 : vector<8x128xf32>
    %547 = arith.addf %545, %546 : vector<8x128xf32>
    %c6_176 = arith.constant 6 : index
    %c0_177 = arith.constant 0 : index
    %c0_178 = arith.constant 0 : index
    %548 = vector.load %arg10[%c6_176, %c0_177, %c0_178] : memref<8x8x128xf32, #tpu.memory_space<vmem>>, vector<1x8x128xf32>
    %549 = vector.shape_cast %548 : vector<1x8x128xf32> to vector<8x128xf32>
    %550 = vector.shape_cast %547 : vector<8x128xf32> to vector<1x8x128xf32>
    tpu.vector_store %arg10[%c6_176, %c0_177, %c0_178], %550 {strides = array<i32>} : memref<8x8x128xf32, #tpu.memory_space<vmem>>, vector<1x8x128xf32>,
    %c7_179 = arith.constant 7 : index
    %c0_180 = arith.constant 0 : index
    %c0_181 = arith.constant 0 : index
    %551 = vector.load %arg13[%c7_179, %c0_180, %c0_181] : memref<8x8x384xf32, #tpu.memory_space<vmem>>, vector<1x8x384xf32>
    %552 = vector.shape_cast %551 : vector<1x8x384xf32> to vector<8x384xf32>
    %553 = arith.truncf %547 : vector<8x128xf32> to vector<8x128xbf16>
    %cst_182 = arith.constant dense<0.000000e+00> : vector<8x384xf32>
    %554 = tpu.matmul %553, %308, %cst_182 {dimension_numbers = #tpu.dot_dimension_numbers<[1], [0], [0], [1], [0, 0, 1, 1], [], []>} : vector<8x128xbf16>, vector<128x384xbf16>, vector<8x384xf32> -> vector<8x384xf32>
    %555 = vector.extract_strided_slice %552 {offsets = [0, 0], sizes = [8, 128], strides = [1, 1]} : vector<8x384xf32> to vector<8x128xf32>
    %556 = vector.extract_strided_slice %554 {offsets = [0, 0], sizes = [8, 128], strides = [1, 1]} : vector<8x384xf32> to vector<8x128xf32>
    %557 = arith.addf %555, %556 : vector<8x128xf32>
    %558 = arith.negf %557 : vector<8x128xf32>
    %559 = math.exp %558 : vector<8x128xf32>
    %cst_183 = arith.constant 1.000000e+00 : f32
    %560 = vector.broadcast %cst_183 : f32 to vector<8x128xf32>
    %561 = arith.addf %560, %559 : vector<8x128xf32>
    %562 = arith.divf %560, %561 : vector<8x128xf32>
    %563 = vector.extract_strided_slice %552 {offsets = [0, 128], sizes = [8, 128], strides = [1, 1]} : vector<8x384xf32> to vector<8x128xf32>
    %564 = vector.extract_strided_slice %554 {offsets = [0, 128], sizes = [8, 128], strides = [1, 1]} : vector<8x384xf32> to vector<8x128xf32>
    %565 = arith.addf %563, %564 : vector<8x128xf32>
    %566 = arith.negf %565 : vector<8x128xf32>
    %567 = math.exp %566 : vector<8x128xf32>
    %cst_184 = arith.constant 1.000000e+00 : f32
    %568 = vector.broadcast %cst_184 : f32 to vector<8x128xf32>
    %569 = arith.addf %568, %567 : vector<8x128xf32>
    %570 = arith.divf %568, %569 : vector<8x128xf32>
    %571 = vector.extract_strided_slice %552 {offsets = [0, 256], sizes = [8, 128], strides = [1, 1]} : vector<8x384xf32> to vector<8x128xf32>
    %572 = vector.extract_strided_slice %554 {offsets = [0, 256], sizes = [8, 128], strides = [1, 1]} : vector<8x384xf32> to vector<8x128xf32>
    %573 = arith.addf %572, %311 : vector<8x128xf32>
    %574 = arith.mulf %562, %573 : vector<8x128xf32>
    %575 = arith.addf %571, %574 : vector<8x128xf32>
    %576 = math.tanh %575 : vector<8x128xf32>
    %cst_185 = arith.constant 1.000000e+00 : f32
    %577 = vector.broadcast %cst_185 : f32 to vector<8x128xf32>
    %578 = arith.subf %577, %570 : vector<8x128xf32>
    %579 = arith.mulf %578, %576 : vector<8x128xf32>
    %580 = arith.mulf %570, %547 : vector<8x128xf32>
    %581 = arith.addf %579, %580 : vector<8x128xf32>
    %c7_186 = arith.constant 7 : index
    %c0_187 = arith.constant 0 : index
    %c0_188 = arith.constant 0 : index
    %582 = vector.load %arg10[%c7_186, %c0_187, %c0_188] : memref<8x8x128xf32, #tpu.memory_space<vmem>>, vector<1x8x128xf32>
    %583 = vector.shape_cast %582 : vector<1x8x128xf32> to vector<8x128xf32>
    %584 = vector.shape_cast %581 : vector<8x128xf32> to vector<1x8x128xf32>
    tpu.vector_store %arg10[%c7_186, %c0_187, %c0_188], %584 {strides = array<i32>} : memref<8x8x128xf32, #tpu.memory_space<vmem>>, vector<1x8x128xf32>,
    %c1_189 = arith.constant 1 : index
    %c0_190 = arith.constant 0 : index
    %c0_191 = arith.constant 0 : index
    %585 = vector.load %arg11[%c1_189, %c0_190, %c0_191] : memref<2x8x128xf32, #tpu.memory_space<vmem>>, vector<1x8x128xf32>
    %586 = vector.shape_cast %585 : vector<1x8x128xf32> to vector<8x128xf32>
    %587 = vector.shape_cast %581 : vector<8x128xf32> to vector<1x8x128xf32>
    tpu.vector_store %arg11[%c1_189, %c0_190, %c0_191], %587 {strides = array<i32>} : memref<2x8x128xf32, #tpu.memory_space<vmem>>, vector<1x8x128xf32>,
    return
  }
}

</mosaic_0001>

<llo_original>
// kernel: tpu_custom_call.1
$region0: #{tpu_custom_call.1}
  #allocation0 [shape = 'u32[]', space=smem, size = 0x4, offset = 0x4, fixed_abs, tag = 'smem constant byte address 0x4 - core index']
  #allocation1 [shape = 'u32[144,128]{1,0:T(1,128)}', space=vmem, size = 0x12000, scoped, tag = 'internal scratch']
  #allocation2 [shape = 'bf16[8,8,128]{2,1,0:T(8,128)(2,1)}', space=vmem, size = 0x4000, scoped, tag = 'scratch operand']
  #allocation3 [shape = 'f32[8,8,384]{2,1,0:T(8,128)}', space=vmem, size = 0x18000, scoped, tag = 'scratch operand']
  %s0 = inlined_call_operand.hbm [shape: bf16[8,8,128], index: 0, kind: input, shape index: {}]
  %s1 = inlined_call_operand.hbm [shape: bf16[128,384], index: 1, kind: input, shape index: {}]
  %s2 = inlined_call_operand.hbm [shape: bf16[128,384], index: 2, kind: input, shape index: {}]
  %s3 = inlined_call_operand.hbm [shape: f32[1,384], index: 3, kind: input, shape index: {}]
  %s4 = inlined_call_operand.vmem [shape: f32[1,128], index: 4, kind: input, shape index: {}]
  %s5 = inlined_call_operand.hbm [shape: bf16[128,384], index: 5, kind: input, shape index: {}]
  %s6 = inlined_call_operand.hbm [shape: bf16[128,384], index: 6, kind: input, shape index: {}]
  %s7 = inlined_call_operand.hbm [shape: f32[1,384], index: 7, kind: input, shape index: {}]
  %s8 = inlined_call_operand.vmem [shape: f32[1,128], index: 8, kind: input, shape index: {}]
  %s9 = inlined_call_operand.vmem [shape: bf16[8,8,128], index: 9, kind: input, shape index: {}]
  %s10 = inlined_call_operand.hbm [shape: f32[8,8,128], index: 10, kind: output, shape index: {0}]
  %s11 = inlined_call_operand.hbm [shape: f32[2,8,128], index: 11, kind: output, shape index: {1}]
  %12 = xla_tuple %s10, %s11
  %s13 = sld [smem:[#allocation0]]
  $region86: #{tpu_custom_call.1} parent=0
    _
  %s15 = ssub.s32 1, %s13
  %s16 = scalar_select 0, %s15, %s13
  $region1: #{tpu_custom_call.1} parent=0
    #allocation4 [shape = 'u8[16384]{0}', space=vmem, size = 0x4000, scoped, tag = 'input window, operand 0, single buffered']
    #allocation5 [shape = 's32[1]{0}', space=sflag, size = 0x4, scoped, tag = 'scoped memory for tpu_custom_call.1']
    #allocation6 [shape = 's32[1]{0}', space=sflag, size = 0x4, scoped, tag = 'scoped memory for tpu_custom_call.1']
    #allocation7 [shape = 'u8[98304]{0}', space=vmem, size = 0x18000, scoped, tag = 'input window, operand 1, single buffered']
    #allocation8 [shape = 's32[1]{0}', space=sflag, size = 0x4, scoped, tag = 'scoped memory for tpu_custom_call.1']
    #allocation9 [shape = 'u8[98304]{0}', space=vmem, size = 0x18000, scoped, tag = 'input window, operand 2, single buffered']
    #allocation10 [shape = 'u8[1536]{0}', space=vmem, size = 0x800, scoped, tag = 'input window, operand 3, single buffered']
    #allocation11 [shape = 's32[1]{0}', space=sflag, size = 0x4, scoped, tag = 'scoped memory for tpu_custom_call.1']
    #allocation12 [shape = 'u8[98304]{0}', space=vmem, size = 0x18000, scoped, tag = 'input window, operand 5, single buffered']
    #allocation13 [shape = 'u8[98304]{0}', space=vmem, size = 0x18000, scoped, tag = 'input window, operand 6, single buffered']
    #allocation14 [shape = 's32[1]{0}', space=sflag, size = 0x4, scoped, tag = 'scoped memory for tpu_custom_call.1']
    #allocation15 [shape = 'u8[1536]{0}', space=vmem, size = 0x800, scoped, tag = 'input window, operand 7, single buffered']
    #allocation16 [shape = 'u8[32768]{0}', space=vmem, size = 0x8000, scoped, tag = 'output window, operand 0, single buffered']
    #allocation17 [shape = 'u8[8192]{0}', space=vmem, size = 0x2000, scoped, tag = 'output window, operand 1, single buffered']
    #allocation18 [shape = 's32[1]{0}', space=sflag, size = 0x4, scoped, tag = 'scoped memory for tpu_custom_call.1']
    %17 = vsyncpa [#allocation5], 0
    %18 = vsyncpa [#allocation8], 0
    %19 = vsyncpa [#allocation11], 0
    %20 = vsyncpa [#allocation14], 0
    %21 = vsyncpa [#allocation6], 0
    %22 = vsyncpa [#allocation18], 0
    // Predicated region
    $region2: #{tpu_custom_call.1} parent=1 // pred_check
      _
    $region3: #{tpu_custom_call.1} parent=1 // pred_check_branch
      %24 = sbr.rel (0) target = $region5
    $region4: #{tpu_custom_call.1} parent=1 // pred_region
      %s26 = ssub.s32 512, 512
      %27 = vsyncadd [#allocation5], %s26
      %s28 = sshll.u32 [#allocation4], 4
      %s29 = int_to_ptr.vmem [resolvable:$true] %s28
      %34 = dma.hbm_to_vmem [thread:$0]  %s0, 512, %s29, [#allocation5], 64, 64, 4
    $region5: #{tpu_custom_call.1} parent=1 // pred_fallthru
      _
    // Predicated region
    $region6: #{tpu_custom_call.1} parent=1 // pred_check
      _
    $region7: #{tpu_custom_call.1} parent=1 // pred_check_branch
      %36 = sbr.rel (0) target = $region9
    $region8: #{tpu_custom_call.1} parent=1 // pred_region
      %s38 = ssub.s32 3072, 3072
      %39 = vsyncadd [#allocation8], %s38
      %s40 = sshll.u32 [#allocation7], 4
      %s41 = int_to_ptr.vmem [resolvable:$true] %s40
      %46 = dma.hbm_to_vmem [thread:$0]  %s1, 3072, %s41, [#allocation8], 192, 192, 12
    $region9: #{tpu_custom_call.1} parent=1 // pred_fallthru
      _
    // Predicated region
    $region10: #{tpu_custom_call.1} parent=1 // pred_check
      _
    $region11: #{tpu_custom_call.1} parent=1 // pred_check_branch
      %48 = sbr.rel (0) target = $region13
    $region12: #{tpu_custom_call.1} parent=1 // pred_region
      %s50 = ssub.s32 3072, 3072
      %51 = vsyncadd [#allocation8], %s50
      %s52 = sshll.u32 [#allocation9], 4
      %s53 = int_to_ptr.vmem [resolvable:$true] %s52
      %58 = dma.hbm_to_vmem [thread:$0]  %s2, 3072, %s53, [#allocation8], 192, 192, 12
    $region13: #{tpu_custom_call.1} parent=1 // pred_fallthru
      _
    // Predicated region
    $region14: #{tpu_custom_call.1} parent=1 // pred_check
      _
    $region15: #{tpu_custom_call.1} parent=1 // pred_check_branch
      %60 = sbr.rel (0) target = $region17
    $region16: #{tpu_custom_call.1} parent=1 // pred_region
      %s62 = ssub.s32 48, 48
      %63 = vsyncadd [#allocation11], %s62
      %s65 = sshll.u32 [#allocation10], 4
      %s66 = int_to_ptr.vmem [resolvable:$true] %s65
      %68 = dma.hbm_to_vmem [thread:$0]  %s3, 48, %s66, [#allocation11]
    $region17: #{tpu_custom_call.1} parent=1 // pred_fallthru
      _
    // Predicated region
    $region18: #{tpu_custom_call.1} parent=1 // pred_check
      _
    $region19: #{tpu_custom_call.1} parent=1 // pred_check_branch
      %70 = sbr.rel (0) target = $region21
    $region20: #{tpu_custom_call.1} parent=1 // pred_region
      _
    $region21: #{tpu_custom_call.1} parent=1 // pred_fallthru
      _
    // Predicated region
    $region22: #{tpu_custom_call.1} parent=1 // pred_check
      _
    $region23: #{tpu_custom_call.1} parent=1 // pred_check_branch
      %72 = sbr.rel (0) target = $region25
    $region24: #{tpu_custom_call.1} parent=1 // pred_region
      %s74 = ssub.s32 3072, 3072
      %75 = vsyncadd [#allocation11], %s74
      %s76 = sshll.u32 [#allocation12], 4
      %s77 = int_to_ptr.vmem [resolvable:$true] %s76
      %82 = dma.hbm_to_vmem [thread:$0]  %s5, 3072, %s77, [#allocation11], 192, 192, 12
    $region25: #{tpu_custom_call.1} parent=1 // pred_fallthru
      _
    // Predicated region
    $region26: #{tpu_custom_call.1} parent=1 // pred_check
      _
    $region27: #{tpu_custom_call.1} parent=1 // pred_check_branch
      %84 = sbr.rel (0) target = $region29
    $region28: #{tpu_custom_call.1} parent=1 // pred_region
      %s86 = ssub.s32 3072, 3072
      %87 = vsyncadd [#allocation14], %s86
      %s88 = sshll.u32 [#allocation13], 4
      %s89 = int_to_ptr.vmem [resolvable:$true] %s88
      %94 = dma.hbm_to_vmem [thread:$0]  %s6, 3072, %s89, [#allocation14], 192, 192, 12
    $region29: #{tpu_custom_call.1} parent=1 // pred_fallthru
      _
    // Predicated region
    $region30: #{tpu_custom_call.1} parent=1 // pred_check
      _
    $region31: #{tpu_custom_call.1} parent=1 // pred_check_branch
      %96 = sbr.rel (0) target = $region33
    $region32: #{tpu_custom_call.1} parent=1 // pred_region
      %s98 = ssub.s32 48, 48
      %99 = vsyncadd [#allocation14], %s98
      %s101 = sshll.u32 [#allocation15], 4
      %s102 = int_to_ptr.vmem [resolvable:$true] %s101
      %104 = dma.hbm_to_vmem [thread:$0]  %s7, 48, %s102, [#allocation14]
    $region33: #{tpu_custom_call.1} parent=1 // pred_fallthru
      _
    // Predicated region
    $region34: #{tpu_custom_call.1} parent=1 // pred_check
      _
    $region35: #{tpu_custom_call.1} parent=1 // pred_check_branch
      %106 = sbr.rel (0) target = $region37
    $region36: #{tpu_custom_call.1} parent=1 // pred_region
      _
    $region37: #{tpu_custom_call.1} parent=1 // pred_fallthru
      _
    // Predicated region
    $region38: #{tpu_custom_call.1} parent=1 // pred_check
      _
    $region39: #{tpu_custom_call.1} parent=1 // pred_check_branch
      %108 = sbr.rel (0) target = $region41
    $region40: #{tpu_custom_call.1} parent=1 // pred_region
      _
    $region41: #{tpu_custom_call.1} parent=1 // pred_fallthru
      _
    // Predicated region
    $region42: #{tpu_custom_call.1} parent=1 // pred_check
      _
    $region43: #{tpu_custom_call.1} parent=1 // pred_check_branch
      %110 = sbr.rel (0) target = $region45
    $region44: #{tpu_custom_call.1} parent=1 // pred_region
      %111 = dma.done [#allocation5], 512
    $region45: #{tpu_custom_call.1} parent=1 // pred_fallthru
      _
    // Predicated region
    $region46: #{tpu_custom_call.1} parent=1 // pred_check
      _
    $region47: #{tpu_custom_call.1} parent=1 // pred_check_branch
      %113 = sbr.rel (0) target = $region49
    $region48: #{tpu_custom_call.1} parent=1 // pred_region
      %114 = dma.done [#allocation8], 3072
    $region49: #{tpu_custom_call.1} parent=1 // pred_fallthru
      _
    // Predicated region
    $region50: #{tpu_custom_call.1} parent=1 // pred_check
      _
    $region51: #{tpu_custom_call.1} parent=1 // pred_check_branch
      %116 = sbr.rel (0) target = $region53
    $region52: #{tpu_custom_call.1} parent=1 // pred_region
      %117 = dma.done [#allocation8], 3072
    $region53: #{tpu_custom_call.1} parent=1 // pred_fallthru
      _
    // Predicated region
    $region54: #{tpu_custom_call.1} parent=1 // pred_check
      _
    $region55: #{tpu_custom_call.1} parent=1 // pred_check_branch
      %119 = sbr.rel (0) target = $region57
    $region56: #{tpu_custom_call.1} parent=1 // pred_region
      %120 = dma.done [#allocation11], 48
    $region57: #{tpu_custom_call.1} parent=1 // pred_fallthru
      _
    // Predicated region
    $region58: #{tpu_custom_call.1} parent=1 // pred_check
      _
    $region59: #{tpu_custom_call.1} parent=1 // pred_check_branch
      %122 = sbr.rel (0) target = $region61
    $region60: #{tpu_custom_call.1} parent=1 // pred_region
      %123 = dma.done [#allocation11], 3072
    $region61: #{tpu_custom_call.1} parent=1 // pred_fallthru
      _
    // Predicated region
    $region62: #{tpu_custom_call.1} parent=1 // pred_check
      _
    $region63: #{tpu_custom_call.1} parent=1 // pred_check_branch
      %125 = sbr.rel (0) target = $region65
    $region64: #{tpu_custom_call.1} parent=1 // pred_region
      %126 = dma.done [#allocation14], 3072
    $region65: #{tpu_custom_call.1} parent=1 // pred_fallthru
      _
    // Predicated region
    $region66: #{tpu_custom_call.1} parent=1 // pred_check
      _
    $region67: #{tpu_custom_call.1} parent=1 // pred_check_branch
      %128 = sbr.rel (0) target = $region69
    $region68: #{tpu_custom_call.1} parent=1 // pred_region
      %129 = dma.done [#allocation14], 48
    $region69: #{tpu_custom_call.1} parent=1 // pred_fallthru
      _
    %v131 = vld [vmem:[#allocation4] sm:$0xf]
    %v132 = vld [vmem:[#allocation4 + $0x4] sm:$0xf]
    %v133 = vld [vmem:[#allocation4 + $0x8] sm:$0xf]
    %v134 = vld [vmem:[#allocation4 + $0xc] sm:$0xf]
    %v135 = vld [vmem:[#allocation4 + $0x10] sm:$0xf]
    %v136 = vld [vmem:[#allocation4 + $0x14] sm:$0xf]
    %v137 = vld [vmem:[#allocation4 + $0x18] sm:$0xf]
    %v138 = vld [vmem:[#allocation4 + $0x1c] sm:$0xf]
    %v139 = vld [vmem:[#allocation7] sm:$0xff]
    %v140 = vld [vmem:[#allocation7 + $0x8] sm:$0xf]
    %v141 = vld [vmem:[#allocation7 + $0xc] sm:$0xff]
    %v142 = vld [vmem:[#allocation7 + $0x14] sm:$0xf]
    %v143 = vld [vmem:[#allocation7 + $0x18] sm:$0xff]
    %v144 = vld [vmem:[#allocation7 + $0x20] sm:$0xf]
    %v145 = vld [vmem:[#allocation7 + $0x24] sm:$0xff]
    %v146 = vld [vmem:[#allocation7 + $0x2c] sm:$0xf]
    %v147 = vld [vmem:[#allocation7 + $0x30] sm:$0xff]
    %v148 = vld [vmem:[#allocation7 + $0x38] sm:$0xf]
    %v149 = vld [vmem:[#allocation7 + $0x3c] sm:$0xff]
    %v150 = vld [vmem:[#allocation7 + $0x44] sm:$0xf]
    %v151 = vld [vmem:[#allocation7 + $0x48] sm:$0xff]
    %v152 = vld [vmem:[#allocation7 + $0x50] sm:$0xf]
    %v153 = vld [vmem:[#allocation7 + $0x54] sm:$0xff]
    %v154 = vld [vmem:[#allocation7 + $0x5c] sm:$0xf]
    %v155 = vld [vmem:[#allocation7 + $0x60] sm:$0xff]
    %v156 = vld [vmem:[#allocation7 + $0x68] sm:$0xf]
    %v157 = vld [vmem:[#allocation7 + $0x6c] sm:$0xff]
    %v158 = vld [vmem:[#allocation7 + $0x74] sm:$0xf]
    %v159 = vld [vmem:[#allocation7 + $0x78] sm:$0xff]
    %v160 = vld [vmem:[#allocation7 + $0x80] sm:$0xf]
    %v161 = vld [vmem:[#allocation7 + $0x84] sm:$0xff]
    %v162 = vld [vmem:[#allocation7 + $0x8c] sm:$0xf]
    %v163 = vld [vmem:[#allocation7 + $0x90] sm:$0xff]
    %v164 = vld [vmem:[#allocation7 + $0x98] sm:$0xf]
    %v165 = vld [vmem:[#allocation7 + $0x9c] sm:$0xff]
    %v166 = vld [vmem:[#allocation7 + $0xa4] sm:$0xf]
    %v167 = vld [vmem:[#allocation7 + $0xa8] sm:$0xff]
    %v168 = vld [vmem:[#allocation7 + $0xb0] sm:$0xf]
    %v169 = vld [vmem:[#allocation7 + $0xb4] sm:$0xff]
    %v170 = vld [vmem:[#allocation7 + $0xbc] sm:$0xf]
    %v171 = vld [vmem:[#allocation10] sm:$0x7]
    %v173 = vlaneseq
    %v174 = vshrl.u32 %v173, 7
    %v175 = vsub.s32 0, %v174
    %v176 = vrot.slane %v171, %v175
    %v177 = vlaneseq
    %v178 = vshrl.u32 %v177, 7
    %v179 = vsub.s32 1, %v178
    %v180 = vrot.slane %v171, %v179
    %v181 = vlaneseq
    %v182 = vshrl.u32 %v181, 7
    %v183 = vsub.s32 2, %v182
    %v184 = vrot.slane %v171, %v183
    %v196 = vunpack.c.l.b16 %v131
    %v197 = vunpack.c.l.b16 %v132
    %v198 = vunpack.c.l.b16 %v133
    %v199 = vunpack.c.l.b16 %v134
    %v200 = vunpack.c.l.b16 %v135
    %v201 = vunpack.c.l.b16 %v136
    %v202 = vunpack.c.l.b16 %v137
    %v203 = vunpack.c.l.b16 %v138
    %v204 = vpack.c.b16 %v197, %v196
    %v205 = vpack.c.b16 %v199, %v198
    %v206 = vpack.c.b16 %v201, %v200
    %v207 = vpack.c.b16 %v203, %v202
    %v244 = vunpack.c.l.b16 %v139
    %v245 = vunpack.c.h.b16 %v139
    %v246 = vunpack.c.l.b16 %v140
    %v247 = vunpack.c.l.b16 %v141
    %v248 = vunpack.c.h.b16 %v141
    %v249 = vunpack.c.l.b16 %v142
    %v250 = vunpack.c.l.b16 %v143
    %v251 = vunpack.c.h.b16 %v143
    %v252 = vunpack.c.l.b16 %v144
    %v253 = vunpack.c.l.b16 %v145
    %v254 = vunpack.c.h.b16 %v145
    %v255 = vunpack.c.l.b16 %v146
    %v256 = vunpack.c.l.b16 %v147
    %v257 = vunpack.c.h.b16 %v147
    %v258 = vunpack.c.l.b16 %v148
    %v259 = vunpack.c.l.b16 %v149
    %v260 = vunpack.c.h.b16 %v149
    %v261 = vunpack.c.l.b16 %v150
    %v262 = vunpack.c.l.b16 %v151
    %v263 = vunpack.c.h.b16 %v151
    %v264 = vunpack.c.l.b16 %v152
    %v265 = vunpack.c.l.b16 %v153
    %v266 = vunpack.c.h.b16 %v153
    %v267 = vunpack.c.l.b16 %v154
    %v268 = vunpack.c.l.b16 %v155
    %v269 = vunpack.c.h.b16 %v155
    %v270 = vunpack.c.l.b16 %v156
    %v271 = vunpack.c.l.b16 %v157
    %v272 = vunpack.c.h.b16 %v157
    %v273 = vunpack.c.l.b16 %v158
    %v274 = vunpack.c.l.b16 %v159
    %v275 = vunpack.c.h.b16 %v159
    %v276 = vunpack.c.l.b16 %v160
    %v277 = vunpack.c.l.b16 %v161
    %v278 = vunpack.c.h.b16 %v161
    %v279 = vunpack.c.l.b16 %v162
    %v280 = vunpack.c.l.b16 %v163
    %v281 = vunpack.c.h.b16 %v163
    %v282 = vunpack.c.l.b16 %v164
    %v283 = vunpack.c.l.b16 %v165
    %v284 = vunpack.c.h.b16 %v165
    %v285 = vunpack.c.l.b16 %v166
    %v286 = vunpack.c.l.b16 %v167
    %v287 = vunpack.c.h.b16 %v167
    %v288 = vunpack.c.l.b16 %v168
    %v289 = vunpack.c.l.b16 %v169
    %v290 = vunpack.c.h.b16 %v169
    %v291 = vunpack.c.l.b16 %v170
    %v292 = vpack.c.b16 %v247, %v244
    %v293 = vpack.c.b16 %v248, %v245
    %v294 = vpack.c.b16 %v249, %v246
    %v295 = vpack.c.b16 %v253, %v250
    %v296 = vpack.c.b16 %v254, %v251
    %v297 = vpack.c.b16 %v255, %v252
    %v298 = vpack.c.b16 %v259, %v256
    %v299 = vpack.c.b16 %v260, %v257
    %v300 = vpack.c.b16 %v261, %v258
    %v301 = vpack.c.b16 %v265, %v262
    %v302 = vpack.c.b16 %v266, %v263
    %v303 = vpack.c.b16 %v267, %v264
    %v304 = vpack.c.b16 %v271, %v268
    %v305 = vpack.c.b16 %v272, %v269
    %v306 = vpack.c.b16 %v273, %v270
    %v307 = vpack.c.b16 %v277, %v274
    %v308 = vpack.c.b16 %v278, %v275
    %v309 = vpack.c.b16 %v279, %v276
    %v310 = vpack.c.b16 %v283, %v280
    %v311 = vpack.c.b16 %v284, %v281
    %v312 = vpack.c.b16 %v285, %v282
    %v313 = vpack.c.b16 %v289, %v286
    %v314 = vpack.c.b16 %v290, %v287
    %v315 = vpack.c.b16 %v291, %v288
    %340 = vmatprep.subr.bf16.mxu0 %v293
    %341 = vmatpush1.bf16.msra.mxu0 %v292
    %342 = vmatprep.subr.bf16.mxu0 %v296
    %343 = vmatpush1.bf16.msra.mxu0 %v295
    %344 = vmatprep.subr.bf16.mxu0 %v299
    %345 = vmatpush1.bf16.msra.mxu0 %v298
    %346 = vmatprep.subr.bf16.mxu0 %v302
    %347 = vmatpush1.bf16.msra.mxu0 %v301
    %348 = vmatprep.subr.bf16.mxu0 %v305
    %349 = vmatpush1.bf16.msra.mxu0 %v304
    %350 = vmatprep.subr.bf16.mxu0 %v308
    %351 = vmatpush1.bf16.msra.mxu0 %v307
    %352 = vmatprep.subr.bf16.mxu0 %v311
    %353 = vmatpush1.bf16.msra.mxu0 %v310
    %354 = vmatprep.subr.bf16.mxu0 %v314
    %355 = vmatpush1.bf16.msra.mxu0 %v313
    %356 = vmatprep.subr.bf16.mxu0 0
    %357 = vmatpush1.bf16.msra.mxu0 0
    %358 = vmatprep.subr.bf16.mxu0 0
    %359 = vmatpush1.bf16.msra.mxu0 0
    %360 = vmatprep.subr.bf16.mxu0 0
    %361 = vmatpush1.bf16.msra.mxu0 0
    %362 = vmatprep.subr.bf16.mxu0 0
    %363 = vmatpush1.bf16.msra.mxu0 0
    %364 = vmatprep.subr.bf16.mxu0 0
    %365 = vmatpush1.bf16.msra.mxu0 0
    %366 = vmatprep.subr.bf16.mxu0 0
    %367 = vmatpush1.bf16.msra.mxu0 0
    %368 = vmatprep.subr.bf16.mxu0 0
    %369 = vmatpush1.bf16.msra.mxu0 0
    %370 = vmatprep.subr.bf16.mxu0 0
    %371 = vmatpush1.bf16.msra.mxu0 0
    %372 = vmatprep.mubr.bf16.mxu0 0
    %373 = vmatmul.mubr.bf16.gmra.mrb[0].mxu0 %v204
    %v374 = vpop.f32.mrb[0].mxu0
    %v375 = vadd.f32 %v176, %v374
    %v376 = vpop.f32.mrb[0].mxu0
    %v377 = vadd.f32 %v180, %v376
    %v378 = vpop.f32.mrb[0].mxu0
    %v379 = vadd.f32 %v176, %v378
    %v380 = vpop.f32.mrb[0].mxu0
    %v381 = vadd.f32 %v180, %v380
    %382 = vmatprep.mubr.bf16.mxu0 0
    %383 = vmatmul.mubr.bf16.gmra.mrb[0].mxu0 %v205
    %v384 = vpop.f32.mrb[0].mxu0
    %v385 = vadd.f32 %v176, %v384
    %v386 = vpop.f32.mrb[0].mxu0
    %v387 = vadd.f32 %v180, %v386
    %v388 = vpop.f32.mrb[0].mxu0
    %v389 = vadd.f32 %v176, %v388
    %v390 = vpop.f32.mrb[0].mxu0
    %v391 = vadd.f32 %v180, %v390
    %392 = vmatprep.mubr.bf16.mxu0 0
    %393 = vmatmul.mubr.bf16.gmra.mrb[0].mxu0 %v206
    %v394 = vpop.f32.mrb[0].mxu0
    %v395 = vadd.f32 %v176, %v394
    %v396 = vpop.f32.mrb[0].mxu0
    %v397 = vadd.f32 %v180, %v396
    %v398 = vpop.f32.mrb[0].mxu0
    %v399 = vadd.f32 %v176, %v398
    %v400 = vpop.f32.mrb[0].mxu0
    %v401 = vadd.f32 %v180, %v400
    %402 = vmatprep.mubr.bf16.mxu0 0
    %403 = vmatmul.mubr.bf16.gmra.mrb[0].mxu0 %v207
    %v404 = vpop.f32.mrb[0].mxu0
    %v405 = vadd.f32 %v176, %v404
    %v406 = vpop.f32.mrb[0].mxu0
    %v407 = vadd.f32 %v180, %v406
    %v408 = vpop.f32.mrb[0].mxu0
    %v409 = vadd.f32 %v176, %v408
    %v410 = vpop.f32.mrb[0].mxu0
    %v411 = vadd.f32 %v180, %v410
    %412 = vdwg.mxu0
    %413 = vmatprep.subr.bf16.mxu0 0
    %414 = vmatpush1.bf16.msra.mxu0 %v294
    %415 = vmatprep.subr.bf16.mxu0 0
    %416 = vmatpush1.bf16.msra.mxu0 %v297
    %417 = vmatprep.subr.bf16.mxu0 0
    %418 = vmatpush1.bf16.msra.mxu0 %v300
    %419 = vmatprep.subr.bf16.mxu0 0
    %420 = vmatpush1.bf16.msra.mxu0 %v303
    %421 = vmatprep.subr.bf16.mxu0 0
    %422 = vmatpush1.bf16.msra.mxu0 %v306
    %423 = vmatprep.subr.bf16.mxu0 0
    %424 = vmatpush1.bf16.msra.mxu0 %v309
    %425 = vmatprep.subr.bf16.mxu0 0
    %426 = vmatpush1.bf16.msra.mxu0 %v312
    %427 = vmatprep.subr.bf16.mxu0 0
    %428 = vmatpush1.bf16.msra.mxu0 %v315
    %429 = vmatprep.subr.bf16.mxu0 0
    %430 = vmatpush1.bf16.msra.mxu0 0
    %431 = vmatprep.subr.bf16.mxu0 0
    %432 = vmatpush1.bf16.msra.mxu0 0
    %433 = vmatprep.subr.bf16.mxu0 0
    %434 = vmatpush1.bf16.msra.mxu0 0
    %435 = vmatprep.subr.bf16.mxu0 0
    %436 = vmatpush1.bf16.msra.mxu0 0
    %437 = vmatprep.subr.bf16.mxu0 0
    %438 = vmatpush1.bf16.msra.mxu0 0
    %439 = vmatprep.subr.bf16.mxu0 0
    %440 = vmatpush1.bf16.msra.mxu0 0
    %441 = vmatprep.subr.bf16.mxu0 0
    %442 = vmatpush1.bf16.msra.mxu0 0
    %443 = vmatprep.subr.bf16.mxu0 0
    %444 = vmatpush1.bf16.msra.mxu0 0
    %445 = vmatprep.mubr.bf16.mxu0 0
    %446 = vmatmul.mubr.bf16.gmra.mrb[0].mxu0 %v204
    %v447 = vpop.f32.mrb[0].mxu0
    %v448 = vadd.f32 %v184, %v447
    %v449 = vpop.f32.mrb[0].mxu0
    %v450 = vpop.f32.mrb[0].mxu0
    %v451 = vadd.f32 %v184, %v450
    %v452 = vpop.f32.mrb[0].mxu0
    %453 = vmatprep.mubr.bf16.mxu0 0
    %454 = vmatmul.mubr.bf16.gmra.mrb[0].mxu0 %v205
    %v455 = vpop.f32.mrb[0].mxu0
    %v456 = vadd.f32 %v184, %v455
    %v457 = vpop.f32.mrb[0].mxu0
    %v458 = vpop.f32.mrb[0].mxu0
    %v459 = vadd.f32 %v184, %v458
    %v460 = vpop.f32.mrb[0].mxu0
    %461 = vmatprep.mubr.bf16.mxu0 0
    %462 = vmatmul.mubr.bf16.gmra.mrb[0].mxu0 %v206
    %v463 = vpop.f32.mrb[0].mxu0
    %v464 = vadd.f32 %v184, %v463
    %v465 = vpop.f32.mrb[0].mxu0
    %v466 = vpop.f32.mrb[0].mxu0
    %v467 = vadd.f32 %v184, %v466
    %v468 = vpop.f32.mrb[0].mxu0
    %469 = vmatprep.mubr.bf16.mxu0 0
    %470 = vmatmul.mubr.bf16.gmra.mrb[0].mxu0 %v207
    %v471 = vpop.f32.mrb[0].mxu0
    %v472 = vadd.f32 %v184, %v471
    %v473 = vpop.f32.mrb[0].mxu0
    %v474 = vpop.f32.mrb[0].mxu0
    %v475 = vadd.f32 %v184, %v474
    %v476 = vpop.f32.mrb[0].mxu0
    %477 = vdwg.mxu0
    %478 = vst [vmem:[#allocation3] sm:$0xff] %v375
    %479 = vst [vmem:[#allocation3 + $0x8] sm:$0xff] %v377
    %480 = vst [vmem:[#allocation3 + $0x10] sm:$0xff] %v448
    %481 = vst [vmem:[#allocation3 + $0x18] sm:$0xff] %v379
    %482 = vst [vmem:[#allocation3 + $0x20] sm:$0xff] %v381
    %483 = vst [vmem:[#allocation3 + $0x28] sm:$0xff] %v451
    %484 = vst [vmem:[#allocation3 + $0x30] sm:$0xff] %v385
    %485 = vst [vmem:[#allocation3 + $0x38] sm:$0xff] %v387
    %486 = vst [vmem:[#allocation3 + $0x40] sm:$0xff] %v456
    %487 = vst [vmem:[#allocation3 + $0x48] sm:$0xff] %v389
    %488 = vst [vmem:[#allocation3 + $0x50] sm:$0xff] %v391
    %489 = vst [vmem:[#allocation3 + $0x58] sm:$0xff] %v459
    %490 = vst [vmem:[#allocation3 + $0x60] sm:$0xff] %v395
    %491 = vst [vmem:[#allocation3 + $0x68] sm:$0xff] %v397
    %492 = vst [vmem:[#allocation3 + $0x70] sm:$0xff] %v464
    %493 = vst [vmem:[#allocation3 + $0x78] sm:$0xff] %v399
    %494 = vst [vmem:[#allocation3 + $0x80] sm:$0xff] %v401
    %495 = vst [vmem:[#allocation3 + $0x88] sm:$0xff] %v467
    %496 = vst [vmem:[#allocation3 + $0x90] sm:$0xff] %v405
    %497 = vst [vmem:[#allocation3 + $0x98] sm:$0xff] %v407
    %498 = vst [vmem:[#allocation3 + $0xa0] sm:$0xff] %v472
    %499 = vst [vmem:[#allocation3 + $0xa8] sm:$0xff] %v409
    %500 = vst [vmem:[#allocation3 + $0xb0] sm:$0xff] %v411
    %501 = vst [vmem:[#allocation3 + $0xb8] sm:$0xff] %v475
    %v502 = vld [vmem:[#allocation9] sm:$0xff]
    %v503 = vld [vmem:[#allocation9 + $0x8] sm:$0xf]
    %v504 = vld [vmem:[#allocation9 + $0xc] sm:$0xff]
    %v505 = vld [vmem:[#allocation9 + $0x14] sm:$0xf]
    %v506 = vld [vmem:[#allocation9 + $0x18] sm:$0xff]
    %v507 = vld [vmem:[#allocation9 + $0x20] sm:$0xf]
    %v508 = vld [vmem:[#allocation9 + $0x24] sm:$0xff]
    %v509 = vld [vmem:[#allocation9 + $0x2c] sm:$0xf]
    %v510 = vld [vmem:[#allocation9 + $0x30] sm:$0xff]
    %v511 = vld [vmem:[#allocation9 + $0x38] sm:$0xf]
    %v512 = vld [vmem:[#allocation9 + $0x3c] sm:$0xff]
    %v513 = vld [vmem:[#allocation9 + $0x44] sm:$0xf]
    %v514 = vld [vmem:[#allocation9 + $0x48] sm:$0xff]
    %v515 = vld [vmem:[#allocation9 + $0x50] sm:$0xf]
    %v516 = vld [vmem:[#allocation9 + $0x54] sm:$0xff]
    %v517 = vld [vmem:[#allocation9 + $0x5c] sm:$0xf]
    %v518 = vld [vmem:[#allocation9 + $0x60] sm:$0xff]
    %v519 = vld [vmem:[#allocation9 + $0x68] sm:$0xf]
    %v520 = vld [vmem:[#allocation9 + $0x6c] sm:$0xff]
    %v521 = vld [vmem:[#allocation9 + $0x74] sm:$0xf]
    %v522 = vld [vmem:[#allocation9 + $0x78] sm:$0xff]
    %v523 = vld [vmem:[#allocation9 + $0x80] sm:$0xf]
    %v524 = vld [vmem:[#allocation9 + $0x84] sm:$0xff]
    %v525 = vld [vmem:[#allocation9 + $0x8c] sm:$0xf]
    %v526 = vld [vmem:[#allocation9 + $0x90] sm:$0xff]
    %v527 = vld [vmem:[#allocation9 + $0x98] sm:$0xf]
    %v528 = vld [vmem:[#allocation9 + $0x9c] sm:$0xff]
    %v529 = vld [vmem:[#allocation9 + $0xa4] sm:$0xf]
    %v530 = vld [vmem:[#allocation9 + $0xa8] sm:$0xff]
    %v531 = vld [vmem:[#allocation9 + $0xb0] sm:$0xf]
    %v532 = vld [vmem:[#allocation9 + $0xb4] sm:$0xff]
    %v533 = vld [vmem:[#allocation9 + $0xbc] sm:$0xf]
    %v534 = vld [vmem:[%s4] sm:$0x1]
    %v536 = vlaneseq
    %v537 = vshrl.u32 %v536, 7
    %v538 = vsub.s32 0, %v537
    %v539 = vrot.slane %v534, %v538
    %v541 = vld [vmem:[#allocation3] sm:$0xff]
    %v542 = vld [vmem:[#allocation3 + $0x8] sm:$0xff]
    %v543 = vld [vmem:[#allocation3 + $0x10] sm:$0xff]
    %v576 = vunpack.c.l.b16 %v502
    %v577 = vunpack.c.h.b16 %v502
    %v578 = vunpack.c.l.b16 %v503
    %v579 = vunpack.c.l.b16 %v504
    %v580 = vunpack.c.h.b16 %v504
    %v581 = vunpack.c.l.b16 %v505
    %v582 = vunpack.c.l.b16 %v506
    %v583 = vunpack.c.h.b16 %v506
    %v584 = vunpack.c.l.b16 %v507
    %v585 = vunpack.c.l.b16 %v508
    %v586 = vunpack.c.h.b16 %v508
    %v587 = vunpack.c.l.b16 %v509
    %v588 = vunpack.c.l.b16 %v510
    %v589 = vunpack.c.h.b16 %v510
    %v590 = vunpack.c.l.b16 %v511
    %v591 = vunpack.c.l.b16 %v512
    %v592 = vunpack.c.h.b16 %v512
    %v593 = vunpack.c.l.b16 %v513
    %v594 = vunpack.c.l.b16 %v514
    %v595 = vunpack.c.h.b16 %v514
    %v596 = vunpack.c.l.b16 %v515
    %v597 = vunpack.c.l.b16 %v516
    %v598 = vunpack.c.h.b16 %v516
    %v599 = vunpack.c.l.b16 %v517
    %v600 = vunpack.c.l.b16 %v518
    %v601 = vunpack.c.h.b16 %v518
    %v602 = vunpack.c.l.b16 %v519
    %v603 = vunpack.c.l.b16 %v520
    %v604 = vunpack.c.h.b16 %v520
    %v605 = vunpack.c.l.b16 %v521
    %v606 = vunpack.c.l.b16 %v522
    %v607 = vunpack.c.h.b16 %v522
    %v608 = vunpack.c.l.b16 %v523
    %v609 = vunpack.c.l.b16 %v524
    %v610 = vunpack.c.h.b16 %v524
    %v611 = vunpack.c.l.b16 %v525
    %v612 = vunpack.c.l.b16 %v526
    %v613 = vunpack.c.h.b16 %v526
    %v614 = vunpack.c.l.b16 %v527
    %v615 = vunpack.c.l.b16 %v528
    %v616 = vunpack.c.h.b16 %v528
    %v617 = vunpack.c.l.b16 %v529
    %v618 = vunpack.c.l.b16 %v530
    %v619 = vunpack.c.h.b16 %v530
    %v620 = vunpack.c.l.b16 %v531
    %v621 = vunpack.c.l.b16 %v532
    %v622 = vunpack.c.h.b16 %v532
    %v623 = vunpack.c.l.b16 %v533
    %v624 = vpack.c.b16 %v579, %v576
    %v625 = vpack.c.b16 %v580, %v577
    %v626 = vpack.c.b16 %v581, %v578
    %v627 = vpack.c.b16 %v585, %v582
    %v628 = vpack.c.b16 %v586, %v583
    %v629 = vpack.c.b16 %v587, %v584
    %v630 = vpack.c.b16 %v591, %v588
    %v631 = vpack.c.b16 %v592, %v589
    %v632 = vpack.c.b16 %v593, %v590
    %v633 = vpack.c.b16 %v597, %v594
    %v634 = vpack.c.b16 %v598, %v595
    %v635 = vpack.c.b16 %v599, %v596
    %v636 = vpack.c.b16 %v603, %v600
    %v637 = vpack.c.b16 %v604, %v601
    %v638 = vpack.c.b16 %v605, %v602
    %v639 = vpack.c.b16 %v609, %v606
    %v640 = vpack.c.b16 %v610, %v607
    %v641 = vpack.c.b16 %v611, %v608
    %v642 = vpack.c.b16 %v615, %v612
    %v643 = vpack.c.b16 %v616, %v613
    %v644 = vpack.c.b16 %v617, %v614
    %v645 = vpack.c.b16 %v621, %v618
    %v646 = vpack.c.b16 %v622, %v619
    %v647 = vpack.c.b16 %v623, %v620
    %672 = vmatprep.subr.bf16.mxu0 %v625
    %673 = vmatpush1.bf16.msra.mxu0 %v624
    %674 = vmatprep.subr.bf16.mxu0 %v628
    %675 = vmatpush1.bf16.msra.mxu0 %v627
    %676 = vmatprep.subr.bf16.mxu0 %v631
    %677 = vmatpush1.bf16.msra.mxu0 %v630
    %678 = vmatprep.subr.bf16.mxu0 %v634
    %679 = vmatpush1.bf16.msra.mxu0 %v633
    %680 = vmatprep.subr.bf16.mxu0 %v637
    %681 = vmatpush1.bf16.msra.mxu0 %v636
    %682 = vmatprep.subr.bf16.mxu0 %v640
    %683 = vmatpush1.bf16.msra.mxu0 %v639
    %684 = vmatprep.subr.bf16.mxu0 %v643
    %685 = vmatpush1.bf16.msra.mxu0 %v642
    %686 = vmatprep.subr.bf16.mxu0 %v646
    %687 = vmatpush1.bf16.msra.mxu0 %v645
    %688 = vmatprep.subr.bf16.mxu0 0
    %689 = vmatpush1.bf16.msra.mxu0 0
    %690 = vmatprep.subr.bf16.mxu0 0
    %691 = vmatpush1.bf16.msra.mxu0 0
    %692 = vmatprep.subr.bf16.mxu0 0
    %693 = vmatpush1.bf16.msra.mxu0 0
    %694 = vmatprep.subr.bf16.mxu0 0
    %695 = vmatpush1.bf16.msra.mxu0 0
    %696 = vmatprep.subr.bf16.mxu0 0
    %697 = vmatpush1.bf16.msra.mxu0 0
    %698 = vmatprep.subr.bf16.mxu0 0
    %699 = vmatpush1.bf16.msra.mxu0 0
    %700 = vmatprep.subr.bf16.mxu0 0
    %701 = vmatpush1.bf16.msra.mxu0 0
    %702 = vmatprep.subr.bf16.mxu0 0
    %703 = vmatpush1.bf16.msra.mxu0 0
    %704 = vmatprep.mubr.bf16.mxu0 0
    %705 = vmatmul.mubr.bf16.gmra.mrb[0].mxu0 0
    %v706 = vpop.f32.mrb[0].mxu0
    %v707 = vadd.f32 0.0, %v706
    %v708 = vpop.f32.mrb[0].mxu0
    %v709 = vadd.f32 0.0, %v708
    %v710 = vpop.f32.mrb[0].mxu0
    %v711 = vpop.f32.mrb[0].mxu0
    %712 = vdwg.mxu0
    %713 = vmatprep.subr.bf16.mxu0 0
    %714 = vmatpush1.bf16.msra.mxu0 %v626
    %715 = vmatprep.subr.bf16.mxu0 0
    %716 = vmatpush1.bf16.msra.mxu0 %v629
    %717 = vmatprep.subr.bf16.mxu0 0
    %718 = vmatpush1.bf16.msra.mxu0 %v632
    %719 = vmatprep.subr.bf16.mxu0 0
    %720 = vmatpush1.bf16.msra.mxu0 %v635
    %721 = vmatprep.subr.bf16.mxu0 0
    %722 = vmatpush1.bf16.msra.mxu0 %v638
    %723 = vmatprep.subr.bf16.mxu0 0
    %724 = vmatpush1.bf16.msra.mxu0 %v641
    %725 = vmatprep.subr.bf16.mxu0 0
    %726 = vmatpush1.bf16.msra.mxu0 %v644
    %727 = vmatprep.subr.bf16.mxu0 0
    %728 = vmatpush1.bf16.msra.mxu0 %v647
    %729 = vmatprep.subr.bf16.mxu0 0
    %730 = vmatpush1.bf16.msra.mxu0 0
    %731 = vmatprep.subr.bf16.mxu0 0
    %732 = vmatpush1.bf16.msra.mxu0 0
    %733 = vmatprep.subr.bf16.mxu0 0
    %734 = vmatpush1.bf16.msra.mxu0 0
    %735 = vmatprep.subr.bf16.mxu0 0
    %736 = vmatpush1.bf16.msra.mxu0 0
    %737 = vmatprep.subr.bf16.mxu0 0
    %738 = vmatpush1.bf16.msra.mxu0 0
    %739 = vmatprep.subr.bf16.mxu0 0
    %740 = vmatpush1.bf16.msra.mxu0 0
    %741 = vmatprep.subr.bf16.mxu0 0
    %742 = vmatpush1.bf16.msra.mxu0 0
    %743 = vmatprep.subr.bf16.mxu0 0
    %744 = vmatpush1.bf16.msra.mxu0 0
    %745 = vmatprep.mubr.bf16.mxu0 0
    %746 = vmatmul.mubr.bf16.gmra.mrb[0].mxu0 0
    %v747 = vpop.f32.mrb[0].mxu0
    %v748 = vadd.f32 0.0, %v747
    %v749 = vpop.f32.mrb[0].mxu0
    %v750 = vpop.f32.mrb[0].mxu0
    %v751 = vpop.f32.mrb[0].mxu0
    %752 = vdwg.mxu0
    %v753 = vadd.f32 %v541, %v707
    %v754 = vxor.u32 %v753, 2147483648
    %v755 = vmul.f32 %v754, 1.442695
    %v756 = vpow.pop %v755
    %v757 = vadd.f32 %v756, 1.0
    %v758 = vrcp.pop %v757
    %v759 = vmul.f32 1.0, %v758
    %v760 = vadd.f32 %v542, %v709
    %v761 = vxor.u32 %v760, 2147483648
    %v762 = vmul.f32 %v761, 1.442695
    %v763 = vpow.pop %v762
    %v764 = vadd.f32 %v763, 1.0
    %v765 = vrcp.pop %v764
    %v766 = vmul.f32 1.0, %v765
    %v767 = vadd.f32 %v748, %v539
    %v768 = vmul.f32 %v759, %v767
    %v769 = vadd.f32 %v543, %v768
    %v770 = vtanh.pop %v769
    %v771 = vsub.f32 1.0, %v766
    %v772 = vmul.f32 %v771, %v770
    %v773 = vmul.f32 %v766, 0.0
    %v774 = vadd.f32 %v772, %v773
    %v775 = vpack.c.bf16 %v774, %v774
    %776 = vst [vmem:[#allocation2] sm:$0xf] %v775
    %s777 = scalar_lea.vmem [#allocation3], 24
    %v778 = vld [vmem:[%s777] sm:$0xff]
    %v779 = vld [vmem:[%s777 + $0x8] sm:$0xff]
    %v780 = vld [vmem:[%s777 + $0x10] sm:$0xff]
    %781 = vmatprep.subr.bf16.mxu0 %v625
    %782 = vmatpush1.bf16.msra.mxu0 %v624
    %783 = vmatprep.subr.bf16.mxu0 %v628
    %784 = vmatpush1.bf16.msra.mxu0 %v627
    %785 = vmatprep.subr.bf16.mxu0 %v631
    %786 = vmatpush1.bf16.msra.mxu0 %v630
    %787 = vmatprep.subr.bf16.mxu0 %v634
    %788 = vmatpush1.bf16.msra.mxu0 %v633
    %789 = vmatprep.subr.bf16.mxu0 %v637
    %790 = vmatpush1.bf16.msra.mxu0 %v636
    %791 = vmatprep.subr.bf16.mxu0 %v640
    %792 = vmatpush1.bf16.msra.mxu0 %v639
    %793 = vmatprep.subr.bf16.mxu0 %v643
    %794 = vmatpush1.bf16.msra.mxu0 %v642
    %795 = vmatprep.subr.bf16.mxu0 %v646
    %796 = vmatpush1.bf16.msra.mxu0 %v645
    %797 = vmatprep.subr.bf16.mxu0 0
    %798 = vmatpush1.bf16.msra.mxu0 0
    %799 = vmatprep.subr.bf16.mxu0 0
    %800 = vmatpush1.bf16.msra.mxu0 0
    %801 = vmatprep.subr.bf16.mxu0 0
    %802 = vmatpush1.bf16.msra.mxu0 0
    %803 = vmatprep.subr.bf16.mxu0 0
    %804 = vmatpush1.bf16.msra.mxu0 0
    %805 = vmatprep.subr.bf16.mxu0 0
    %806 = vmatpush1.bf16.msra.mxu0 0
    %807 = vmatprep.subr.bf16.mxu0 0
    %808 = vmatpush1.bf16.msra.mxu0 0
    %809 = vmatprep.subr.bf16.mxu0 0
    %810 = vmatpush1.bf16.msra.mxu0 0
    %811 = vmatprep.subr.bf16.mxu0 0
    %812 = vmatpush1.bf16.msra.mxu0 0
    %813 = vmatprep.mubr.bf16.mxu0 0
    %814 = vmatmul.mubr.bf16.gmra.mrb[0].mxu0 %v775
    %v815 = vpop.f32.mrb[0].mxu0
    %v816 = vadd.f32 0.0, %v815
    %v817 = vpop.f32.mrb[0].mxu0
    %v818 = vadd.f32 0.0, %v817
    %v819 = vpop.f32.mrb[0].mxu0
    %v820 = vpop.f32.mrb[0].mxu0
    %821 = vdwg.mxu0
    %822 = vmatprep.subr.bf16.mxu0 0
    %823 = vmatpush1.bf16.msra.mxu0 %v626
    %824 = vmatprep.subr.bf16.mxu0 0
    %825 = vmatpush1.bf16.msra.mxu0 %v629
    %826 = vmatprep.subr.bf16.mxu0 0
    %827 = vmatpush1.bf16.msra.mxu0 %v632
    %828 = vmatprep.subr.bf16.mxu0 0
    %829 = vmatpush1.bf16.msra.mxu0 %v635
    %830 = vmatprep.subr.bf16.mxu0 0
    %831 = vmatpush1.bf16.msra.mxu0 %v638
    %832 = vmatprep.subr.bf16.mxu0 0
    %833 = vmatpush1.bf16.msra.mxu0 %v641
    %834 = vmatprep.subr.bf16.mxu0 0
    %835 = vmatpush1.bf16.msra.mxu0 %v644
    %836 = vmatprep.subr.bf16.mxu0 0
    %837 = vmatpush1.bf16.msra.mxu0 %v647
    %838 = vmatprep.subr.bf16.mxu0 0
    %839 = vmatpush1.bf16.msra.mxu0 0
    %840 = vmatprep.subr.bf16.mxu0 0
    %841 = vmatpush1.bf16.msra.mxu0 0
    %842 = vmatprep.subr.bf16.mxu0 0
    %843 = vmatpush1.bf16.msra.mxu0 0
    %844 = vmatprep.subr.bf16.mxu0 0
    %845 = vmatpush1.bf16.msra.mxu0 0
    %846 = vmatprep.subr.bf16.mxu0 0
    %847 = vmatpush1.bf16.msra.mxu0 0
    %848 = vmatprep.subr.bf16.mxu0 0
    %849 = vmatpush1.bf16.msra.mxu0 0
    %850 = vmatprep.subr.bf16.mxu0 0
    %851 = vmatpush1.bf16.msra.mxu0 0
    %852 = vmatprep.subr.bf16.mxu0 0
    %853 = vmatpush1.bf16.msra.mxu0 0
    %854 = vmatprep.mubr.bf16.mxu0 0
    %855 = vmatmul.mubr.bf16.gmra.mrb[0].mxu0 %v775
    %v856 = vpop.f32.mrb[0].mxu0
    %v857 = vadd.f32 0.0, %v856
    %v858 = vpop.f32.mrb[0].mxu0
    %v859 = vpop.f32.mrb[0].mxu0
    %v860 = vpop.f32.mrb[0].mxu0
    %861 = vdwg.mxu0
    %v862 = vadd.f32 %v778, %v816
    %v863 = vxor.u32 %v862, 2147483648
    %v864 = vmul.f32 %v863, 1.442695
    %v865 = vpow.pop %v864
    %v866 = vadd.f32 %v865, 1.0
    %v867 = vrcp.pop %v866
    %v868 = vmul.f32 1.0, %v867
    %v869 = vadd.f32 %v779, %v818
    %v870 = vxor.u32 %v869, 2147483648
    %v871 = vmul.f32 %v870, 1.442695
    %v872 = vpow.pop %v871
    %v873 = vadd.f32 %v872, 1.0
    %v874 = vrcp.pop %v873
    %v875 = vmul.f32 1.0, %v874
    %v876 = vadd.f32 %v857, %v539
    %v877 = vmul.f32 %v868, %v876
    %v878 = vadd.f32 %v780, %v877
    %v879 = vtanh.pop %v878
    %v880 = vsub.f32 1.0, %v875
    %v881 = vmul.f32 %v880, %v879
    %v882 = vmul.f32 %v875, %v774
    %v883 = vadd.f32 %v881, %v882
    %v884 = vpack.c.bf16 %v883, %v883
    %s885 = scalar_lea.vmem [#allocation2], 4
    %886 = vst [vmem:[%s885] sm:$0xf] %v884
    %s887 = scalar_lea.vmem [#allocation3], 48
    %v888 = vld [vmem:[%s887] sm:$0xff]
    %v889 = vld [vmem:[%s887 + $0x8] sm:$0xff]
    %v890 = vld [vmem:[%s887 + $0x10] sm:$0xff]
    %891 = vmatprep.subr.bf16.mxu0 %v625
    %892 = vmatpush1.bf16.msra.mxu0 %v624
    %893 = vmatprep.subr.bf16.mxu0 %v628
    %894 = vmatpush1.bf16.msra.mxu0 %v627
    %895 = vmatprep.subr.bf16.mxu0 %v631
    %896 = vmatpush1.bf16.msra.mxu0 %v630
    %897 = vmatprep.subr.bf16.mxu0 %v634
    %898 = vmatpush1.bf16.msra.mxu0 %v633
    %899 = vmatprep.subr.bf16.mxu0 %v637
    %900 = vmatpush1.bf16.msra.mxu0 %v636
    %901 = vmatprep.subr.bf16.mxu0 %v640
    %902 = vmatpush1.bf16.msra.mxu0 %v639
    %903 = vmatprep.subr.bf16.mxu0 %v643
    %904 = vmatpush1.bf16.msra.mxu0 %v642
    %905 = vmatprep.subr.bf16.mxu0 %v646
    %906 = vmatpush1.bf16.msra.mxu0 %v645
    %907 = vmatprep.subr.bf16.mxu0 0
    %908 = vmatpush1.bf16.msra.mxu0 0
    %909 = vmatprep.subr.bf16.mxu0 0
    %910 = vmatpush1.bf16.msra.mxu0 0
    %911 = vmatprep.subr.bf16.mxu0 0
    %912 = vmatpush1.bf16.msra.mxu0 0
    %913 = vmatprep.subr.bf16.mxu0 0
    %914 = vmatpush1.bf16.msra.mxu0 0
    %915 = vmatprep.subr.bf16.mxu0 0
    %916 = vmatpush1.bf16.msra.mxu0 0
    %917 = vmatprep.subr.bf16.mxu0 0
    %918 = vmatpush1.bf16.msra.mxu0 0
    %919 = vmatprep.subr.bf16.mxu0 0
    %920 = vmatpush1.bf16.msra.mxu0 0
    %921 = vmatprep.subr.bf16.mxu0 0
    %922 = vmatpush1.bf16.msra.mxu0 0
    %923 = vmatprep.mubr.bf16.mxu0 0
    %924 = vmatmul.mubr.bf16.gmra.mrb[0].mxu0 %v884
    %v925 = vpop.f32.mrb[0].mxu0
    %v926 = vadd.f32 0.0, %v925
    %v927 = vpop.f32.mrb[0].mxu0
    %v928 = vadd.f32 0.0, %v927
    %v929 = vpop.f32.mrb[0].mxu0
    %v930 = vpop.f32.mrb[0].mxu0
    %931 = vdwg.mxu0
    %932 = vmatprep.subr.bf16.mxu0 0
    %933 = vmatpush1.bf16.msra.mxu0 %v626
    %934 = vmatprep.subr.bf16.mxu0 0
    %935 = vmatpush1.bf16.msra.mxu0 %v629
    %936 = vmatprep.subr.bf16.mxu0 0
    %937 = vmatpush1.bf16.msra.mxu0 %v632
    %938 = vmatprep.subr.bf16.mxu0 0
    %939 = vmatpush1.bf16.msra.mxu0 %v635
    %940 = vmatprep.subr.bf16.mxu0 0
    %941 = vmatpush1.bf16.msra.mxu0 %v638
    %942 = vmatprep.subr.bf16.mxu0 0
    %943 = vmatpush1.bf16.msra.mxu0 %v641
    %944 = vmatprep.subr.bf16.mxu0 0
    %945 = vmatpush1.bf16.msra.mxu0 %v644
    %946 = vmatprep.subr.bf16.mxu0 0
    %947 = vmatpush1.bf16.msra.mxu0 %v647
    %948 = vmatprep.subr.bf16.mxu0 0
    %949 = vmatpush1.bf16.msra.mxu0 0
    %950 = vmatprep.subr.bf16.mxu0 0
    %951 = vmatpush1.bf16.msra.mxu0 0
    %952 = vmatprep.subr.bf16.mxu0 0
    %953 = vmatpush1.bf16.msra.mxu0 0
    %954 = vmatprep.subr.bf16.mxu0 0
    %955 = vmatpush1.bf16.msra.mxu0 0
    %956 = vmatprep.subr.bf16.mxu0 0
    %957 = vmatpush1.bf16.msra.mxu0 0
    %958 = vmatprep.subr.bf16.mxu0 0
    %959 = vmatpush1.bf16.msra.mxu0 0
    %960 = vmatprep.subr.bf16.mxu0 0
    %961 = vmatpush1.bf16.msra.mxu0 0
    %962 = vmatprep.subr.bf16.mxu0 0
    %963 = vmatpush1.bf16.msra.mxu0 0
    %964 = vmatprep.mubr.bf16.mxu0 0
    %965 = vmatmul.mubr.bf16.gmra.mrb[0].mxu0 %v884
    %v966 = vpop.f32.mrb[0].mxu0
    %v967 = vadd.f32 0.0, %v966
    %v968 = vpop.f32.mrb[0].mxu0
    %v969 = vpop.f32.mrb[0].mxu0
    %v970 = vpop.f32.mrb[0].mxu0
    %971 = vdwg.mxu0
    %v972 = vadd.f32 %v888, %v926
    %v973 = vxor.u32 %v972, 2147483648
    %v974 = vmul.f32 %v973, 1.442695
    %v975 = vpow.pop %v974
    %v976 = vadd.f32 %v975, 1.0
    %v977 = vrcp.pop %v976
    %v978 = vmul.f32 1.0, %v977
    %v979 = vadd.f32 %v889, %v928
    %v980 = vxor.u32 %v979, 2147483648
    %v981 = vmul.f32 %v980, 1.442695
    %v982 = vpow.pop %v981
    %v983 = vadd.f32 %v982, 1.0
    %v984 = vrcp.pop %v983
    %v985 = vmul.f32 1.0, %v984
    %v986 = vadd.f32 %v967, %v539
    %v987 = vmul.f32 %v978, %v986
    %v988 = vadd.f32 %v890, %v987
    %v989 = vtanh.pop %v988
    %v990 = vsub.f32 1.0, %v985
    %v991 = vmul.f32 %v990, %v989
    %v992 = vmul.f32 %v985, %v883
    %v993 = vadd.f32 %v991, %v992
    %v994 = vpack.c.bf16 %v993, %v993
    %s995 = scalar_lea.vmem [#allocation2], 8
    %996 = vst [vmem:[%s995] sm:$0xf] %v994
    %s997 = scalar_lea.vmem [#allocation3], 72
    %v998 = vld [vmem:[%s997] sm:$0xff]
    %v999 = vld [vmem:[%s997 + $0x8] sm:$0xff]
    %v1000 = vld [vmem:[%s997 + $0x10] sm:$0xff]
    %1001 = vmatprep.subr.bf16.mxu0 %v625
    %1002 = vmatpush1.bf16.msra.mxu0 %v624
    %1003 = vmatprep.subr.bf16.mxu0 %v628
    %1004 = vmatpush1.bf16.msra.mxu0 %v627
    %1005 = vmatprep.subr.bf16.mxu0 %v631
    %1006 = vmatpush1.bf16.msra.mxu0 %v630
    %1007 = vmatprep.subr.bf16.mxu0 %v634
    %1008 = vmatpush1.bf16.msra.mxu0 %v633
    %1009 = vmatprep.subr.bf16.mxu0 %v637
    %1010 = vmatpush1.bf16.msra.mxu0 %v636
    %1011 = vmatprep.subr.bf16.mxu0 %v640
    %1012 = vmatpush1.bf16.msra.mxu0 %v639
    %1013 = vmatprep.subr.bf16.mxu0 %v643
    %1014 = vmatpush1.bf16.msra.mxu0 %v642
    %1015 = vmatprep.subr.bf16.mxu0 %v646
    %1016 = vmatpush1.bf16.msra.mxu0 %v645
    %1017 = vmatprep.subr.bf16.mxu0 0
    %1018 = vmatpush1.bf16.msra.mxu0 0
    %1019 = vmatprep.subr.bf16.mxu0 0
    %1020 = vmatpush1.bf16.msra.mxu0 0
    %1021 = vmatprep.subr.bf16.mxu0 0
    %1022 = vmatpush1.bf16.msra.mxu0 0
    %1023 = vmatprep.subr.bf16.mxu0 0
    %1024 = vmatpush1.bf16.msra.mxu0 0
    %1025 = vmatprep.subr.bf16.mxu0 0
    %1026 = vmatpush1.bf16.msra.mxu0 0
    %1027 = vmatprep.subr.bf16.mxu0 0
    %1028 = vmatpush1.bf16.msra.mxu0 0
    %1029 = vmatprep.subr.bf16.mxu0 0
    %1030 = vmatpush1.bf16.msra.mxu0 0
    %1031 = vmatprep.subr.bf16.mxu0 0
    %1032 = vmatpush1.bf16.msra.mxu0 0
    %1033 = vmatprep.mubr.bf16.mxu0 0
    %1034 = vmatmul.mubr.bf16.gmra.mrb[0].mxu0 %v994
    %v1035 = vpop.f32.mrb[0].mxu0
    %v1036 = vadd.f32 0.0, %v1035
    %v1037 = vpop.f32.mrb[0].mxu0
    %v1038 = vadd.f32 0.0, %v1037
    %v1039 = vpop.f32.mrb[0].mxu0
    %v1040 = vpop.f32.mrb[0].mxu0
    %1041 = vdwg.mxu0
    %1042 = vmatprep.subr.bf16.mxu0 0
    %1043 = vmatpush1.bf16.msra.mxu0 %v626
    %1044 = vmatprep.subr.bf16.mxu0 0
    %1045 = vmatpush1.bf16.msra.mxu0 %v629
    %1046 = vmatprep.subr.bf16.mxu0 0
    %1047 = vmatpush1.bf16.msra.mxu0 %v632
    %1048 = vmatprep.subr.bf16.mxu0 0
    %1049 = vmatpush1.bf16.msra.mxu0 %v635
    %1050 = vmatprep.subr.bf16.mxu0 0
    %1051 = vmatpush1.bf16.msra.mxu0 %v638
    %1052 = vmatprep.subr.bf16.mxu0 0
    %1053 = vmatpush1.bf16.msra.mxu0 %v641
    %1054 = vmatprep.subr.bf16.mxu0 0
    %1055 = vmatpush1.bf16.msra.mxu0 %v644
    %1056 = vmatprep.subr.bf16.mxu0 0
    %1057 = vmatpush1.bf16.msra.mxu0 %v647
    %1058 = vmatprep.subr.bf16.mxu0 0
    %1059 = vmatpush1.bf16.msra.mxu0 0
    %1060 = vmatprep.subr.bf16.mxu0 0
    %1061 = vmatpush1.bf16.msra.mxu0 0
    %1062 = vmatprep.subr.bf16.mxu0 0
    %1063 = vmatpush1.bf16.msra.mxu0 0
    %1064 = vmatprep.subr.bf16.mxu0 0
    %1065 = vmatpush1.bf16.msra.mxu0 0
    %1066 = vmatprep.subr.bf16.mxu0 0
    %1067 = vmatpush1.bf16.msra.mxu0 0
    %1068 = vmatprep.subr.bf16.mxu0 0
    %1069 = vmatpush1.bf16.msra.mxu0 0
    %1070 = vmatprep.subr.bf16.mxu0 0
    %1071 = vmatpush1.bf16.msra.mxu0 0
    %1072 = vmatprep.subr.bf16.mxu0 0
    %1073 = vmatpush1.bf16.msra.mxu0 0
    %1074 = vmatprep.mubr.bf16.mxu0 0
    %1075 = vmatmul.mubr.bf16.gmra.mrb[0].mxu0 %v994
    %v1076 = vpop.f32.mrb[0].mxu0
    %v1077 = vadd.f32 0.0, %v1076
    %v1078 = vpop.f32.mrb[0].mxu0
    %v1079 = vpop.f32.mrb[0].mxu0
    %v1080 = vpop.f32.mrb[0].mxu0
    %1081 = vdwg.mxu0
    %v1082 = vadd.f32 %v998, %v1036
    %v1083 = vxor.u32 %v1082, 2147483648
    %v1084 = vmul.f32 %v1083, 1.442695
    %v1085 = vpow.pop %v1084
    %v1086 = vadd.f32 %v1085, 1.0
    %v1087 = vrcp.pop %v1086
    %v1088 = vmul.f32 1.0, %v1087
    %v1089 = vadd.f32 %v999, %v1038
    %v1090 = vxor.u32 %v1089, 2147483648
    %v1091 = vmul.f32 %v1090, 1.442695
    %v1092 = vpow.pop %v1091
    %v1093 = vadd.f32 %v1092, 1.0
    %v1094 = vrcp.pop %v1093
    %v1095 = vmul.f32 1.0, %v1094
    %v1096 = vadd.f32 %v1077, %v539
    %v1097 = vmul.f32 %v1088, %v1096
    %v1098 = vadd.f32 %v1000, %v1097
    %v1099 = vtanh.pop %v1098
    %v1100 = vsub.f32 1.0, %v1095
    %v1101 = vmul.f32 %v1100, %v1099
    %v1102 = vmul.f32 %v1095, %v993
    %v1103 = vadd.f32 %v1101, %v1102
    %v1104 = vpack.c.bf16 %v1103, %v1103
    %s1105 = scalar_lea.vmem [#allocation2], 12
    %1106 = vst [vmem:[%s1105] sm:$0xf] %v1104
    %s1107 = scalar_lea.vmem [#allocation3], 96
    %v1108 = vld [vmem:[%s1107] sm:$0xff]
    %v1109 = vld [vmem:[%s1107 + $0x8] sm:$0xff]
    %v1110 = vld [vmem:[%s1107 + $0x10] sm:$0xff]
    %1111 = vmatprep.subr.bf16.mxu0 %v625
    %1112 = vmatpush1.bf16.msra.mxu0 %v624
    %1113 = vmatprep.subr.bf16.mxu0 %v628
    %1114 = vmatpush1.bf16.msra.mxu0 %v627
    %1115 = vmatprep.subr.bf16.mxu0 %v631
    %1116 = vmatpush1.bf16.msra.mxu0 %v630
    %1117 = vmatprep.subr.bf16.mxu0 %v634
    %1118 = vmatpush1.bf16.msra.mxu0 %v633
    %1119 = vmatprep.subr.bf16.mxu0 %v637
    %1120 = vmatpush1.bf16.msra.mxu0 %v636
    %1121 = vmatprep.subr.bf16.mxu0 %v640
    %1122 = vmatpush1.bf16.msra.mxu0 %v639
    %1123 = vmatprep.subr.bf16.mxu0 %v643
    %1124 = vmatpush1.bf16.msra.mxu0 %v642
    %1125 = vmatprep.subr.bf16.mxu0 %v646
    %1126 = vmatpush1.bf16.msra.mxu0 %v645
    %1127 = vmatprep.subr.bf16.mxu0 0
    %1128 = vmatpush1.bf16.msra.mxu0 0
    %1129 = vmatprep.subr.bf16.mxu0 0
    %1130 = vmatpush1.bf16.msra.mxu0 0
    %1131 = vmatprep.subr.bf16.mxu0 0
    %1132 = vmatpush1.bf16.msra.mxu0 0
    %1133 = vmatprep.subr.bf16.mxu0 0
    %1134 = vmatpush1.bf16.msra.mxu0 0
    %1135 = vmatprep.subr.bf16.mxu0 0
    %1136 = vmatpush1.bf16.msra.mxu0 0
    %1137 = vmatprep.subr.bf16.mxu0 0
    %1138 = vmatpush1.bf16.msra.mxu0 0
    %1139 = vmatprep.subr.bf16.mxu0 0
    %1140 = vmatpush1.bf16.msra.mxu0 0
    %1141 = vmatprep.subr.bf16.mxu0 0
    %1142 = vmatpush1.bf16.msra.mxu0 0
    %1143 = vmatprep.mubr.bf16.mxu0 0
    %1144 = vmatmul.mubr.bf16.gmra.mrb[0].mxu0 %v1104
    %v1145 = vpop.f32.mrb[0].mxu0
    %v1146 = vadd.f32 0.0, %v1145
    %v1147 = vpop.f32.mrb[0].mxu0
    %v1148 = vadd.f32 0.0, %v1147
    %v1149 = vpop.f32.mrb[0].mxu0
    %v1150 = vpop.f32.mrb[0].mxu0
    %1151 = vdwg.mxu0
    %1152 = vmatprep.subr.bf16.mxu0 0
    %1153 = vmatpush1.bf16.msra.mxu0 %v626
    %1154 = vmatprep.subr.bf16.mxu0 0
    %1155 = vmatpush1.bf16.msra.mxu0 %v629
    %1156 = vmatprep.subr.bf16.mxu0 0
    %1157 = vmatpush1.bf16.msra.mxu0 %v632
    %1158 = vmatprep.subr.bf16.mxu0 0
    %1159 = vmatpush1.bf16.msra.mxu0 %v635
    %1160 = vmatprep.subr.bf16.mxu0 0
    %1161 = vmatpush1.bf16.msra.mxu0 %v638
    %1162 = vmatprep.subr.bf16.mxu0 0
    %1163 = vmatpush1.bf16.msra.mxu0 %v641
    %1164 = vmatprep.subr.bf16.mxu0 0
    %1165 = vmatpush1.bf16.msra.mxu0 %v644
    %1166 = vmatprep.subr.bf16.mxu0 0
    %1167 = vmatpush1.bf16.msra.mxu0 %v647
    %1168 = vmatprep.subr.bf16.mxu0 0
    %1169 = vmatpush1.bf16.msra.mxu0 0
    %1170 = vmatprep.subr.bf16.mxu0 0
    %1171 = vmatpush1.bf16.msra.mxu0 0
    %1172 = vmatprep.subr.bf16.mxu0 0
    %1173 = vmatpush1.bf16.msra.mxu0 0
    %1174 = vmatprep.subr.bf16.mxu0 0
    %1175 = vmatpush1.bf16.msra.mxu0 0
    %1176 = vmatprep.subr.bf16.mxu0 0
    %1177 = vmatpush1.bf16.msra.mxu0 0
    %1178 = vmatprep.subr.bf16.mxu0 0
    %1179 = vmatpush1.bf16.msra.mxu0 0
    %1180 = vmatprep.subr.bf16.mxu0 0
    %1181 = vmatpush1.bf16.msra.mxu0 0
    %1182 = vmatprep.subr.bf16.mxu0 0
    %1183 = vmatpush1.bf16.msra.mxu0 0
    %1184 = vmatprep.mubr.bf16.mxu0 0
    %1185 = vmatmul.mubr.bf16.gmra.mrb[0].mxu0 %v1104
    %v1186 = vpop.f32.mrb[0].mxu0
    %v1187 = vadd.f32 0.0, %v1186
    %v1188 = vpop.f32.mrb[0].mxu0
    %v1189 = vpop.f32.mrb[0].mxu0
    %v1190 = vpop.f32.mrb[0].mxu0
    %1191 = vdwg.mxu0
    %v1192 = vadd.f32 %v1108, %v1146
    %v1193 = vxor.u32 %v1192, 2147483648
    %v1194 = vmul.f32 %v1193, 1.442695
    %v1195 = vpow.pop %v1194
    %v1196 = vadd.f32 %v1195, 1.0
    %v1197 = vrcp.pop %v1196
    %v1198 = vmul.f32 1.0, %v1197
    %v1199 = vadd.f32 %v1109, %v1148
    %v1200 = vxor.u32 %v1199, 2147483648
    %v1201 = vmul.f32 %v1200, 1.442695
    %v1202 = vpow.pop %v1201
    %v1203 = vadd.f32 %v1202, 1.0
    %v1204 = vrcp.pop %v1203
    %v1205 = vmul.f32 1.0, %v1204
    %v1206 = vadd.f32 %v1187, %v539
    %v1207 = vmul.f32 %v1198, %v1206
    %v1208 = vadd.f32 %v1110, %v1207
    %v1209 = vtanh.pop %v1208
    %v1210 = vsub.f32 1.0, %v1205
    %v1211 = vmul.f32 %v1210, %v1209
    %v1212 = vmul.f32 %v1205, %v1103
    %v1213 = vadd.f32 %v1211, %v1212
    %v1214 = vpack.c.bf16 %v1213, %v1213
    %s1215 = scalar_lea.vmem [#allocation2], 16
    %1216 = vst [vmem:[%s1215] sm:$0xf] %v1214
    %s1217 = scalar_lea.vmem [#allocation3], 120
    %v1218 = vld [vmem:[%s1217] sm:$0xff]
    %v1219 = vld [vmem:[%s1217 + $0x8] sm:$0xff]
    %v1220 = vld [vmem:[%s1217 + $0x10] sm:$0xff]
    %1221 = vmatprep.subr.bf16.mxu0 %v625
    %1222 = vmatpush1.bf16.msra.mxu0 %v624
    %1223 = vmatprep.subr.bf16.mxu0 %v628
    %1224 = vmatpush1.bf16.msra.mxu0 %v627
    %1225 = vmatprep.subr.bf16.mxu0 %v631
    %1226 = vmatpush1.bf16.msra.mxu0 %v630
    %1227 = vmatprep.subr.bf16.mxu0 %v634
    %1228 = vmatpush1.bf16.msra.mxu0 %v633
    %1229 = vmatprep.subr.bf16.mxu0 %v637
    %1230 = vmatpush1.bf16.msra.mxu0 %v636
    %1231 = vmatprep.subr.bf16.mxu0 %v640
    %1232 = vmatpush1.bf16.msra.mxu0 %v639
    %1233 = vmatprep.subr.bf16.mxu0 %v643
    %1234 = vmatpush1.bf16.msra.mxu0 %v642
    %1235 = vmatprep.subr.bf16.mxu0 %v646
    %1236 = vmatpush1.bf16.msra.mxu0 %v645
    %1237 = vmatprep.subr.bf16.mxu0 0
    %1238 = vmatpush1.bf16.msra.mxu0 0
    %1239 = vmatprep.subr.bf16.mxu0 0
    %1240 = vmatpush1.bf16.msra.mxu0 0
    %1241 = vmatprep.subr.bf16.mxu0 0
    %1242 = vmatpush1.bf16.msra.mxu0 0
    %1243 = vmatprep.subr.bf16.mxu0 0
    %1244 = vmatpush1.bf16.msra.mxu0 0
    %1245 = vmatprep.subr.bf16.mxu0 0
    %1246 = vmatpush1.bf16.msra.mxu0 0
    %1247 = vmatprep.subr.bf16.mxu0 0
    %1248 = vmatpush1.bf16.msra.mxu0 0
    %1249 = vmatprep.subr.bf16.mxu0 0
    %1250 = vmatpush1.bf16.msra.mxu0 0
    %1251 = vmatprep.subr.bf16.mxu0 0
    %1252 = vmatpush1.bf16.msra.mxu0 0
    %1253 = vmatprep.mubr.bf16.mxu0 0
    %1254 = vmatmul.mubr.bf16.gmra.mrb[0].mxu0 %v1214
    %v1255 = vpop.f32.mrb[0].mxu0
    %v1256 = vadd.f32 0.0, %v1255
    %v1257 = vpop.f32.mrb[0].mxu0
    %v1258 = vadd.f32 0.0, %v1257
    %v1259 = vpop.f32.mrb[0].mxu0
    %v1260 = vpop.f32.mrb[0].mxu0
    %1261 = vdwg.mxu0
    %1262 = vmatprep.subr.bf16.mxu0 0
    %1263 = vmatpush1.bf16.msra.mxu0 %v626
    %1264 = vmatprep.subr.bf16.mxu0 0
    %1265 = vmatpush1.bf16.msra.mxu0 %v629
    %1266 = vmatprep.subr.bf16.mxu0 0
    %1267 = vmatpush1.bf16.msra.mxu0 %v632
    %1268 = vmatprep.subr.bf16.mxu0 0
    %1269 = vmatpush1.bf16.msra.mxu0 %v635
    %1270 = vmatprep.subr.bf16.mxu0 0
    %1271 = vmatpush1.bf16.msra.mxu0 %v638
    %1272 = vmatprep.subr.bf16.mxu0 0
    %1273 = vmatpush1.bf16.msra.mxu0 %v641
    %1274 = vmatprep.subr.bf16.mxu0 0
    %1275 = vmatpush1.bf16.msra.mxu0 %v644
    %1276 = vmatprep.subr.bf16.mxu0 0
    %1277 = vmatpush1.bf16.msra.mxu0 %v647
    %1278 = vmatprep.subr.bf16.mxu0 0
    %1279 = vmatpush1.bf16.msra.mxu0 0
    %1280 = vmatprep.subr.bf16.mxu0 0
    %1281 = vmatpush1.bf16.msra.mxu0 0
    %1282 = vmatprep.subr.bf16.mxu0 0
    %1283 = vmatpush1.bf16.msra.mxu0 0
    %1284 = vmatprep.subr.bf16.mxu0 0
    %1285 = vmatpush1.bf16.msra.mxu0 0
    %1286 = vmatprep.subr.bf16.mxu0 0
    %1287 = vmatpush1.bf16.msra.mxu0 0
    %1288 = vmatprep.subr.bf16.mxu0 0
    %1289 = vmatpush1.bf16.msra.mxu0 0
    %1290 = vmatprep.subr.bf16.mxu0 0
    %1291 = vmatpush1.bf16.msra.mxu0 0
    %1292 = vmatprep.subr.bf16.mxu0 0
    %1293 = vmatpush1.bf16.msra.mxu0 0
    %1294 = vmatprep.mubr.bf16.mxu0 0
    %1295 = vmatmul.mubr.bf16.gmra.mrb[0].mxu0 %v1214
    %v1296 = vpop.f32.mrb[0].mxu0
    %v1297 = vadd.f32 0.0, %v1296
    %v1298 = vpop.f32.mrb[0].mxu0
    %v1299 = vpop.f32.mrb[0].mxu0
    %v1300 = vpop.f32.mrb[0].mxu0
    %1301 = vdwg.mxu0
    %v1302 = vadd.f32 %v1218, %v1256
    %v1303 = vxor.u32 %v1302, 2147483648
    %v1304 = vmul.f32 %v1303, 1.442695
    %v1305 = vpow.pop %v1304
    %v1306 = vadd.f32 %v1305, 1.0
    %v1307 = vrcp.pop %v1306
    %v1308 = vmul.f32 1.0, %v1307
    %v1309 = vadd.f32 %v1219, %v1258
    %v1310 = vxor.u32 %v1309, 2147483648
    %v1311 = vmul.f32 %v1310, 1.442695
    %v1312 = vpow.pop %v1311
    %v1313 = vadd.f32 %v1312, 1.0
    %v1314 = vrcp.pop %v1313
    %v1315 = vmul.f32 1.0, %v1314
    %v1316 = vadd.f32 %v1297, %v539
    %v1317 = vmul.f32 %v1308, %v1316
    %v1318 = vadd.f32 %v1220, %v1317
    %v1319 = vtanh.pop %v1318
    %v1320 = vsub.f32 1.0, %v1315
    %v1321 = vmul.f32 %v1320, %v1319
    %v1322 = vmul.f32 %v1315, %v1213
    %v1323 = vadd.f32 %v1321, %v1322
    %v1324 = vpack.c.bf16 %v1323, %v1323
    %s1325 = scalar_lea.vmem [#allocation2], 20
    %1326 = vst [vmem:[%s1325] sm:$0xf] %v1324
    %s1327 = scalar_lea.vmem [#allocation3], 144
    %v1328 = vld [vmem:[%s1327] sm:$0xff]
    %v1329 = vld [vmem:[%s1327 + $0x8] sm:$0xff]
    %v1330 = vld [vmem:[%s1327 + $0x10] sm:$0xff]
    %1331 = vmatprep.subr.bf16.mxu0 %v625
    %1332 = vmatpush1.bf16.msra.mxu0 %v624
    %1333 = vmatprep.subr.bf16.mxu0 %v628
    %1334 = vmatpush1.bf16.msra.mxu0 %v627
    %1335 = vmatprep.subr.bf16.mxu0 %v631
    %1336 = vmatpush1.bf16.msra.mxu0 %v630
    %1337 = vmatprep.subr.bf16.mxu0 %v634
    %1338 = vmatpush1.bf16.msra.mxu0 %v633
    %1339 = vmatprep.subr.bf16.mxu0 %v637
    %1340 = vmatpush1.bf16.msra.mxu0 %v636
    %1341 = vmatprep.subr.bf16.mxu0 %v640
    %1342 = vmatpush1.bf16.msra.mxu0 %v639
    %1343 = vmatprep.subr.bf16.mxu0 %v643
    %1344 = vmatpush1.bf16.msra.mxu0 %v642
    %1345 = vmatprep.subr.bf16.mxu0 %v646
    %1346 = vmatpush1.bf16.msra.mxu0 %v645
    %1347 = vmatprep.subr.bf16.mxu0 0
    %1348 = vmatpush1.bf16.msra.mxu0 0
    %1349 = vmatprep.subr.bf16.mxu0 0
    %1350 = vmatpush1.bf16.msra.mxu0 0
    %1351 = vmatprep.subr.bf16.mxu0 0
    %1352 = vmatpush1.bf16.msra.mxu0 0
    %1353 = vmatprep.subr.bf16.mxu0 0
    %1354 = vmatpush1.bf16.msra.mxu0 0
    %1355 = vmatprep.subr.bf16.mxu0 0
    %1356 = vmatpush1.bf16.msra.mxu0 0
    %1357 = vmatprep.subr.bf16.mxu0 0
    %1358 = vmatpush1.bf16.msra.mxu0 0
    %1359 = vmatprep.subr.bf16.mxu0 0
    %1360 = vmatpush1.bf16.msra.mxu0 0
    %1361 = vmatprep.subr.bf16.mxu0 0
    %1362 = vmatpush1.bf16.msra.mxu0 0
    %1363 = vmatprep.mubr.bf16.mxu0 0
    %1364 = vmatmul.mubr.bf16.gmra.mrb[0].mxu0 %v1324
    %v1365 = vpop.f32.mrb[0].mxu0
    %v1366 = vadd.f32 0.0, %v1365
    %v1367 = vpop.f32.mrb[0].mxu0
    %v1368 = vadd.f32 0.0, %v1367
    %v1369 = vpop.f32.mrb[0].mxu0
    %v1370 = vpop.f32.mrb[0].mxu0
    %1371 = vdwg.mxu0
    %1372 = vmatprep.subr.bf16.mxu0 0
    %1373 = vmatpush1.bf16.msra.mxu0 %v626
    %1374 = vmatprep.subr.bf16.mxu0 0
    %1375 = vmatpush1.bf16.msra.mxu0 %v629
    %1376 = vmatprep.subr.bf16.mxu0 0
    %1377 = vmatpush1.bf16.msra.mxu0 %v632
    %1378 = vmatprep.subr.bf16.mxu0 0
    %1379 = vmatpush1.bf16.msra.mxu0 %v635
    %1380 = vmatprep.subr.bf16.mxu0 0
    %1381 = vmatpush1.bf16.msra.mxu0 %v638
    %1382 = vmatprep.subr.bf16.mxu0 0
    %1383 = vmatpush1.bf16.msra.mxu0 %v641
    %1384 = vmatprep.subr.bf16.mxu0 0
    %1385 = vmatpush1.bf16.msra.mxu0 %v644
    %1386 = vmatprep.subr.bf16.mxu0 0
    %1387 = vmatpush1.bf16.msra.mxu0 %v647
    %1388 = vmatprep.subr.bf16.mxu0 0
    %1389 = vmatpush1.bf16.msra.mxu0 0
    %1390 = vmatprep.subr.bf16.mxu0 0
    %1391 = vmatpush1.bf16.msra.mxu0 0
    %1392 = vmatprep.subr.bf16.mxu0 0
    %1393 = vmatpush1.bf16.msra.mxu0 0
    %1394 = vmatprep.subr.bf16.mxu0 0
    %1395 = vmatpush1.bf16.msra.mxu0 0
    %1396 = vmatprep.subr.bf16.mxu0 0
    %1397 = vmatpush1.bf16.msra.mxu0 0
    %1398 = vmatprep.subr.bf16.mxu0 0
    %1399 = vmatpush1.bf16.msra.mxu0 0
    %1400 = vmatprep.subr.bf16.mxu0 0
    %1401 = vmatpush1.bf16.msra.mxu0 0
    %1402 = vmatprep.subr.bf16.mxu0 0
    %1403 = vmatpush1.bf16.msra.mxu0 0
    %1404 = vmatprep.mubr.bf16.mxu0 0
    %1405 = vmatmul.mubr.bf16.gmra.mrb[0].mxu0 %v1324
    %v1406 = vpop.f32.mrb[0].mxu0
    %v1407 = vadd.f32 0.0, %v1406
    %v1408 = vpop.f32.mrb[0].mxu0
    %v1409 = vpop.f32.mrb[0].mxu0
    %v1410 = vpop.f32.mrb[0].mxu0
    %1411 = vdwg.mxu0
    %v1412 = vadd.f32 %v1328, %v1366
    %v1413 = vxor.u32 %v1412, 2147483648
    %v1414 = vmul.f32 %v1413, 1.442695
    %v1415 = vpow.pop %v1414
    %v1416 = vadd.f32 %v1415, 1.0
    %v1417 = vrcp.pop %v1416
    %v1418 = vmul.f32 1.0, %v1417
    %v1419 = vadd.f32 %v1329, %v1368
    %v1420 = vxor.u32 %v1419, 2147483648
    %v1421 = vmul.f32 %v1420, 1.442695
    %v1422 = vpow.pop %v1421
    %v1423 = vadd.f32 %v1422, 1.0
    %v1424 = vrcp.pop %v1423
    %v1425 = vmul.f32 1.0, %v1424
    %v1426 = vadd.f32 %v1407, %v539
    %v1427 = vmul.f32 %v1418, %v1426
    %v1428 = vadd.f32 %v1330, %v1427
    %v1429 = vtanh.pop %v1428
    %v1430 = vsub.f32 1.0, %v1425
    %v1431 = vmul.f32 %v1430, %v1429
    %v1432 = vmul.f32 %v1425, %v1323
    %v1433 = vadd.f32 %v1431, %v1432
    %v1434 = vpack.c.bf16 %v1433, %v1433
    %s1435 = scalar_lea.vmem [#allocation2], 24
    %1436 = vst [vmem:[%s1435] sm:$0xf] %v1434
    %s1437 = scalar_lea.vmem [#allocation3], 168
    %v1438 = vld [vmem:[%s1437] sm:$0xff]
    %v1439 = vld [vmem:[%s1437 + $0x8] sm:$0xff]
    %v1440 = vld [vmem:[%s1437 + $0x10] sm:$0xff]
    %1441 = vmatprep.subr.bf16.mxu0 %v625
    %1442 = vmatpush1.bf16.msra.mxu0 %v624
    %1443 = vmatprep.subr.bf16.mxu0 %v628
    %1444 = vmatpush1.bf16.msra.mxu0 %v627
    %1445 = vmatprep.subr.bf16.mxu0 %v631
    %1446 = vmatpush1.bf16.msra.mxu0 %v630
    %1447 = vmatprep.subr.bf16.mxu0 %v634
    %1448 = vmatpush1.bf16.msra.mxu0 %v633
    %1449 = vmatprep.subr.bf16.mxu0 %v637
    %1450 = vmatpush1.bf16.msra.mxu0 %v636
    %1451 = vmatprep.subr.bf16.mxu0 %v640
    %1452 = vmatpush1.bf16.msra.mxu0 %v639
    %1453 = vmatprep.subr.bf16.mxu0 %v643
    %1454 = vmatpush1.bf16.msra.mxu0 %v642
    %1455 = vmatprep.subr.bf16.mxu0 %v646
    %1456 = vmatpush1.bf16.msra.mxu0 %v645
    %1457 = vmatprep.subr.bf16.mxu0 0
    %1458 = vmatpush1.bf16.msra.mxu0 0
    %1459 = vmatprep.subr.bf16.mxu0 0
    %1460 = vmatpush1.bf16.msra.mxu0 0
    %1461 = vmatprep.subr.bf16.mxu0 0
    %1462 = vmatpush1.bf16.msra.mxu0 0
    %1463 = vmatprep.subr.bf16.mxu0 0
    %1464 = vmatpush1.bf16.msra.mxu0 0
    %1465 = vmatprep.subr.bf16.mxu0 0
    %1466 = vmatpush1.bf16.msra.mxu0 0
    %1467 = vmatprep.subr.bf16.mxu0 0
    %1468 = vmatpush1.bf16.msra.mxu0 0
    %1469 = vmatprep.subr.bf16.mxu0 0
    %1470 = vmatpush1.bf16.msra.mxu0 0
    %1471 = vmatprep.subr.bf16.mxu0 0
    %1472 = vmatpush1.bf16.msra.mxu0 0
    %1473 = vmatprep.mubr.bf16.mxu0 0
    %1474 = vmatmul.mubr.bf16.gmra.mrb[0].mxu0 %v1434
    %v1475 = vpop.f32.mrb[0].mxu0
    %v1476 = vadd.f32 0.0, %v1475
    %v1477 = vpop.f32.mrb[0].mxu0
    %v1478 = vadd.f32 0.0, %v1477
    %v1479 = vpop.f32.mrb[0].mxu0
    %v1480 = vpop.f32.mrb[0].mxu0
    %1481 = vdwg.mxu0
    %1482 = vmatprep.subr.bf16.mxu0 0
    %1483 = vmatpush1.bf16.msra.mxu0 %v626
    %1484 = vmatprep.subr.bf16.mxu0 0
    %1485 = vmatpush1.bf16.msra.mxu0 %v629
    %1486 = vmatprep.subr.bf16.mxu0 0
    %1487 = vmatpush1.bf16.msra.mxu0 %v632
    %1488 = vmatprep.subr.bf16.mxu0 0
    %1489 = vmatpush1.bf16.msra.mxu0 %v635
    %1490 = vmatprep.subr.bf16.mxu0 0
    %1491 = vmatpush1.bf16.msra.mxu0 %v638
    %1492 = vmatprep.subr.bf16.mxu0 0
    %1493 = vmatpush1.bf16.msra.mxu0 %v641
    %1494 = vmatprep.subr.bf16.mxu0 0
    %1495 = vmatpush1.bf16.msra.mxu0 %v644
    %1496 = vmatprep.subr.bf16.mxu0 0
    %1497 = vmatpush1.bf16.msra.mxu0 %v647
    %1498 = vmatprep.subr.bf16.mxu0 0
    %1499 = vmatpush1.bf16.msra.mxu0 0
    %1500 = vmatprep.subr.bf16.mxu0 0
    %1501 = vmatpush1.bf16.msra.mxu0 0
    %1502 = vmatprep.subr.bf16.mxu0 0
    %1503 = vmatpush1.bf16.msra.mxu0 0
    %1504 = vmatprep.subr.bf16.mxu0 0
    %1505 = vmatpush1.bf16.msra.mxu0 0
    %1506 = vmatprep.subr.bf16.mxu0 0
    %1507 = vmatpush1.bf16.msra.mxu0 0
    %1508 = vmatprep.subr.bf16.mxu0 0
    %1509 = vmatpush1.bf16.msra.mxu0 0
    %1510 = vmatprep.subr.bf16.mxu0 0
    %1511 = vmatpush1.bf16.msra.mxu0 0
    %1512 = vmatprep.subr.bf16.mxu0 0
    %1513 = vmatpush1.bf16.msra.mxu0 0
    %1514 = vmatprep.mubr.bf16.mxu0 0
    %1515 = vmatmul.mubr.bf16.gmra.mrb[0].mxu0 %v1434
    %v1516 = vpop.f32.mrb[0].mxu0
    %v1517 = vadd.f32 0.0, %v1516
    %v1518 = vpop.f32.mrb[0].mxu0
    %v1519 = vpop.f32.mrb[0].mxu0
    %v1520 = vpop.f32.mrb[0].mxu0
    %1521 = vdwg.mxu0
    %v1522 = vadd.f32 %v1438, %v1476
    %v1523 = vxor.u32 %v1522, 2147483648
    %v1524 = vmul.f32 %v1523, 1.442695
    %v1525 = vpow.pop %v1524
    %v1526 = vadd.f32 %v1525, 1.0
    %v1527 = vrcp.pop %v1526
    %v1528 = vmul.f32 1.0, %v1527
    %v1529 = vadd.f32 %v1439, %v1478
    %v1530 = vxor.u32 %v1529, 2147483648
    %v1531 = vmul.f32 %v1530, 1.442695
    %v1532 = vpow.pop %v1531
    %v1533 = vadd.f32 %v1532, 1.0
    %v1534 = vrcp.pop %v1533
    %v1535 = vmul.f32 1.0, %v1534
    %v1536 = vadd.f32 %v1517, %v539
    %v1537 = vmul.f32 %v1528, %v1536
    %v1538 = vadd.f32 %v1440, %v1537
    %v1539 = vtanh.pop %v1538
    %v1540 = vsub.f32 1.0, %v1535
    %v1541 = vmul.f32 %v1540, %v1539
    %v1542 = vmul.f32 %v1535, %v1433
    %v1543 = vadd.f32 %v1541, %v1542
    %v1544 = vpack.c.bf16 %v1543, %v1543
    %s1545 = scalar_lea.vmem [#allocation2], 28
    %1546 = vst [vmem:[%s1545] sm:$0xf] %v1544
    %1547 = vst [vmem:[#allocation17] sm:$0xff] %v1543
    %v1548 = vld [vmem:[#allocation2] sm:$0xf]
    %v1549 = vld [vmem:[#allocation2 + $0x4] sm:$0xf]
    %v1550 = vld [vmem:[#allocation2 + $0x8] sm:$0xf]
    %v1551 = vld [vmem:[#allocation2 + $0xc] sm:$0xf]
    %v1552 = vld [vmem:[#allocation2 + $0x10] sm:$0xf]
    %v1553 = vld [vmem:[#allocation2 + $0x14] sm:$0xf]
    %v1554 = vld [vmem:[#allocation2 + $0x18] sm:$0xf]
    %v1555 = vld [vmem:[#allocation2 + $0x1c] sm:$0xf]
    %v1556 = vld [vmem:[%s9] sm:$0xf]
    %v1557 = vld [vmem:[%s9 + $0x4] sm:$0xf]
    %v1558 = vld [vmem:[%s9 + $0x8] sm:$0xf]
    %v1559 = vld [vmem:[%s9 + $0xc] sm:$0xf]
    %v1560 = vld [vmem:[%s9 + $0x10] sm:$0xf]
    %v1561 = vld [vmem:[%s9 + $0x14] sm:$0xf]
    %v1562 = vld [vmem:[%s9 + $0x18] sm:$0xf]
    %v1563 = vld [vmem:[%s9 + $0x1c] sm:$0xf]
    %v1564 = vmul.bf16 %v1548, %v1556
    %v1565 = vmul.bf16 %v1549, %v1557
    %v1566 = vmul.bf16 %v1550, %v1558
    %v1567 = vmul.bf16 %v1551, %v1559
    %v1568 = vmul.bf16 %v1552, %v1560
    %v1569 = vmul.bf16 %v1553, %v1561
    %v1570 = vmul.bf16 %v1554, %v1562
    %v1571 = vmul.bf16 %v1555, %v1563
    %v1572 = vld [vmem:[#allocation12] sm:$0xff]
    %v1573 = vld [vmem:[#allocation12 + $0x8] sm:$0xf]
    %v1574 = vld [vmem:[#allocation12 + $0xc] sm:$0xff]
    %v1575 = vld [vmem:[#allocation12 + $0x14] sm:$0xf]
    %v1576 = vld [vmem:[#allocation12 + $0x18] sm:$0xff]
    %v1577 = vld [vmem:[#allocation12 + $0x20] sm:$0xf]
    %v1578 = vld [vmem:[#allocation12 + $0x24] sm:$0xff]
    %v1579 = vld [vmem:[#allocation12 + $0x2c] sm:$0xf]
    %v1580 = vld [vmem:[#allocation12 + $0x30] sm:$0xff]
    %v1581 = vld [vmem:[#allocation12 + $0x38] sm:$0xf]
    %v1582 = vld [vmem:[#allocation12 + $0x3c] sm:$0xff]
    %v1583 = vld [vmem:[#allocation12 + $0x44] sm:$0xf]
    %v1584 = vld [vmem:[#allocation12 + $0x48] sm:$0xff]
    %v1585 = vld [vmem:[#allocation12 + $0x50] sm:$0xf]
    %v1586 = vld [vmem:[#allocation12 + $0x54] sm:$0xff]
    %v1587 = vld [vmem:[#allocation12 + $0x5c] sm:$0xf]
    %v1588 = vld [vmem:[#allocation12 + $0x60] sm:$0xff]
    %v1589 = vld [vmem:[#allocation12 + $0x68] sm:$0xf]
    %v1590 = vld [vmem:[#allocation12 + $0x6c] sm:$0xff]
    %v1591 = vld [vmem:[#allocation12 + $0x74] sm:$0xf]
    %v1592 = vld [vmem:[#allocation12 + $0x78] sm:$0xff]
    %v1593 = vld [vmem:[#allocation12 + $0x80] sm:$0xf]
    %v1594 = vld [vmem:[#allocation12 + $0x84] sm:$0xff]
    %v1595 = vld [vmem:[#allocation12 + $0x8c] sm:$0xf]
    %v1596 = vld [vmem:[#allocation12 + $0x90] sm:$0xff]
    %v1597 = vld [vmem:[#allocation12 + $0x98] sm:$0xf]
    %v1598 = vld [vmem:[#allocation12 + $0x9c] sm:$0xff]
    %v1599 = vld [vmem:[#allocation12 + $0xa4] sm:$0xf]
    %v1600 = vld [vmem:[#allocation12 + $0xa8] sm:$0xff]
    %v1601 = vld [vmem:[#allocation12 + $0xb0] sm:$0xf]
    %v1602 = vld [vmem:[#allocation12 + $0xb4] sm:$0xff]
    %v1603 = vld [vmem:[#allocation12 + $0xbc] sm:$0xf]
    %v1604 = vld [vmem:[#allocation15] sm:$0x7]
    %v1606 = vlaneseq
    %v1607 = vshrl.u32 %v1606, 7
    %v1608 = vsub.s32 0, %v1607
    %v1609 = vrot.slane %v1604, %v1608
    %v1610 = vlaneseq
    %v1611 = vshrl.u32 %v1610, 7
    %v1612 = vsub.s32 1, %v1611
    %v1613 = vrot.slane %v1604, %v1612
    %v1614 = vlaneseq
    %v1615 = vshrl.u32 %v1614, 7
    %v1616 = vsub.s32 2, %v1615
    %v1617 = vrot.slane %v1604, %v1616
    %v1629 = vunpack.c.l.b16 %v1564
    %v1630 = vunpack.c.l.b16 %v1565
    %v1631 = vunpack.c.l.b16 %v1566
    %v1632 = vunpack.c.l.b16 %v1567
    %v1633 = vunpack.c.l.b16 %v1568
    %v1634 = vunpack.c.l.b16 %v1569
    %v1635 = vunpack.c.l.b16 %v1570
    %v1636 = vunpack.c.l.b16 %v1571
    %v1637 = vpack.c.b16 %v1630, %v1629
    %v1638 = vpack.c.b16 %v1632, %v1631
    %v1639 = vpack.c.b16 %v1634, %v1633
    %v1640 = vpack.c.b16 %v1636, %v1635
    %v1677 = vunpack.c.l.b16 %v1572
    %v1678 = vunpack.c.h.b16 %v1572
    %v1679 = vunpack.c.l.b16 %v1573
    %v1680 = vunpack.c.l.b16 %v1574
    %v1681 = vunpack.c.h.b16 %v1574
    %v1682 = vunpack.c.l.b16 %v1575
    %v1683 = vunpack.c.l.b16 %v1576
    %v1684 = vunpack.c.h.b16 %v1576
    %v1685 = vunpack.c.l.b16 %v1577
    %v1686 = vunpack.c.l.b16 %v1578
    %v1687 = vunpack.c.h.b16 %v1578
    %v1688 = vunpack.c.l.b16 %v1579
    %v1689 = vunpack.c.l.b16 %v1580
    %v1690 = vunpack.c.h.b16 %v1580
    %v1691 = vunpack.c.l.b16 %v1581
    %v1692 = vunpack.c.l.b16 %v1582
    %v1693 = vunpack.c.h.b16 %v1582
    %v1694 = vunpack.c.l.b16 %v1583
    %v1695 = vunpack.c.l.b16 %v1584
    %v1696 = vunpack.c.h.b16 %v1584
    %v1697 = vunpack.c.l.b16 %v1585
    %v1698 = vunpack.c.l.b16 %v1586
    %v1699 = vunpack.c.h.b16 %v1586
    %v1700 = vunpack.c.l.b16 %v1587
    %v1701 = vunpack.c.l.b16 %v1588
    %v1702 = vunpack.c.h.b16 %v1588
    %v1703 = vunpack.c.l.b16 %v1589
    %v1704 = vunpack.c.l.b16 %v1590
    %v1705 = vunpack.c.h.b16 %v1590
    %v1706 = vunpack.c.l.b16 %v1591
    %v1707 = vunpack.c.l.b16 %v1592
    %v1708 = vunpack.c.h.b16 %v1592
    %v1709 = vunpack.c.l.b16 %v1593
    %v1710 = vunpack.c.l.b16 %v1594
    %v1711 = vunpack.c.h.b16 %v1594
    %v1712 = vunpack.c.l.b16 %v1595
    %v1713 = vunpack.c.l.b16 %v1596
    %v1714 = vunpack.c.h.b16 %v1596
    %v1715 = vunpack.c.l.b16 %v1597
    %v1716 = vunpack.c.l.b16 %v1598
    %v1717 = vunpack.c.h.b16 %v1598
    %v1718 = vunpack.c.l.b16 %v1599
    %v1719 = vunpack.c.l.b16 %v1600
    %v1720 = vunpack.c.h.b16 %v1600
    %v1721 = vunpack.c.l.b16 %v1601
    %v1722 = vunpack.c.l.b16 %v1602
    %v1723 = vunpack.c.h.b16 %v1602
    %v1724 = vunpack.c.l.b16 %v1603
    %v1725 = vpack.c.b16 %v1680, %v1677
    %v1726 = vpack.c.b16 %v1681, %v1678
    %v1727 = vpack.c.b16 %v1682, %v1679
    %v1728 = vpack.c.b16 %v1686, %v1683
    %v1729 = vpack.c.b16 %v1687, %v1684
    %v1730 = vpack.c.b16 %v1688, %v1685
    %v1731 = vpack.c.b16 %v1692, %v1689
    %v1732 = vpack.c.b16 %v1693, %v1690
    %v1733 = vpack.c.b16 %v1694, %v1691
    %v1734 = vpack.c.b16 %v1698, %v1695
    %v1735 = vpack.c.b16 %v1699, %v1696
    %v1736 = vpack.c.b16 %v1700, %v1697
    %v1737 = vpack.c.b16 %v1704, %v1701
    %v1738 = vpack.c.b16 %v1705, %v1702
    %v1739 = vpack.c.b16 %v1706, %v1703
    %v1740 = vpack.c.b16 %v1710, %v1707
    %v1741 = vpack.c.b16 %v1711, %v1708
    %v1742 = vpack.c.b16 %v1712, %v1709
    %v1743 = vpack.c.b16 %v1716, %v1713
    %v1744 = vpack.c.b16 %v1717, %v1714
    %v1745 = vpack.c.b16 %v1718, %v1715
    %v1746 = vpack.c.b16 %v1722, %v1719
    %v1747 = vpack.c.b16 %v1723, %v1720
    %v1748 = vpack.c.b16 %v1724, %v1721
    %1773 = vmatprep.subr.bf16.mxu0 %v1726
    %1774 = vmatpush1.bf16.msra.mxu0 %v1725
    %1775 = vmatprep.subr.bf16.mxu0 %v1729
    %1776 = vmatpush1.bf16.msra.mxu0 %v1728
    %1777 = vmatprep.subr.bf16.mxu0 %v1732
    %1778 = vmatpush1.bf16.msra.mxu0 %v1731
    %1779 = vmatprep.subr.bf16.mxu0 %v1735
    %1780 = vmatpush1.bf16.msra.mxu0 %v1734
    %1781 = vmatprep.subr.bf16.mxu0 %v1738
    %1782 = vmatpush1.bf16.msra.mxu0 %v1737
    %1783 = vmatprep.subr.bf16.mxu0 %v1741
    %1784 = vmatpush1.bf16.msra.mxu0 %v1740
    %1785 = vmatprep.subr.bf16.mxu0 %v1744
    %1786 = vmatpush1.bf16.msra.mxu0 %v1743
    %1787 = vmatprep.subr.bf16.mxu0 %v1747
    %1788 = vmatpush1.bf16.msra.mxu0 %v1746
    %1789 = vmatprep.subr.bf16.mxu0 0
    %1790 = vmatpush1.bf16.msra.mxu0 0
    %1791 = vmatprep.subr.bf16.mxu0 0
    %1792 = vmatpush1.bf16.msra.mxu0 0
    %1793 = vmatprep.subr.bf16.mxu0 0
    %1794 = vmatpush1.bf16.msra.mxu0 0
    %1795 = vmatprep.subr.bf16.mxu0 0
    %1796 = vmatpush1.bf16.msra.mxu0 0
    %1797 = vmatprep.subr.bf16.mxu0 0
    %1798 = vmatpush1.bf16.msra.mxu0 0
    %1799 = vmatprep.subr.bf16.mxu0 0
    %1800 = vmatpush1.bf16.msra.mxu0 0
    %1801 = vmatprep.subr.bf16.mxu0 0
    %1802 = vmatpush1.bf16.msra.mxu0 0
    %1803 = vmatprep.subr.bf16.mxu0 0
    %1804 = vmatpush1.bf16.msra.mxu0 0
    %1805 = vmatprep.mubr.bf16.mxu0 0
    %1806 = vmatmul.mubr.bf16.gmra.mrb[0].mxu0 %v1637
    %v1807 = vpop.f32.mrb[0].mxu0
    %v1808 = vadd.f32 %v1609, %v1807
    %v1809 = vpop.f32.mrb[0].mxu0
    %v1810 = vadd.f32 %v1613, %v1809
    %v1811 = vpop.f32.mrb[0].mxu0
    %v1812 = vadd.f32 %v1609, %v1811
    %v1813 = vpop.f32.mrb[0].mxu0
    %v1814 = vadd.f32 %v1613, %v1813
    %1815 = vmatprep.mubr.bf16.mxu0 0
    %1816 = vmatmul.mubr.bf16.gmra.mrb[0].mxu0 %v1638
    %v1817 = vpop.f32.mrb[0].mxu0
    %v1818 = vadd.f32 %v1609, %v1817
    %v1819 = vpop.f32.mrb[0].mxu0
    %v1820 = vadd.f32 %v1613, %v1819
    %v1821 = vpop.f32.mrb[0].mxu0
    %v1822 = vadd.f32 %v1609, %v1821
    %v1823 = vpop.f32.mrb[0].mxu0
    %v1824 = vadd.f32 %v1613, %v1823
    %1825 = vmatprep.mubr.bf16.mxu0 0
    %1826 = vmatmul.mubr.bf16.gmra.mrb[0].mxu0 %v1639
    %v1827 = vpop.f32.mrb[0].mxu0
    %v1828 = vadd.f32 %v1609, %v1827
    %v1829 = vpop.f32.mrb[0].mxu0
    %v1830 = vadd.f32 %v1613, %v1829
    %v1831 = vpop.f32.mrb[0].mxu0
    %v1832 = vadd.f32 %v1609, %v1831
    %v1833 = vpop.f32.mrb[0].mxu0
    %v1834 = vadd.f32 %v1613, %v1833
    %1835 = vmatprep.mubr.bf16.mxu0 0
    %1836 = vmatmul.mubr.bf16.gmra.mrb[0].mxu0 %v1640
    %v1837 = vpop.f32.mrb[0].mxu0
    %v1838 = vadd.f32 %v1609, %v1837
    %v1839 = vpop.f32.mrb[0].mxu0
    %v1840 = vadd.f32 %v1613, %v1839
    %v1841 = vpop.f32.mrb[0].mxu0
    %v1842 = vadd.f32 %v1609, %v1841
    %v1843 = vpop.f32.mrb[0].mxu0
    %v1844 = vadd.f32 %v1613, %v1843
    %1845 = vdwg.mxu0
    %1846 = vmatprep.subr.bf16.mxu0 0
    %1847 = vmatpush1.bf16.msra.mxu0 %v1727
    %1848 = vmatprep.subr.bf16.mxu0 0
    %1849 = vmatpush1.bf16.msra.mxu0 %v1730
    %1850 = vmatprep.subr.bf16.mxu0 0
    %1851 = vmatpush1.bf16.msra.mxu0 %v1733
    %1852 = vmatprep.subr.bf16.mxu0 0
    %1853 = vmatpush1.bf16.msra.mxu0 %v1736
    %1854 = vmatprep.subr.bf16.mxu0 0
    %1855 = vmatpush1.bf16.msra.mxu0 %v1739
    %1856 = vmatprep.subr.bf16.mxu0 0
    %1857 = vmatpush1.bf16.msra.mxu0 %v1742
    %1858 = vmatprep.subr.bf16.mxu0 0
    %1859 = vmatpush1.bf16.msra.mxu0 %v1745
    %1860 = vmatprep.subr.bf16.mxu0 0
    %1861 = vmatpush1.bf16.msra.mxu0 %v1748
    %1862 = vmatprep.subr.bf16.mxu0 0
    %1863 = vmatpush1.bf16.msra.mxu0 0
    %1864 = vmatprep.subr.bf16.mxu0 0
    %1865 = vmatpush1.bf16.msra.mxu0 0
    %1866 = vmatprep.subr.bf16.mxu0 0
    %1867 = vmatpush1.bf16.msra.mxu0 0
    %1868 = vmatprep.subr.bf16.mxu0 0
    %1869 = vmatpush1.bf16.msra.mxu0 0
    %1870 = vmatprep.subr.bf16.mxu0 0
    %1871 = vmatpush1.bf16.msra.mxu0 0
    %1872 = vmatprep.subr.bf16.mxu0 0
    %1873 = vmatpush1.bf16.msra.mxu0 0
    %1874 = vmatprep.subr.bf16.mxu0 0
    %1875 = vmatpush1.bf16.msra.mxu0 0
    %1876 = vmatprep.subr.bf16.mxu0 0
    %1877 = vmatpush1.bf16.msra.mxu0 0
    %1878 = vmatprep.mubr.bf16.mxu0 0
    %1879 = vmatmul.mubr.bf16.gmra.mrb[0].mxu0 %v1637
    %v1880 = vpop.f32.mrb[0].mxu0
    %v1881 = vadd.f32 %v1617, %v1880
    %v1882 = vpop.f32.mrb[0].mxu0
    %v1883 = vpop.f32.mrb[0].mxu0
    %v1884 = vadd.f32 %v1617, %v1883
    %v1885 = vpop.f32.mrb[0].mxu0
    %1886 = vmatprep.mubr.bf16.mxu0 0
    %1887 = vmatmul.mubr.bf16.gmra.mrb[0].mxu0 %v1638
    %v1888 = vpop.f32.mrb[0].mxu0
    %v1889 = vadd.f32 %v1617, %v1888
    %v1890 = vpop.f32.mrb[0].mxu0
    %v1891 = vpop.f32.mrb[0].mxu0
    %v1892 = vadd.f32 %v1617, %v1891
    %v1893 = vpop.f32.mrb[0].mxu0
    %1894 = vmatprep.mubr.bf16.mxu0 0
    %1895 = vmatmul.mubr.bf16.gmra.mrb[0].mxu0 %v1639
    %v1896 = vpop.f32.mrb[0].mxu0
    %v1897 = vadd.f32 %v1617, %v1896
    %v1898 = vpop.f32.mrb[0].mxu0
    %v1899 = vpop.f32.mrb[0].mxu0
    %v1900 = vadd.f32 %v1617, %v1899
    %v1901 = vpop.f32.mrb[0].mxu0
    %1902 = vmatprep.mubr.bf16.mxu0 0
    %1903 = vmatmul.mubr.bf16.gmra.mrb[0].mxu0 %v1640
    %v1904 = vpop.f32.mrb[0].mxu0
    %v1905 = vadd.f32 %v1617, %v1904
    %v1906 = vpop.f32.mrb[0].mxu0
    %v1907 = vpop.f32.mrb[0].mxu0
    %v1908 = vadd.f32 %v1617, %v1907
    %v1909 = vpop.f32.mrb[0].mxu0
    %1910 = vdwg.mxu0
    %1911 = vst [vmem:[#allocation3] sm:$0xff] %v1808
    %1912 = vst [vmem:[#allocation3 + $0x8] sm:$0xff] %v1810
    %1913 = vst [vmem:[#allocation3 + $0x10] sm:$0xff] %v1881
    %1914 = vst [vmem:[#allocation3 + $0x18] sm:$0xff] %v1812
    %1915 = vst [vmem:[#allocation3 + $0x20] sm:$0xff] %v1814
    %1916 = vst [vmem:[#allocation3 + $0x28] sm:$0xff] %v1884
    %1917 = vst [vmem:[#allocation3 + $0x30] sm:$0xff] %v1818
    %1918 = vst [vmem:[#allocation3 + $0x38] sm:$0xff] %v1820
    %1919 = vst [vmem:[#allocation3 + $0x40] sm:$0xff] %v1889
    %1920 = vst [vmem:[#allocation3 + $0x48] sm:$0xff] %v1822
    %1921 = vst [vmem:[#allocation3 + $0x50] sm:$0xff] %v1824
    %1922 = vst [vmem:[#allocation3 + $0x58] sm:$0xff] %v1892
    %1923 = vst [vmem:[#allocation3 + $0x60] sm:$0xff] %v1828
    %1924 = vst [vmem:[#allocation3 + $0x68] sm:$0xff] %v1830
    %1925 = vst [vmem:[#allocation3 + $0x70] sm:$0xff] %v1897
    %1926 = vst [vmem:[#allocation3 + $0x78] sm:$0xff] %v1832
    %1927 = vst [vmem:[#allocation3 + $0x80] sm:$0xff] %v1834
    %1928 = vst [vmem:[#allocation3 + $0x88] sm:$0xff] %v1900
    %1929 = vst [vmem:[#allocation3 + $0x90] sm:$0xff] %v1838
    %1930 = vst [vmem:[#allocation3 + $0x98] sm:$0xff] %v1840
    %1931 = vst [vmem:[#allocation3 + $0xa0] sm:$0xff] %v1905
    %1932 = vst [vmem:[#allocation3 + $0xa8] sm:$0xff] %v1842
    %1933 = vst [vmem:[#allocation3 + $0xb0] sm:$0xff] %v1844
    %1934 = vst [vmem:[#allocation3 + $0xb8] sm:$0xff] %v1908
    %v1935 = vld [vmem:[#allocation13] sm:$0xff]
    %v1936 = vld [vmem:[#allocation13 + $0x8] sm:$0xf]
    %v1937 = vld [vmem:[#allocation13 + $0xc] sm:$0xff]
    %v1938 = vld [vmem:[#allocation13 + $0x14] sm:$0xf]
    %v1939 = vld [vmem:[#allocation13 + $0x18] sm:$0xff]
    %v1940 = vld [vmem:[#allocation13 + $0x20] sm:$0xf]
    %v1941 = vld [vmem:[#allocation13 + $0x24] sm:$0xff]
    %v1942 = vld [vmem:[#allocation13 + $0x2c] sm:$0xf]
    %v1943 = vld [vmem:[#allocation13 + $0x30] sm:$0xff]
    %v1944 = vld [vmem:[#allocation13 + $0x38] sm:$0xf]
    %v1945 = vld [vmem:[#allocation13 + $0x3c] sm:$0xff]
    %v1946 = vld [vmem:[#allocation13 + $0x44] sm:$0xf]
    %v1947 = vld [vmem:[#allocation13 + $0x48] sm:$0xff]
    %v1948 = vld [vmem:[#allocation13 + $0x50] sm:$0xf]
    %v1949 = vld [vmem:[#allocation13 + $0x54] sm:$0xff]
    %v1950 = vld [vmem:[#allocation13 + $0x5c] sm:$0xf]
    %v1951 = vld [vmem:[#allocation13 + $0x60] sm:$0xff]
    %v1952 = vld [vmem:[#allocation13 + $0x68] sm:$0xf]
    %v1953 = vld [vmem:[#allocation13 + $0x6c] sm:$0xff]
    %v1954 = vld [vmem:[#allocation13 + $0x74] sm:$0xf]
    %v1955 = vld [vmem:[#allocation13 + $0x78] sm:$0xff]
    %v1956 = vld [vmem:[#allocation13 + $0x80] sm:$0xf]
    %v1957 = vld [vmem:[#allocation13 + $0x84] sm:$0xff]
    %v1958 = vld [vmem:[#allocation13 + $0x8c] sm:$0xf]
    %v1959 = vld [vmem:[#allocation13 + $0x90] sm:$0xff]
    %v1960 = vld [vmem:[#allocation13 + $0x98] sm:$0xf]
    %v1961 = vld [vmem:[#allocation13 + $0x9c] sm:$0xff]
    %v1962 = vld [vmem:[#allocation13 + $0xa4] sm:$0xf]
    %v1963 = vld [vmem:[#allocation13 + $0xa8] sm:$0xff]
    %v1964 = vld [vmem:[#allocation13 + $0xb0] sm:$0xf]
    %v1965 = vld [vmem:[#allocation13 + $0xb4] sm:$0xff]
    %v1966 = vld [vmem:[#allocation13 + $0xbc] sm:$0xf]
    %v1967 = vld [vmem:[%s8] sm:$0x1]
    %v1969 = vlaneseq
    %v1970 = vshrl.u32 %v1969, 7
    %v1971 = vsub.s32 0, %v1970
    %v1972 = vrot.slane %v1967, %v1971
    %v1974 = vld [vmem:[#allocation3] sm:$0xff]
    %v1975 = vld [vmem:[#allocation3 + $0x8] sm:$0xff]
    %v1976 = vld [vmem:[#allocation3 + $0x10] sm:$0xff]
    %v2009 = vunpack.c.l.b16 %v1935
    %v2010 = vunpack.c.h.b16 %v1935
    %v2011 = vunpack.c.l.b16 %v1936
    %v2012 = vunpack.c.l.b16 %v1937
    %v2013 = vunpack.c.h.b16 %v1937
    %v2014 = vunpack.c.l.b16 %v1938
    %v2015 = vunpack.c.l.b16 %v1939
    %v2016 = vunpack.c.h.b16 %v1939
    %v2017 = vunpack.c.l.b16 %v1940
    %v2018 = vunpack.c.l.b16 %v1941
    %v2019 = vunpack.c.h.b16 %v1941
    %v2020 = vunpack.c.l.b16 %v1942
    %v2021 = vunpack.c.l.b16 %v1943
    %v2022 = vunpack.c.h.b16 %v1943
    %v2023 = vunpack.c.l.b16 %v1944
    %v2024 = vunpack.c.l.b16 %v1945
    %v2025 = vunpack.c.h.b16 %v1945
    %v2026 = vunpack.c.l.b16 %v1946
    %v2027 = vunpack.c.l.b16 %v1947
    %v2028 = vunpack.c.h.b16 %v1947
    %v2029 = vunpack.c.l.b16 %v1948
    %v2030 = vunpack.c.l.b16 %v1949
    %v2031 = vunpack.c.h.b16 %v1949
    %v2032 = vunpack.c.l.b16 %v1950
    %v2033 = vunpack.c.l.b16 %v1951
    %v2034 = vunpack.c.h.b16 %v1951
    %v2035 = vunpack.c.l.b16 %v1952
    %v2036 = vunpack.c.l.b16 %v1953
    %v2037 = vunpack.c.h.b16 %v1953
    %v2038 = vunpack.c.l.b16 %v1954
    %v2039 = vunpack.c.l.b16 %v1955
    %v2040 = vunpack.c.h.b16 %v1955
    %v2041 = vunpack.c.l.b16 %v1956
    %v2042 = vunpack.c.l.b16 %v1957
    %v2043 = vunpack.c.h.b16 %v1957
    %v2044 = vunpack.c.l.b16 %v1958
    %v2045 = vunpack.c.l.b16 %v1959
    %v2046 = vunpack.c.h.b16 %v1959
    %v2047 = vunpack.c.l.b16 %v1960
    %v2048 = vunpack.c.l.b16 %v1961
    %v2049 = vunpack.c.h.b16 %v1961
    %v2050 = vunpack.c.l.b16 %v1962
    %v2051 = vunpack.c.l.b16 %v1963
    %v2052 = vunpack.c.h.b16 %v1963
    %v2053 = vunpack.c.l.b16 %v1964
    %v2054 = vunpack.c.l.b16 %v1965
    %v2055 = vunpack.c.h.b16 %v1965
    %v2056 = vunpack.c.l.b16 %v1966
    %v2057 = vpack.c.b16 %v2012, %v2009
    %v2058 = vpack.c.b16 %v2013, %v2010
    %v2059 = vpack.c.b16 %v2014, %v2011
    %v2060 = vpack.c.b16 %v2018, %v2015
    %v2061 = vpack.c.b16 %v2019, %v2016
    %v2062 = vpack.c.b16 %v2020, %v2017
    %v2063 = vpack.c.b16 %v2024, %v2021
    %v2064 = vpack.c.b16 %v2025, %v2022
    %v2065 = vpack.c.b16 %v2026, %v2023
    %v2066 = vpack.c.b16 %v2030, %v2027
    %v2067 = vpack.c.b16 %v2031, %v2028
    %v2068 = vpack.c.b16 %v2032, %v2029
    %v2069 = vpack.c.b16 %v2036, %v2033
    %v2070 = vpack.c.b16 %v2037, %v2034
    %v2071 = vpack.c.b16 %v2038, %v2035
    %v2072 = vpack.c.b16 %v2042, %v2039
    %v2073 = vpack.c.b16 %v2043, %v2040
    %v2074 = vpack.c.b16 %v2044, %v2041
    %v2075 = vpack.c.b16 %v2048, %v2045
    %v2076 = vpack.c.b16 %v2049, %v2046
    %v2077 = vpack.c.b16 %v2050, %v2047
    %v2078 = vpack.c.b16 %v2054, %v2051
    %v2079 = vpack.c.b16 %v2055, %v2052
    %v2080 = vpack.c.b16 %v2056, %v2053
    %2105 = vmatprep.subr.bf16.mxu0 %v2058
    %2106 = vmatpush1.bf16.msra.mxu0 %v2057
    %2107 = vmatprep.subr.bf16.mxu0 %v2061
    %2108 = vmatpush1.bf16.msra.mxu0 %v2060
    %2109 = vmatprep.subr.bf16.mxu0 %v2064
    %2110 = vmatpush1.bf16.msra.mxu0 %v2063
    %2111 = vmatprep.subr.bf16.mxu0 %v2067
    %2112 = vmatpush1.bf16.msra.mxu0 %v2066
    %2113 = vmatprep.subr.bf16.mxu0 %v2070
    %2114 = vmatpush1.bf16.msra.mxu0 %v2069
    %2115 = vmatprep.subr.bf16.mxu0 %v2073
    %2116 = vmatpush1.bf16.msra.mxu0 %v2072
    %2117 = vmatprep.subr.bf16.mxu0 %v2076
    %2118 = vmatpush1.bf16.msra.mxu0 %v2075
    %2119 = vmatprep.subr.bf16.mxu0 %v2079
    %2120 = vmatpush1.bf16.msra.mxu0 %v2078
    %2121 = vmatprep.subr.bf16.mxu0 0
    %2122 = vmatpush1.bf16.msra.mxu0 0
    %2123 = vmatprep.subr.bf16.mxu0 0
    %2124 = vmatpush1.bf16.msra.mxu0 0
    %2125 = vmatprep.subr.bf16.mxu0 0
    %2126 = vmatpush1.bf16.msra.mxu0 0
    %2127 = vmatprep.subr.bf16.mxu0 0
    %2128 = vmatpush1.bf16.msra.mxu0 0
    %2129 = vmatprep.subr.bf16.mxu0 0
    %2130 = vmatpush1.bf16.msra.mxu0 0
    %2131 = vmatprep.subr.bf16.mxu0 0
    %2132 = vmatpush1.bf16.msra.mxu0 0
    %2133 = vmatprep.subr.bf16.mxu0 0
    %2134 = vmatpush1.bf16.msra.mxu0 0
    %2135 = vmatprep.subr.bf16.mxu0 0
    %2136 = vmatpush1.bf16.msra.mxu0 0
    %2137 = vmatprep.mubr.bf16.mxu0 0
    %2138 = vmatmul.mubr.bf16.gmra.mrb[0].mxu0 0
    %v2139 = vpop.f32.mrb[0].mxu0
    %v2140 = vadd.f32 0.0, %v2139
    %v2141 = vpop.f32.mrb[0].mxu0
    %v2142 = vadd.f32 0.0, %v2141
    %v2143 = vpop.f32.mrb[0].mxu0
    %v2144 = vpop.f32.mrb[0].mxu0
    %2145 = vdwg.mxu0
    %2146 = vmatprep.subr.bf16.mxu0 0
    %2147 = vmatpush1.bf16.msra.mxu0 %v2059
    %2148 = vmatprep.subr.bf16.mxu0 0
    %2149 = vmatpush1.bf16.msra.mxu0 %v2062
    %2150 = vmatprep.subr.bf16.mxu0 0
    %2151 = vmatpush1.bf16.msra.mxu0 %v2065
    %2152 = vmatprep.subr.bf16.mxu0 0
    %2153 = vmatpush1.bf16.msra.mxu0 %v2068
    %2154 = vmatprep.subr.bf16.mxu0 0
    %2155 = vmatpush1.bf16.msra.mxu0 %v2071
    %2156 = vmatprep.subr.bf16.mxu0 0
    %2157 = vmatpush1.bf16.msra.mxu0 %v2074
    %2158 = vmatprep.subr.bf16.mxu0 0
    %2159 = vmatpush1.bf16.msra.mxu0 %v2077
    %2160 = vmatprep.subr.bf16.mxu0 0
    %2161 = vmatpush1.bf16.msra.mxu0 %v2080
    %2162 = vmatprep.subr.bf16.mxu0 0
    %2163 = vmatpush1.bf16.msra.mxu0 0
    %2164 = vmatprep.subr.bf16.mxu0 0
    %2165 = vmatpush1.bf16.msra.mxu0 0
    %2166 = vmatprep.subr.bf16.mxu0 0
    %2167 = vmatpush1.bf16.msra.mxu0 0
    %2168 = vmatprep.subr.bf16.mxu0 0
    %2169 = vmatpush1.bf16.msra.mxu0 0
    %2170 = vmatprep.subr.bf16.mxu0 0
    %2171 = vmatpush1.bf16.msra.mxu0 0
    %2172 = vmatprep.subr.bf16.mxu0 0
    %2173 = vmatpush1.bf16.msra.mxu0 0
    %2174 = vmatprep.subr.bf16.mxu0 0
    %2175 = vmatpush1.bf16.msra.mxu0 0
    %2176 = vmatprep.subr.bf16.mxu0 0
    %2177 = vmatpush1.bf16.msra.mxu0 0
    %2178 = vmatprep.mubr.bf16.mxu0 0
    %2179 = vmatmul.mubr.bf16.gmra.mrb[0].mxu0 0
    %v2180 = vpop.f32.mrb[0].mxu0
    %v2181 = vadd.f32 0.0, %v2180
    %v2182 = vpop.f32.mrb[0].mxu0
    %v2183 = vpop.f32.mrb[0].mxu0
    %v2184 = vpop.f32.mrb[0].mxu0
    %2185 = vdwg.mxu0
    %v2186 = vadd.f32 %v1974, %v2140
    %v2187 = vxor.u32 %v2186, 2147483648
    %v2188 = vmul.f32 %v2187, 1.442695
    %v2189 = vpow.pop %v2188
    %v2190 = vadd.f32 %v2189, 1.0
    %v2191 = vrcp.pop %v2190
    %v2192 = vmul.f32 1.0, %v2191
    %v2193 = vadd.f32 %v1975, %v2142
    %v2194 = vxor.u32 %v2193, 2147483648
    %v2195 = vmul.f32 %v2194, 1.442695
    %v2196 = vpow.pop %v2195
    %v2197 = vadd.f32 %v2196, 1.0
    %v2198 = vrcp.pop %v2197
    %v2199 = vmul.f32 1.0, %v2198
    %v2200 = vadd.f32 %v2181, %v1972
    %v2201 = vmul.f32 %v2192, %v2200
    %v2202 = vadd.f32 %v1976, %v2201
    %v2203 = vtanh.pop %v2202
    %v2204 = vsub.f32 1.0, %v2199
    %v2205 = vmul.f32 %v2204, %v2203
    %v2206 = vmul.f32 %v2199, 0.0
    %v2207 = vadd.f32 %v2205, %v2206
    %2208 = vst [vmem:[#allocation16] sm:$0xff] %v2207
    %v2209 = vld [vmem:[%s777] sm:$0xff]
    %v2210 = vld [vmem:[%s777 + $0x8] sm:$0xff]
    %v2211 = vld [vmem:[%s777 + $0x10] sm:$0xff]
    %v2212 = vpack.c.bf16 %v2207, %v2207
    %2213 = vmatprep.subr.bf16.mxu0 %v2058
    %2214 = vmatpush1.bf16.msra.mxu0 %v2057
    %2215 = vmatprep.subr.bf16.mxu0 %v2061
    %2216 = vmatpush1.bf16.msra.mxu0 %v2060
    %2217 = vmatprep.subr.bf16.mxu0 %v2064
    %2218 = vmatpush1.bf16.msra.mxu0 %v2063
    %2219 = vmatprep.subr.bf16.mxu0 %v2067
    %2220 = vmatpush1.bf16.msra.mxu0 %v2066
    %2221 = vmatprep.subr.bf16.mxu0 %v2070
    %2222 = vmatpush1.bf16.msra.mxu0 %v2069
    %2223 = vmatprep.subr.bf16.mxu0 %v2073
    %2224 = vmatpush1.bf16.msra.mxu0 %v2072
    %2225 = vmatprep.subr.bf16.mxu0 %v2076
    %2226 = vmatpush1.bf16.msra.mxu0 %v2075
    %2227 = vmatprep.subr.bf16.mxu0 %v2079
    %2228 = vmatpush1.bf16.msra.mxu0 %v2078
    %2229 = vmatprep.subr.bf16.mxu0 0
    %2230 = vmatpush1.bf16.msra.mxu0 0
    %2231 = vmatprep.subr.bf16.mxu0 0
    %2232 = vmatpush1.bf16.msra.mxu0 0
    %2233 = vmatprep.subr.bf16.mxu0 0
    %2234 = vmatpush1.bf16.msra.mxu0 0
    %2235 = vmatprep.subr.bf16.mxu0 0
    %2236 = vmatpush1.bf16.msra.mxu0 0
    %2237 = vmatprep.subr.bf16.mxu0 0
    %2238 = vmatpush1.bf16.msra.mxu0 0
    %2239 = vmatprep.subr.bf16.mxu0 0
    %2240 = vmatpush1.bf16.msra.mxu0 0
    %2241 = vmatprep.subr.bf16.mxu0 0
    %2242 = vmatpush1.bf16.msra.mxu0 0
    %2243 = vmatprep.subr.bf16.mxu0 0
    %2244 = vmatpush1.bf16.msra.mxu0 0
    %2245 = vmatprep.mubr.bf16.mxu0 0
    %2246 = vmatmul.mubr.bf16.gmra.mrb[0].mxu0 %v2212
    %v2247 = vpop.f32.mrb[0].mxu0
    %v2248 = vadd.f32 0.0, %v2247
    %v2249 = vpop.f32.mrb[0].mxu0
    %v2250 = vadd.f32 0.0, %v2249
    %v2251 = vpop.f32.mrb[0].mxu0
    %v2252 = vpop.f32.mrb[0].mxu0
    %2253 = vdwg.mxu0
    %2254 = vmatprep.subr.bf16.mxu0 0
    %2255 = vmatpush1.bf16.msra.mxu0 %v2059
    %2256 = vmatprep.subr.bf16.mxu0 0
    %2257 = vmatpush1.bf16.msra.mxu0 %v2062
    %2258 = vmatprep.subr.bf16.mxu0 0
    %2259 = vmatpush1.bf16.msra.mxu0 %v2065
    %2260 = vmatprep.subr.bf16.mxu0 0
    %2261 = vmatpush1.bf16.msra.mxu0 %v2068
    %2262 = vmatprep.subr.bf16.mxu0 0
    %2263 = vmatpush1.bf16.msra.mxu0 %v2071
    %2264 = vmatprep.subr.bf16.mxu0 0
    %2265 = vmatpush1.bf16.msra.mxu0 %v2074
    %2266 = vmatprep.subr.bf16.mxu0 0
    %2267 = vmatpush1.bf16.msra.mxu0 %v2077
    %2268 = vmatprep.subr.bf16.mxu0 0
    %2269 = vmatpush1.bf16.msra.mxu0 %v2080
    %2270 = vmatprep.subr.bf16.mxu0 0
    %2271 = vmatpush1.bf16.msra.mxu0 0
    %2272 = vmatprep.subr.bf16.mxu0 0
    %2273 = vmatpush1.bf16.msra.mxu0 0
    %2274 = vmatprep.subr.bf16.mxu0 0
    %2275 = vmatpush1.bf16.msra.mxu0 0
    %2276 = vmatprep.subr.bf16.mxu0 0
    %2277 = vmatpush1.bf16.msra.mxu0 0
    %2278 = vmatprep.subr.bf16.mxu0 0
    %2279 = vmatpush1.bf16.msra.mxu0 0
    %2280 = vmatprep.subr.bf16.mxu0 0
    %2281 = vmatpush1.bf16.msra.mxu0 0
    %2282 = vmatprep.subr.bf16.mxu0 0
    %2283 = vmatpush1.bf16.msra.mxu0 0
    %2284 = vmatprep.subr.bf16.mxu0 0
    %2285 = vmatpush1.bf16.msra.mxu0 0
    %2286 = vmatprep.mubr.bf16.mxu0 0
    %2287 = vmatmul.mubr.bf16.gmra.mrb[0].mxu0 %v2212
    %v2288 = vpop.f32.mrb[0].mxu0
    %v2289 = vadd.f32 0.0, %v2288
    %v2290 = vpop.f32.mrb[0].mxu0
    %v2291 = vpop.f32.mrb[0].mxu0
    %v2292 = vpop.f32.mrb[0].mxu0
    %2293 = vdwg.mxu0
    %v2294 = vadd.f32 %v2209, %v2248
    %v2295 = vxor.u32 %v2294, 2147483648
    %v2296 = vmul.f32 %v2295, 1.442695
    %v2297 = vpow.pop %v2296
    %v2298 = vadd.f32 %v2297, 1.0
    %v2299 = vrcp.pop %v2298
    %v2300 = vmul.f32 1.0, %v2299
    %v2301 = vadd.f32 %v2210, %v2250
    %v2302 = vxor.u32 %v2301, 2147483648
    %v2303 = vmul.f32 %v2302, 1.442695
    %v2304 = vpow.pop %v2303
    %v2305 = vadd.f32 %v2304, 1.0
    %v2306 = vrcp.pop %v2305
    %v2307 = vmul.f32 1.0, %v2306
    %v2308 = vadd.f32 %v2289, %v1972
    %v2309 = vmul.f32 %v2300, %v2308
    %v2310 = vadd.f32 %v2211, %v2309
    %v2311 = vtanh.pop %v2310
    %v2312 = vsub.f32 1.0, %v2307
    %v2313 = vmul.f32 %v2312, %v2311
    %v2314 = vmul.f32 %v2307, %v2207
    %v2315 = vadd.f32 %v2313, %v2314
    %s2316 = scalar_lea.vmem [#allocation16], 8
    %2317 = vst [vmem:[%s2316] sm:$0xff] %v2315
    %v2318 = vld [vmem:[%s887] sm:$0xff]
    %v2319 = vld [vmem:[%s887 + $0x8] sm:$0xff]
    %v2320 = vld [vmem:[%s887 + $0x10] sm:$0xff]
    %v2321 = vpack.c.bf16 %v2315, %v2315
    %2322 = vmatprep.subr.bf16.mxu0 %v2058
    %2323 = vmatpush1.bf16.msra.mxu0 %v2057
    %2324 = vmatprep.subr.bf16.mxu0 %v2061
    %2325 = vmatpush1.bf16.msra.mxu0 %v2060
    %2326 = vmatprep.subr.bf16.mxu0 %v2064
    %2327 = vmatpush1.bf16.msra.mxu0 %v2063
    %2328 = vmatprep.subr.bf16.mxu0 %v2067
    %2329 = vmatpush1.bf16.msra.mxu0 %v2066
    %2330 = vmatprep.subr.bf16.mxu0 %v2070
    %2331 = vmatpush1.bf16.msra.mxu0 %v2069
    %2332 = vmatprep.subr.bf16.mxu0 %v2073
    %2333 = vmatpush1.bf16.msra.mxu0 %v2072
    %2334 = vmatprep.subr.bf16.mxu0 %v2076
    %2335 = vmatpush1.bf16.msra.mxu0 %v2075
    %2336 = vmatprep.subr.bf16.mxu0 %v2079
    %2337 = vmatpush1.bf16.msra.mxu0 %v2078
    %2338 = vmatprep.subr.bf16.mxu0 0
    %2339 = vmatpush1.bf16.msra.mxu0 0
    %2340 = vmatprep.subr.bf16.mxu0 0
    %2341 = vmatpush1.bf16.msra.mxu0 0
    %2342 = vmatprep.subr.bf16.mxu0 0
    %2343 = vmatpush1.bf16.msra.mxu0 0
    %2344 = vmatprep.subr.bf16.mxu0 0
    %2345 = vmatpush1.bf16.msra.mxu0 0
    %2346 = vmatprep.subr.bf16.mxu0 0
    %2347 = vmatpush1.bf16.msra.mxu0 0
    %2348 = vmatprep.subr.bf16.mxu0 0
    %2349 = vmatpush1.bf16.msra.mxu0 0
    %2350 = vmatprep.subr.bf16.mxu0 0
    %2351 = vmatpush1.bf16.msra.mxu0 0
    %2352 = vmatprep.subr.bf16.mxu0 0
    %2353 = vmatpush1.bf16.msra.mxu0 0
    %2354 = vmatprep.mubr.bf16.mxu0 0
    %2355 = vmatmul.mubr.bf16.gmra.mrb[0].mxu0 %v2321
    %v2356 = vpop.f32.mrb[0].mxu0
    %v2357 = vadd.f32 0.0, %v2356
    %v2358 = vpop.f32.mrb[0].mxu0
    %v2359 = vadd.f32 0.0, %v2358
    %v2360 = vpop.f32.mrb[0].mxu0
    %v2361 = vpop.f32.mrb[0].mxu0
    %2362 = vdwg.mxu0
    %2363 = vmatprep.subr.bf16.mxu0 0
    %2364 = vmatpush1.bf16.msra.mxu0 %v2059
    %2365 = vmatprep.subr.bf16.mxu0 0
    %2366 = vmatpush1.bf16.msra.mxu0 %v2062
    %2367 = vmatprep.subr.bf16.mxu0 0
    %2368 = vmatpush1.bf16.msra.mxu0 %v2065
    %2369 = vmatprep.subr.bf16.mxu0 0
    %2370 = vmatpush1.bf16.msra.mxu0 %v2068
    %2371 = vmatprep.subr.bf16.mxu0 0
    %2372 = vmatpush1.bf16.msra.mxu0 %v2071
    %2373 = vmatprep.subr.bf16.mxu0 0
    %2374 = vmatpush1.bf16.msra.mxu0 %v2074
    %2375 = vmatprep.subr.bf16.mxu0 0
    %2376 = vmatpush1.bf16.msra.mxu0 %v2077
    %2377 = vmatprep.subr.bf16.mxu0 0
    %2378 = vmatpush1.bf16.msra.mxu0 %v2080
    %2379 = vmatprep.subr.bf16.mxu0 0
    %2380 = vmatpush1.bf16.msra.mxu0 0
    %2381 = vmatprep.subr.bf16.mxu0 0
    %2382 = vmatpush1.bf16.msra.mxu0 0
    %2383 = vmatprep.subr.bf16.mxu0 0
    %2384 = vmatpush1.bf16.msra.mxu0 0
    %2385 = vmatprep.subr.bf16.mxu0 0
    %2386 = vmatpush1.bf16.msra.mxu0 0
    %2387 = vmatprep.subr.bf16.mxu0 0
    %2388 = vmatpush1.bf16.msra.mxu0 0
    %2389 = vmatprep.subr.bf16.mxu0 0
    %2390 = vmatpush1.bf16.msra.mxu0 0
    %2391 = vmatprep.subr.bf16.mxu0 0
    %2392 = vmatpush1.bf16.msra.mxu0 0
    %2393 = vmatprep.subr.bf16.mxu0 0
    %2394 = vmatpush1.bf16.msra.mxu0 0
    %2395 = vmatprep.mubr.bf16.mxu0 0
    %2396 = vmatmul.mubr.bf16.gmra.mrb[0].mxu0 %v2321
    %v2397 = vpop.f32.mrb[0].mxu0
    %v2398 = vadd.f32 0.0, %v2397
    %v2399 = vpop.f32.mrb[0].mxu0
    %v2400 = vpop.f32.mrb[0].mxu0
    %v2401 = vpop.f32.mrb[0].mxu0
    %2402 = vdwg.mxu0
    %v2403 = vadd.f32 %v2318, %v2357
    %v2404 = vxor.u32 %v2403, 2147483648
    %v2405 = vmul.f32 %v2404, 1.442695
    %v2406 = vpow.pop %v2405
    %v2407 = vadd.f32 %v2406, 1.0
    %v2408 = vrcp.pop %v2407
    %v2409 = vmul.f32 1.0, %v2408
    %v2410 = vadd.f32 %v2319, %v2359
    %v2411 = vxor.u32 %v2410, 2147483648
    %v2412 = vmul.f32 %v2411, 1.442695
    %v2413 = vpow.pop %v2412
    %v2414 = vadd.f32 %v2413, 1.0
    %v2415 = vrcp.pop %v2414
    %v2416 = vmul.f32 1.0, %v2415
    %v2417 = vadd.f32 %v2398, %v1972
    %v2418 = vmul.f32 %v2409, %v2417
    %v2419 = vadd.f32 %v2320, %v2418
    %v2420 = vtanh.pop %v2419
    %v2421 = vsub.f32 1.0, %v2416
    %v2422 = vmul.f32 %v2421, %v2420
    %v2423 = vmul.f32 %v2416, %v2315
    %v2424 = vadd.f32 %v2422, %v2423
    %s2425 = scalar_lea.vmem [#allocation16], 16
    %2426 = vst [vmem:[%s2425] sm:$0xff] %v2424
    %v2427 = vld [vmem:[%s997] sm:$0xff]
    %v2428 = vld [vmem:[%s997 + $0x8] sm:$0xff]
    %v2429 = vld [vmem:[%s997 + $0x10] sm:$0xff]
    %v2430 = vpack.c.bf16 %v2424, %v2424
    %2431 = vmatprep.subr.bf16.mxu0 %v2058
    %2432 = vmatpush1.bf16.msra.mxu0 %v2057
    %2433 = vmatprep.subr.bf16.mxu0 %v2061
    %2434 = vmatpush1.bf16.msra.mxu0 %v2060
    %2435 = vmatprep.subr.bf16.mxu0 %v2064
    %2436 = vmatpush1.bf16.msra.mxu0 %v2063
    %2437 = vmatprep.subr.bf16.mxu0 %v2067
    %2438 = vmatpush1.bf16.msra.mxu0 %v2066
    %2439 = vmatprep.subr.bf16.mxu0 %v2070
    %2440 = vmatpush1.bf16.msra.mxu0 %v2069
    %2441 = vmatprep.subr.bf16.mxu0 %v2073
    %2442 = vmatpush1.bf16.msra.mxu0 %v2072
    %2443 = vmatprep.subr.bf16.mxu0 %v2076
    %2444 = vmatpush1.bf16.msra.mxu0 %v2075
    %2445 = vmatprep.subr.bf16.mxu0 %v2079
    %2446 = vmatpush1.bf16.msra.mxu0 %v2078
    %2447 = vmatprep.subr.bf16.mxu0 0
    %2448 = vmatpush1.bf16.msra.mxu0 0
    %2449 = vmatprep.subr.bf16.mxu0 0
    %2450 = vmatpush1.bf16.msra.mxu0 0
    %2451 = vmatprep.subr.bf16.mxu0 0
    %2452 = vmatpush1.bf16.msra.mxu0 0
    %2453 = vmatprep.subr.bf16.mxu0 0
    %2454 = vmatpush1.bf16.msra.mxu0 0
    %2455 = vmatprep.subr.bf16.mxu0 0
    %2456 = vmatpush1.bf16.msra.mxu0 0
    %2457 = vmatprep.subr.bf16.mxu0 0
    %2458 = vmatpush1.bf16.msra.mxu0 0
    %2459 = vmatprep.subr.bf16.mxu0 0
    %2460 = vmatpush1.bf16.msra.mxu0 0
    %2461 = vmatprep.subr.bf16.mxu0 0
    %2462 = vmatpush1.bf16.msra.mxu0 0
    %2463 = vmatprep.mubr.bf16.mxu0 0
    %2464 = vmatmul.mubr.bf16.gmra.mrb[0].mxu0 %v2430
    %v2465 = vpop.f32.mrb[0].mxu0
    %v2466 = vadd.f32 0.0, %v2465
    %v2467 = vpop.f32.mrb[0].mxu0
    %v2468 = vadd.f32 0.0, %v2467
    %v2469 = vpop.f32.mrb[0].mxu0
    %v2470 = vpop.f32.mrb[0].mxu0
    %2471 = vdwg.mxu0
    %2472 = vmatprep.subr.bf16.mxu0 0
    %2473 = vmatpush1.bf16.msra.mxu0 %v2059
    %2474 = vmatprep.subr.bf16.mxu0 0
    %2475 = vmatpush1.bf16.msra.mxu0 %v2062
    %2476 = vmatprep.subr.bf16.mxu0 0
    %2477 = vmatpush1.bf16.msra.mxu0 %v2065
    %2478 = vmatprep.subr.bf16.mxu0 0
    %2479 = vmatpush1.bf16.msra.mxu0 %v2068
    %2480 = vmatprep.subr.bf16.mxu0 0
    %2481 = vmatpush1.bf16.msra.mxu0 %v2071
    %2482 = vmatprep.subr.bf16.mxu0 0
    %2483 = vmatpush1.bf16.msra.mxu0 %v2074
    %2484 = vmatprep.subr.bf16.mxu0 0
    %2485 = vmatpush1.bf16.msra.mxu0 %v2077
    %2486 = vmatprep.subr.bf16.mxu0 0
    %2487 = vmatpush1.bf16.msra.mxu0 %v2080
    %2488 = vmatprep.subr.bf16.mxu0 0
    %2489 = vmatpush1.bf16.msra.mxu0 0
    %2490 = vmatprep.subr.bf16.mxu0 0
    %2491 = vmatpush1.bf16.msra.mxu0 0
    %2492 = vmatprep.subr.bf16.mxu0 0
    %2493 = vmatpush1.bf16.msra.mxu0 0
    %2494 = vmatprep.subr.bf16.mxu0 0
    %2495 = vmatpush1.bf16.msra.mxu0 0
    %2496 = vmatprep.subr.bf16.mxu0 0
    %2497 = vmatpush1.bf16.msra.mxu0 0
    %2498 = vmatprep.subr.bf16.mxu0 0
    %2499 = vmatpush1.bf16.msra.mxu0 0
    %2500 = vmatprep.subr.bf16.mxu0 0
    %2501 = vmatpush1.bf16.msra.mxu0 0
    %2502 = vmatprep.subr.bf16.mxu0 0
    %2503 = vmatpush1.bf16.msra.mxu0 0
    %2504 = vmatprep.mubr.bf16.mxu0 0
    %2505 = vmatmul.mubr.bf16.gmra.mrb[0].mxu0 %v2430
    %v2506 = vpop.f32.mrb[0].mxu0
    %v2507 = vadd.f32 0.0, %v2506
    %v2508 = vpop.f32.mrb[0].mxu0
    %v2509 = vpop.f32.mrb[0].mxu0
    %v2510 = vpop.f32.mrb[0].mxu0
    %2511 = vdwg.mxu0
    %v2512 = vadd.f32 %v2427, %v2466
    %v2513 = vxor.u32 %v2512, 2147483648
    %v2514 = vmul.f32 %v2513, 1.442695
    %v2515 = vpow.pop %v2514
    %v2516 = vadd.f32 %v2515, 1.0
    %v2517 = vrcp.pop %v2516
    %v2518 = vmul.f32 1.0, %v2517
    %v2519 = vadd.f32 %v2428, %v2468
    %v2520 = vxor.u32 %v2519, 2147483648
    %v2521 = vmul.f32 %v2520, 1.442695
    %v2522 = vpow.pop %v2521
    %v2523 = vadd.f32 %v2522, 1.0
    %v2524 = vrcp.pop %v2523
    %v2525 = vmul.f32 1.0, %v2524
    %v2526 = vadd.f32 %v2507, %v1972
    %v2527 = vmul.f32 %v2518, %v2526
    %v2528 = vadd.f32 %v2429, %v2527
    %v2529 = vtanh.pop %v2528
    %v2530 = vsub.f32 1.0, %v2525
    %v2531 = vmul.f32 %v2530, %v2529
    %v2532 = vmul.f32 %v2525, %v2424
    %v2533 = vadd.f32 %v2531, %v2532
    %s2534 = scalar_lea.vmem [#allocation16], 24
    %2535 = vst [vmem:[%s2534] sm:$0xff] %v2533
    %v2536 = vld [vmem:[%s1107] sm:$0xff]
    %v2537 = vld [vmem:[%s1107 + $0x8] sm:$0xff]
    %v2538 = vld [vmem:[%s1107 + $0x10] sm:$0xff]
    %v2539 = vpack.c.bf16 %v2533, %v2533
    %2540 = vmatprep.subr.bf16.mxu0 %v2058
    %2541 = vmatpush1.bf16.msra.mxu0 %v2057
    %2542 = vmatprep.subr.bf16.mxu0 %v2061
    %2543 = vmatpush1.bf16.msra.mxu0 %v2060
    %2544 = vmatprep.subr.bf16.mxu0 %v2064
    %2545 = vmatpush1.bf16.msra.mxu0 %v2063
    %2546 = vmatprep.subr.bf16.mxu0 %v2067
    %2547 = vmatpush1.bf16.msra.mxu0 %v2066
    %2548 = vmatprep.subr.bf16.mxu0 %v2070
    %2549 = vmatpush1.bf16.msra.mxu0 %v2069
    %2550 = vmatprep.subr.bf16.mxu0 %v2073
    %2551 = vmatpush1.bf16.msra.mxu0 %v2072
    %2552 = vmatprep.subr.bf16.mxu0 %v2076
    %2553 = vmatpush1.bf16.msra.mxu0 %v2075
    %2554 = vmatprep.subr.bf16.mxu0 %v2079
    %2555 = vmatpush1.bf16.msra.mxu0 %v2078
    %2556 = vmatprep.subr.bf16.mxu0 0
    %2557 = vmatpush1.bf16.msra.mxu0 0
    %2558 = vmatprep.subr.bf16.mxu0 0
    %2559 = vmatpush1.bf16.msra.mxu0 0
    %2560 = vmatprep.subr.bf16.mxu0 0
    %2561 = vmatpush1.bf16.msra.mxu0 0
    %2562 = vmatprep.subr.bf16.mxu0 0
    %2563 = vmatpush1.bf16.msra.mxu0 0
    %2564 = vmatprep.subr.bf16.mxu0 0
    %2565 = vmatpush1.bf16.msra.mxu0 0
    %2566 = vmatprep.subr.bf16.mxu0 0
    %2567 = vmatpush1.bf16.msra.mxu0 0
    %2568 = vmatprep.subr.bf16.mxu0 0
    %2569 = vmatpush1.bf16.msra.mxu0 0
    %2570 = vmatprep.subr.bf16.mxu0 0
    %2571 = vmatpush1.bf16.msra.mxu0 0
    %2572 = vmatprep.mubr.bf16.mxu0 0
    %2573 = vmatmul.mubr.bf16.gmra.mrb[0].mxu0 %v2539
    %v2574 = vpop.f32.mrb[0].mxu0
    %v2575 = vadd.f32 0.0, %v2574
    %v2576 = vpop.f32.mrb[0].mxu0
    %v2577 = vadd.f32 0.0, %v2576
    %v2578 = vpop.f32.mrb[0].mxu0
    %v2579 = vpop.f32.mrb[0].mxu0
    %2580 = vdwg.mxu0
    %2581 = vmatprep.subr.bf16.mxu0 0
    %2582 = vmatpush1.bf16.msra.mxu0 %v2059
    %2583 = vmatprep.subr.bf16.mxu0 0
    %2584 = vmatpush1.bf16.msra.mxu0 %v2062
    %2585 = vmatprep.subr.bf16.mxu0 0
    %2586 = vmatpush1.bf16.msra.mxu0 %v2065
    %2587 = vmatprep.subr.bf16.mxu0 0
    %2588 = vmatpush1.bf16.msra.mxu0 %v2068
    %2589 = vmatprep.subr.bf16.mxu0 0
    %2590 = vmatpush1.bf16.msra.mxu0 %v2071
    %2591 = vmatprep.subr.bf16.mxu0 0
    %2592 = vmatpush1.bf16.msra.mxu0 %v2074
    %2593 = vmatprep.subr.bf16.mxu0 0
    %2594 = vmatpush1.bf16.msra.mxu0 %v2077
    %2595 = vmatprep.subr.bf16.mxu0 0
    %2596 = vmatpush1.bf16.msra.mxu0 %v2080
    %2597 = vmatprep.subr.bf16.mxu0 0
    %2598 = vmatpush1.bf16.msra.mxu0 0
    %2599 = vmatprep.subr.bf16.mxu0 0
    %2600 = vmatpush1.bf16.msra.mxu0 0
    %2601 = vmatprep.subr.bf16.mxu0 0
    %2602 = vmatpush1.bf16.msra.mxu0 0
    %2603 = vmatprep.subr.bf16.mxu0 0
    %2604 = vmatpush1.bf16.msra.mxu0 0
    %2605 = vmatprep.subr.bf16.mxu0 0
    %2606 = vmatpush1.bf16.msra.mxu0 0
    %2607 = vmatprep.subr.bf16.mxu0 0
    %2608 = vmatpush1.bf16.msra.mxu0 0
    %2609 = vmatprep.subr.bf16.mxu0 0
    %2610 = vmatpush1.bf16.msra.mxu0 0
    %2611 = vmatprep.subr.bf16.mxu0 0
    %2612 = vmatpush1.bf16.msra.mxu0 0
    %2613 = vmatprep.mubr.bf16.mxu0 0
    %2614 = vmatmul.mubr.bf16.gmra.mrb[0].mxu0 %v2539
    %v2615 = vpop.f32.mrb[0].mxu0
    %v2616 = vadd.f32 0.0, %v2615
    %v2617 = vpop.f32.mrb[0].mxu0
    %v2618 = vpop.f32.mrb[0].mxu0
    %v2619 = vpop.f32.mrb[0].mxu0
    %2620 = vdwg.mxu0
    %v2621 = vadd.f32 %v2536, %v2575
    %v2622 = vxor.u32 %v2621, 2147483648
    %v2623 = vmul.f32 %v2622, 1.442695
    %v2624 = vpow.pop %v2623
    %v2625 = vadd.f32 %v2624, 1.0
    %v2626 = vrcp.pop %v2625
    %v2627 = vmul.f32 1.0, %v2626
    %v2628 = vadd.f32 %v2537, %v2577
    %v2629 = vxor.u32 %v2628, 2147483648
    %v2630 = vmul.f32 %v2629, 1.442695
    %v2631 = vpow.pop %v2630
    %v2632 = vadd.f32 %v2631, 1.0
    %v2633 = vrcp.pop %v2632
    %v2634 = vmul.f32 1.0, %v2633
    %v2635 = vadd.f32 %v2616, %v1972
    %v2636 = vmul.f32 %v2627, %v2635
    %v2637 = vadd.f32 %v2538, %v2636
    %v2638 = vtanh.pop %v2637
    %v2639 = vsub.f32 1.0, %v2634
    %v2640 = vmul.f32 %v2639, %v2638
    %v2641 = vmul.f32 %v2634, %v2533
    %v2642 = vadd.f32 %v2640, %v2641
    %s2643 = scalar_lea.vmem [#allocation16], 32
    %2644 = vst [vmem:[%s2643] sm:$0xff] %v2642
    %v2645 = vld [vmem:[%s1217] sm:$0xff]
    %v2646 = vld [vmem:[%s1217 + $0x8] sm:$0xff]
    %v2647 = vld [vmem:[%s1217 + $0x10] sm:$0xff]
    %v2648 = vpack.c.bf16 %v2642, %v2642
    %2649 = vmatprep.subr.bf16.mxu0 %v2058
    %2650 = vmatpush1.bf16.msra.mxu0 %v2057
    %2651 = vmatprep.subr.bf16.mxu0 %v2061
    %2652 = vmatpush1.bf16.msra.mxu0 %v2060
    %2653 = vmatprep.subr.bf16.mxu0 %v2064
    %2654 = vmatpush1.bf16.msra.mxu0 %v2063
    %2655 = vmatprep.subr.bf16.mxu0 %v2067
    %2656 = vmatpush1.bf16.msra.mxu0 %v2066
    %2657 = vmatprep.subr.bf16.mxu0 %v2070
    %2658 = vmatpush1.bf16.msra.mxu0 %v2069
    %2659 = vmatprep.subr.bf16.mxu0 %v2073
    %2660 = vmatpush1.bf16.msra.mxu0 %v2072
    %2661 = vmatprep.subr.bf16.mxu0 %v2076
    %2662 = vmatpush1.bf16.msra.mxu0 %v2075
    %2663 = vmatprep.subr.bf16.mxu0 %v2079
    %2664 = vmatpush1.bf16.msra.mxu0 %v2078
    %2665 = vmatprep.subr.bf16.mxu0 0
    %2666 = vmatpush1.bf16.msra.mxu0 0
    %2667 = vmatprep.subr.bf16.mxu0 0
    %2668 = vmatpush1.bf16.msra.mxu0 0
    %2669 = vmatprep.subr.bf16.mxu0 0
    %2670 = vmatpush1.bf16.msra.mxu0 0
    %2671 = vmatprep.subr.bf16.mxu0 0
    %2672 = vmatpush1.bf16.msra.mxu0 0
    %2673 = vmatprep.subr.bf16.mxu0 0
    %2674 = vmatpush1.bf16.msra.mxu0 0
    %2675 = vmatprep.subr.bf16.mxu0 0
    %2676 = vmatpush1.bf16.msra.mxu0 0
    %2677 = vmatprep.subr.bf16.mxu0 0
    %2678 = vmatpush1.bf16.msra.mxu0 0
    %2679 = vmatprep.subr.bf16.mxu0 0
    %2680 = vmatpush1.bf16.msra.mxu0 0
    %2681 = vmatprep.mubr.bf16.mxu0 0
    %2682 = vmatmul.mubr.bf16.gmra.mrb[0].mxu0 %v2648
    %v2683 = vpop.f32.mrb[0].mxu0
    %v2684 = vadd.f32 0.0, %v2683
    %v2685 = vpop.f32.mrb[0].mxu0
    %v2686 = vadd.f32 0.0, %v2685
    %v2687 = vpop.f32.mrb[0].mxu0
    %v2688 = vpop.f32.mrb[0].mxu0
    %2689 = vdwg.mxu0
    %2690 = vmatprep.subr.bf16.mxu0 0
    %2691 = vmatpush1.bf16.msra.mxu0 %v2059
    %2692 = vmatprep.subr.bf16.mxu0 0
    %2693 = vmatpush1.bf16.msra.mxu0 %v2062
    %2694 = vmatprep.subr.bf16.mxu0 0
    %2695 = vmatpush1.bf16.msra.mxu0 %v2065
    %2696 = vmatprep.subr.bf16.mxu0 0
    %2697 = vmatpush1.bf16.msra.mxu0 %v2068
    %2698 = vmatprep.subr.bf16.mxu0 0
    %2699 = vmatpush1.bf16.msra.mxu0 %v2071
    %2700 = vmatprep.subr.bf16.mxu0 0
    %2701 = vmatpush1.bf16.msra.mxu0 %v2074
    %2702 = vmatprep.subr.bf16.mxu0 0
    %2703 = vmatpush1.bf16.msra.mxu0 %v2077
    %2704 = vmatprep.subr.bf16.mxu0 0
    %2705 = vmatpush1.bf16.msra.mxu0 %v2080
    %2706 = vmatprep.subr.bf16.mxu0 0
    %2707 = vmatpush1.bf16.msra.mxu0 0
    %2708 = vmatprep.subr.bf16.mxu0 0
    %2709 = vmatpush1.bf16.msra.mxu0 0
    %2710 = vmatprep.subr.bf16.mxu0 0
    %2711 = vmatpush1.bf16.msra.mxu0 0
    %2712 = vmatprep.subr.bf16.mxu0 0
    %2713 = vmatpush1.bf16.msra.mxu0 0
    %2714 = vmatprep.subr.bf16.mxu0 0
    %2715 = vmatpush1.bf16.msra.mxu0 0
    %2716 = vmatprep.subr.bf16.mxu0 0
    %2717 = vmatpush1.bf16.msra.mxu0 0
    %2718 = vmatprep.subr.bf16.mxu0 0
    %2719 = vmatpush1.bf16.msra.mxu0 0
    %2720 = vmatprep.subr.bf16.mxu0 0
    %2721 = vmatpush1.bf16.msra.mxu0 0
    %2722 = vmatprep.mubr.bf16.mxu0 0
    %2723 = vmatmul.mubr.bf16.gmra.mrb[0].mxu0 %v2648
    %v2724 = vpop.f32.mrb[0].mxu0
    %v2725 = vadd.f32 0.0, %v2724
    %v2726 = vpop.f32.mrb[0].mxu0
    %v2727 = vpop.f32.mrb[0].mxu0
    %v2728 = vpop.f32.mrb[0].mxu0
    %2729 = vdwg.mxu0
    %v2730 = vadd.f32 %v2645, %v2684
    %v2731 = vxor.u32 %v2730, 2147483648
    %v2732 = vmul.f32 %v2731, 1.442695
    %v2733 = vpow.pop %v2732
    %v2734 = vadd.f32 %v2733, 1.0
    %v2735 = vrcp.pop %v2734
    %v2736 = vmul.f32 1.0, %v2735
    %v2737 = vadd.f32 %v2646, %v2686
    %v2738 = vxor.u32 %v2737, 2147483648
    %v2739 = vmul.f32 %v2738, 1.442695
    %v2740 = vpow.pop %v2739
    %v2741 = vadd.f32 %v2740, 1.0
    %v2742 = vrcp.pop %v2741
    %v2743 = vmul.f32 1.0, %v2742
    %v2744 = vadd.f32 %v2725, %v1972
    %v2745 = vmul.f32 %v2736, %v2744
    %v2746 = vadd.f32 %v2647, %v2745
    %v2747 = vtanh.pop %v2746
    %v2748 = vsub.f32 1.0, %v2743
    %v2749 = vmul.f32 %v2748, %v2747
    %v2750 = vmul.f32 %v2743, %v2642
    %v2751 = vadd.f32 %v2749, %v2750
    %s2752 = scalar_lea.vmem [#allocation16], 40
    %2753 = vst [vmem:[%s2752] sm:$0xff] %v2751
    %v2754 = vld [vmem:[%s1327] sm:$0xff]
    %v2755 = vld [vmem:[%s1327 + $0x8] sm:$0xff]
    %v2756 = vld [vmem:[%s1327 + $0x10] sm:$0xff]
    %v2757 = vpack.c.bf16 %v2751, %v2751
    %2758 = vmatprep.subr.bf16.mxu0 %v2058
    %2759 = vmatpush1.bf16.msra.mxu0 %v2057
    %2760 = vmatprep.subr.bf16.mxu0 %v2061
    %2761 = vmatpush1.bf16.msra.mxu0 %v2060
    %2762 = vmatprep.subr.bf16.mxu0 %v2064
    %2763 = vmatpush1.bf16.msra.mxu0 %v2063
    %2764 = vmatprep.subr.bf16.mxu0 %v2067
    %2765 = vmatpush1.bf16.msra.mxu0 %v2066
    %2766 = vmatprep.subr.bf16.mxu0 %v2070
    %2767 = vmatpush1.bf16.msra.mxu0 %v2069
    %2768 = vmatprep.subr.bf16.mxu0 %v2073
    %2769 = vmatpush1.bf16.msra.mxu0 %v2072
    %2770 = vmatprep.subr.bf16.mxu0 %v2076
    %2771 = vmatpush1.bf16.msra.mxu0 %v2075
    %2772 = vmatprep.subr.bf16.mxu0 %v2079
    %2773 = vmatpush1.bf16.msra.mxu0 %v2078
    %2774 = vmatprep.subr.bf16.mxu0 0
    %2775 = vmatpush1.bf16.msra.mxu0 0
    %2776 = vmatprep.subr.bf16.mxu0 0
    %2777 = vmatpush1.bf16.msra.mxu0 0
    %2778 = vmatprep.subr.bf16.mxu0 0
    %2779 = vmatpush1.bf16.msra.mxu0 0
    %2780 = vmatprep.subr.bf16.mxu0 0
    %2781 = vmatpush1.bf16.msra.mxu0 0
    %2782 = vmatprep.subr.bf16.mxu0 0
    %2783 = vmatpush1.bf16.msra.mxu0 0
    %2784 = vmatprep.subr.bf16.mxu0 0
    %2785 = vmatpush1.bf16.msra.mxu0 0
    %2786 = vmatprep.subr.bf16.mxu0 0
    %2787 = vmatpush1.bf16.msra.mxu0 0
    %2788 = vmatprep.subr.bf16.mxu0 0
    %2789 = vmatpush1.bf16.msra.mxu0 0
    %2790 = vmatprep.mubr.bf16.mxu0 0
    %2791 = vmatmul.mubr.bf16.gmra.mrb[0].mxu0 %v2757
    %v2792 = vpop.f32.mrb[0].mxu0
    %v2793 = vadd.f32 0.0, %v2792
    %v2794 = vpop.f32.mrb[0].mxu0
    %v2795 = vadd.f32 0.0, %v2794
    %v2796 = vpop.f32.mrb[0].mxu0
    %v2797 = vpop.f32.mrb[0].mxu0
    %2798 = vdwg.mxu0
    %2799 = vmatprep.subr.bf16.mxu0 0
    %2800 = vmatpush1.bf16.msra.mxu0 %v2059
    %2801 = vmatprep.subr.bf16.mxu0 0
    %2802 = vmatpush1.bf16.msra.mxu0 %v2062
    %2803 = vmatprep.subr.bf16.mxu0 0
    %2804 = vmatpush1.bf16.msra.mxu0 %v2065
    %2805 = vmatprep.subr.bf16.mxu0 0
    %2806 = vmatpush1.bf16.msra.mxu0 %v2068
    %2807 = vmatprep.subr.bf16.mxu0 0
    %2808 = vmatpush1.bf16.msra.mxu0 %v2071
    %2809 = vmatprep.subr.bf16.mxu0 0
    %2810 = vmatpush1.bf16.msra.mxu0 %v2074
    %2811 = vmatprep.subr.bf16.mxu0 0
    %2812 = vmatpush1.bf16.msra.mxu0 %v2077
    %2813 = vmatprep.subr.bf16.mxu0 0
    %2814 = vmatpush1.bf16.msra.mxu0 %v2080
    %2815 = vmatprep.subr.bf16.mxu0 0
    %2816 = vmatpush1.bf16.msra.mxu0 0
    %2817 = vmatprep.subr.bf16.mxu0 0
    %2818 = vmatpush1.bf16.msra.mxu0 0
    %2819 = vmatprep.subr.bf16.mxu0 0
    %2820 = vmatpush1.bf16.msra.mxu0 0
    %2821 = vmatprep.subr.bf16.mxu0 0
    %2822 = vmatpush1.bf16.msra.mxu0 0
    %2823 = vmatprep.subr.bf16.mxu0 0
    %2824 = vmatpush1.bf16.msra.mxu0 0
    %2825 = vmatprep.subr.bf16.mxu0 0
    %2826 = vmatpush1.bf16.msra.mxu0 0
    %2827 = vmatprep.subr.bf16.mxu0 0
    %2828 = vmatpush1.bf16.msra.mxu0 0
    %2829 = vmatprep.subr.bf16.mxu0 0
    %2830 = vmatpush1.bf16.msra.mxu0 0
    %2831 = vmatprep.mubr.bf16.mxu0 0
    %2832 = vmatmul.mubr.bf16.gmra.mrb[0].mxu0 %v2757
    %v2833 = vpop.f32.mrb[0].mxu0
    %v2834 = vadd.f32 0.0, %v2833
    %v2835 = vpop.f32.mrb[0].mxu0
    %v2836 = vpop.f32.mrb[0].mxu0
    %v2837 = vpop.f32.mrb[0].mxu0
    %2838 = vdwg.mxu0
    %v2839 = vadd.f32 %v2754, %v2793
    %v2840 = vxor.u32 %v2839, 2147483648
    %v2841 = vmul.f32 %v2840, 1.442695
    %v2842 = vpow.pop %v2841
    %v2843 = vadd.f32 %v2842, 1.0
    %v2844 = vrcp.pop %v2843
    %v2845 = vmul.f32 1.0, %v2844
    %v2846 = vadd.f32 %v2755, %v2795
    %v2847 = vxor.u32 %v2846, 2147483648
    %v2848 = vmul.f32 %v2847, 1.442695
    %v2849 = vpow.pop %v2848
    %v2850 = vadd.f32 %v2849, 1.0
    %v2851 = vrcp.pop %v2850
    %v2852 = vmul.f32 1.0, %v2851
    %v2853 = vadd.f32 %v2834, %v1972
    %v2854 = vmul.f32 %v2845, %v2853
    %v2855 = vadd.f32 %v2756, %v2854
    %v2856 = vtanh.pop %v2855
    %v2857 = vsub.f32 1.0, %v2852
    %v2858 = vmul.f32 %v2857, %v2856
    %v2859 = vmul.f32 %v2852, %v2751
    %v2860 = vadd.f32 %v2858, %v2859
    %s2861 = scalar_lea.vmem [#allocation16], 48
    %2862 = vst [vmem:[%s2861] sm:$0xff] %v2860
    %v2863 = vld [vmem:[%s1437] sm:$0xff]
    %v2864 = vld [vmem:[%s1437 + $0x8] sm:$0xff]
    %v2865 = vld [vmem:[%s1437 + $0x10] sm:$0xff]
    %v2866 = vpack.c.bf16 %v2860, %v2860
    %2867 = vmatprep.subr.bf16.mxu0 %v2058
    %2868 = vmatpush1.bf16.msra.mxu0 %v2057
    %2869 = vmatprep.subr.bf16.mxu0 %v2061
    %2870 = vmatpush1.bf16.msra.mxu0 %v2060
    %2871 = vmatprep.subr.bf16.mxu0 %v2064
    %2872 = vmatpush1.bf16.msra.mxu0 %v2063
    %2873 = vmatprep.subr.bf16.mxu0 %v2067
    %2874 = vmatpush1.bf16.msra.mxu0 %v2066
    %2875 = vmatprep.subr.bf16.mxu0 %v2070
    %2876 = vmatpush1.bf16.msra.mxu0 %v2069
    %2877 = vmatprep.subr.bf16.mxu0 %v2073
    %2878 = vmatpush1.bf16.msra.mxu0 %v2072
    %2879 = vmatprep.subr.bf16.mxu0 %v2076
    %2880 = vmatpush1.bf16.msra.mxu0 %v2075
    %2881 = vmatprep.subr.bf16.mxu0 %v2079
    %2882 = vmatpush1.bf16.msra.mxu0 %v2078
    %2883 = vmatprep.subr.bf16.mxu0 0
    %2884 = vmatpush1.bf16.msra.mxu0 0
    %2885 = vmatprep.subr.bf16.mxu0 0
    %2886 = vmatpush1.bf16.msra.mxu0 0
    %2887 = vmatprep.subr.bf16.mxu0 0
    %2888 = vmatpush1.bf16.msra.mxu0 0
    %2889 = vmatprep.subr.bf16.mxu0 0
    %2890 = vmatpush1.bf16.msra.mxu0 0
    %2891 = vmatprep.subr.bf16.mxu0 0
    %2892 = vmatpush1.bf16.msra.mxu0 0
    %2893 = vmatprep.subr.bf16.mxu0 0
    %2894 = vmatpush1.bf16.msra.mxu0 0
    %2895 = vmatprep.subr.bf16.mxu0 0
    %2896 = vmatpush1.bf16.msra.mxu0 0
    %2897 = vmatprep.subr.bf16.mxu0 0
    %2898 = vmatpush1.bf16.msra.mxu0 0
    %2899 = vmatprep.mubr.bf16.mxu0 0
    %2900 = vmatmul.mubr.bf16.gmra.mrb[0].mxu0 %v2866
    %v2901 = vpop.f32.mrb[0].mxu0
    %v2902 = vadd.f32 0.0, %v2901
    %v2903 = vpop.f32.mrb[0].mxu0
    %v2904 = vadd.f32 0.0, %v2903
    %v2905 = vpop.f32.mrb[0].mxu0
    %v2906 = vpop.f32.mrb[0].mxu0
    %2907 = vdwg.mxu0
    %2908 = vmatprep.subr.bf16.mxu0 0
    %2909 = vmatpush1.bf16.msra.mxu0 %v2059
    %2910 = vmatprep.subr.bf16.mxu0 0
    %2911 = vmatpush1.bf16.msra.mxu0 %v2062
    %2912 = vmatprep.subr.bf16.mxu0 0
    %2913 = vmatpush1.bf16.msra.mxu0 %v2065
    %2914 = vmatprep.subr.bf16.mxu0 0
    %2915 = vmatpush1.bf16.msra.mxu0 %v2068
    %2916 = vmatprep.subr.bf16.mxu0 0
    %2917 = vmatpush1.bf16.msra.mxu0 %v2071
    %2918 = vmatprep.subr.bf16.mxu0 0
    %2919 = vmatpush1.bf16.msra.mxu0 %v2074
    %2920 = vmatprep.subr.bf16.mxu0 0
    %2921 = vmatpush1.bf16.msra.mxu0 %v2077
    %2922 = vmatprep.subr.bf16.mxu0 0
    %2923 = vmatpush1.bf16.msra.mxu0 %v2080
    %2924 = vmatprep.subr.bf16.mxu0 0
    %2925 = vmatpush1.bf16.msra.mxu0 0
    %2926 = vmatprep.subr.bf16.mxu0 0
    %2927 = vmatpush1.bf16.msra.mxu0 0
    %2928 = vmatprep.subr.bf16.mxu0 0
    %2929 = vmatpush1.bf16.msra.mxu0 0
    %2930 = vmatprep.subr.bf16.mxu0 0
    %2931 = vmatpush1.bf16.msra.mxu0 0
    %2932 = vmatprep.subr.bf16.mxu0 0
    %2933 = vmatpush1.bf16.msra.mxu0 0
    %2934 = vmatprep.subr.bf16.mxu0 0
    %2935 = vmatpush1.bf16.msra.mxu0 0
    %2936 = vmatprep.subr.bf16.mxu0 0
    %2937 = vmatpush1.bf16.msra.mxu0 0
    %2938 = vmatprep.subr.bf16.mxu0 0
    %2939 = vmatpush1.bf16.msra.mxu0 0
    %2940 = vmatprep.mubr.bf16.mxu0 0
    %2941 = vmatmul.mubr.bf16.gmra.mrb[0].mxu0 %v2866
    %v2942 = vpop.f32.mrb[0].mxu0
    %v2943 = vadd.f32 0.0, %v2942
    %v2944 = vpop.f32.mrb[0].mxu0
    %v2945 = vpop.f32.mrb[0].mxu0
    %v2946 = vpop.f32.mrb[0].mxu0
    %2947 = vdwg.mxu0
    %v2948 = vadd.f32 %v2863, %v2902
    %v2949 = vxor.u32 %v2948, 2147483648
    %v2950 = vmul.f32 %v2949, 1.442695
    %v2951 = vpow.pop %v2950
    %v2952 = vadd.f32 %v2951, 1.0
    %v2953 = vrcp.pop %v2952
    %v2954 = vmul.f32 1.0, %v2953
    %v2955 = vadd.f32 %v2864, %v2904
    %v2956 = vxor.u32 %v2955, 2147483648
    %v2957 = vmul.f32 %v2956, 1.442695
    %v2958 = vpow.pop %v2957
    %v2959 = vadd.f32 %v2958, 1.0
    %v2960 = vrcp.pop %v2959
    %v2961 = vmul.f32 1.0, %v2960
    %v2962 = vadd.f32 %v2943, %v1972
    %v2963 = vmul.f32 %v2954, %v2962
    %v2964 = vadd.f32 %v2865, %v2963
    %v2965 = vtanh.pop %v2964
    %v2966 = vsub.f32 1.0, %v2961
    %v2967 = vmul.f32 %v2966, %v2965
    %v2968 = vmul.f32 %v2961, %v2860
    %v2969 = vadd.f32 %v2967, %v2968
    %s2970 = scalar_lea.vmem [#allocation16], 56
    %2971 = vst [vmem:[%s2970] sm:$0xff] %v2969
    %s2972 = scalar_lea.vmem [#allocation17], 8
    %2973 = vst [vmem:[%s2972] sm:$0xff] %v2969
    // Predicated region
    $region70: #{tpu_custom_call.1} parent=1 // pred_check
      _
    $region71: #{tpu_custom_call.1} parent=1 // pred_check_branch
      %2975 = sbr.rel (0) target = $region73
    $region72: #{tpu_custom_call.1} parent=1 // pred_region
      %s2977 = ssub.s32 1024, 1024
      %2978 = vsyncadd [#allocation6], %s2977
      %s2979 = sshll.u32 [#allocation16], 4
      %s2980 = int_to_ptr.vmem [resolvable:$true] %s2979
      %2985 = dma.vmem_to_hbm [thread:$0]  %s2980, 1024, %s10, [#allocation6], 128, 128, 8
    $region73: #{tpu_custom_call.1} parent=1 // pred_fallthru
      _
    // Predicated region
    $region74: #{tpu_custom_call.1} parent=1 // pred_check
      _
    $region75: #{tpu_custom_call.1} parent=1 // pred_check_branch
      %2987 = sbr.rel (0) target = $region77
    $region76: #{tpu_custom_call.1} parent=1 // pred_region
      %s2989 = ssub.s32 256, 256
      %2990 = vsyncadd [#allocation18], %s2989
      %s2991 = sshll.u32 [#allocation17], 4
      %s2992 = int_to_ptr.vmem [resolvable:$true] %s2991
      %2997 = dma.vmem_to_hbm [thread:$0]  %s2992, 256, %s11, [#allocation18], 128, 128, 8
    $region77: #{tpu_custom_call.1} parent=1 // pred_fallthru
      _
    // Predicated region
    $region78: #{tpu_custom_call.1} parent=1 // pred_check
      _
    $region79: #{tpu_custom_call.1} parent=1 // pred_check_branch
      %2999 = sbr.rel (0) target = $region81
    $region80: #{tpu_custom_call.1} parent=1 // pred_region
      %3000 = dma.done [#allocation6], 1024
    $region81: #{tpu_custom_call.1} parent=1 // pred_fallthru
      _
    // Predicated region
    $region82: #{tpu_custom_call.1} parent=1 // pred_check
      _
    $region83: #{tpu_custom_call.1} parent=1 // pred_check_branch
      %3002 = sbr.rel (0) target = $region85
    $region84: #{tpu_custom_call.1} parent=1 // pred_region
      %3003 = dma.done [#allocation18], 256
    $region85: #{tpu_custom_call.1} parent=1 // pred_fallthru
      _
    %3004 = vsyncpa [#allocation5], 1
    %3005 = vsyncpa [#allocation8], 1
    %3006 = vsyncpa [#allocation11], 1
    %3007 = vsyncpa [#allocation14], 1
    %3008 = vsyncpa [#allocation6], 1
    %3009 = vsyncpa [#allocation18], 1

</llo_original>
